<compile_context>
chip_gen: v7x
topology: tpu7x:2x2x1
jax: 0.10.0
libtpu: 0.0.40
codegen_flags: <defaults>
</compile_context>

<pallas_src>
import functools
import math

import jax
import jax.numpy as jnp
import numpy as np
from jax import lax
from jax.experimental import pallas as pl
from jax.experimental.pallas import tpu as pltpu


def _layer_norm(t, gamma, beta, eps=1e-5):
    # f32 math throughout.
    mu = jnp.mean(t, axis=-1, keepdims=True)
    c = t - mu
    var = jnp.mean(c * c, axis=-1, keepdims=True)
    return c * lax.rsqrt(var + eps) * gamma + beta


def _decoder_layer_kernel(
    x_ref, mem_ref,
    w_qkv_s_ref, b_qkv_s_ref, w_o_s_ref, b_o_s_ref, ln1_g_ref, ln1_b_ref,
    w_q_c_ref, b_q_c_ref, w_kv_c_ref, b_kv_c_ref, w_o_c_ref, b_o_c_ref,
    ln2_g_ref, ln2_b_ref,
    w_ff1_ref, b_ff1_ref, w_ff2_ref, b_ff2_ref, ln3_g_ref, ln3_b_ref,
    o_ref,
    *, n_heads: int, head_dim: int, embed_size: int, compute_dtype, approx_recip: bool):

    E, H, Dh = embed_size, n_heads, head_dim
    cdt = compute_dtype

    x = x_ref[0]                 # (S_tgt, E)  f32
    mem = mem_ref[0]             # (S_src, E)  f32
    S_tgt = x.shape[0]

    # ---- causal additive bias built in-kernel (pure VPU/iota, no HBM traffic) ----
    row = lax.broadcasted_iota(jnp.int32, (S_tgt, S_tgt), 0)
    col = lax.broadcasted_iota(jnp.int32, (S_tgt, S_tgt), 1)
    causal_bias = jnp.where(col <= row, 0.0, -1e30).astype(jnp.float32)   # (S_tgt, S_tgt)

    def split_heads(t2d):
        # (seq, E) -> (H, seq, Dh); at production Dh (multiples of 128 lanes) these
        # static column slices are lane-aligned and cheap.
        return jnp.stack([t2d[:, h * Dh:(h + 1) * Dh] for h in range(H)], axis=0)

    def softmax_last(s):
        m = jnp.max(s, axis=-1, keepdims=True)
        p = jnp.exp(s - m)
        denom = jnp.sum(p, axis=-1, keepdims=True)
        return p * pl.reciprocal(denom, approx=approx_recip)

    def attention(q2d, k2d, v2d, w_o, b_o, bias):
        # q2d/k2d/v2d: f32 (seq, E) activations; cast to compute dtype only for the MXU.
        qh = split_heads(q2d.astype(cdt))                                  # (H, Sq, Dh)
        kh = split_heads(k2d.astype(cdt))                                  # (H, Skv, Dh)
        vh = split_heads(v2d.astype(cdt))                                  # (H, Skv, Dh)
        s = jnp.einsum("hqd,hkd->hqk", qh, kh,
                       preferred_element_type=jnp.float32)                 # f32 (H,Sq,Skv)
        if bias is not None:
            s = s + bias                                                   # f32 bias add
        p = softmax_last(s)                                                # f32
        ctx = jnp.einsum("hqk,hkd->hqd", p.astype(cdt), vh,
                         preferred_element_type=jnp.float32)               # f32 (H,Sq,Dh)
        # concat heads -> single K=E output projection (one full-width MXU matmul,
        # no (H,Sq,E) partials, no H-way reduce).
        ctx2d = jnp.concatenate([ctx[h] for h in range(H)], axis=1)        # (Sq, E)
        return jnp.dot(ctx2d.astype(cdt), w_o,
                       preferred_element_type=jnp.float32) + b_o           # f32 (Sq, E)

    # ---- 1. masked (causal) self-attention + residual + LN1 -----------------------
    qkv = jnp.dot(x.astype(cdt), w_qkv_s_ref[...],
                  preferred_element_type=jnp.float32) + b_qkv_s_ref[...]   # (S, 3E) f32
    attn_self = attention(qkv[:, :E], qkv[:, E:2 * E], qkv[:, 2 * E:],
                          w_o_s_ref[...], b_o_s_ref[...], causal_bias)
    h1 = _layer_norm(x + attn_self, ln1_g_ref[...], ln1_b_ref[...])

    # ---- 2. cross-attention over encoder memory + residual + LN2 ------------------
    q_c = jnp.dot(h1.astype(cdt), w_q_c_ref[...],
                  preferred_element_type=jnp.float32) + b_q_c_ref[...]     # (S, E)
    kv_c = jnp.dot(mem.astype(cdt), w_kv_c_ref[...],
                   preferred_element_type=jnp.float32) + b_kv_c_ref[...]   # (S_src, 2E)
    attn_cross = attention(q_c, kv_c[:, :E], kv_c[:, E:],
                           w_o_c_ref[...], b_o_c_ref[...], None)
    h2 = _layer_norm(h1 + attn_cross, ln2_g_ref[...], ln2_b_ref[...])

    # ---- 3. feed-forward + residual + LN3 ------------------------------------------
    f = jnp.dot(h2.astype(cdt), w_ff1_ref[...],
                preferred_element_type=jnp.float32) + b_ff1_ref[...]
    f = jnp.maximum(f, 0.0)
    f = jnp.dot(f.astype(cdt), w_ff2_ref[...],
                preferred_element_type=jnp.float32) + b_ff2_ref[...]
    h3 = _layer_norm(h2 + f, ln3_g_ref[...], ln3_b_ref[...])

    o_ref[0] = h3.astype(o_ref.dtype)


def decoder_layer(x, memory, causal_mask, params, *, n_heads: int,
                  compute_dtype=jnp.bfloat16):
    """x: (B, S_tgt, E), memory: (B, S_src, E), causal_mask: (1, S_tgt, S_tgt).

    compute_dtype: dtype of MXU operands (bf16 for v6e/v7x peak); accumulation,
    softmax and LayerNorm always stay in f32.
    """
    del causal_mask  # regenerated in-kernel (standard lower-triangular causal mask)
    B, S_tgt, E = x.shape
    _, S_src, _ = memory.shape
    assert E % n_heads == 0
    head_dim = E // n_heads
    scale = 1.0 / math.sqrt(head_dim)
    cdt = compute_dtype
    f32 = jnp.float32

    # --- host-side weight prep (free): transpose, fuse QKV/KV, fold softmax scale,
    #     cast weights to the MXU compute dtype (biases / LN params stay f32) ---
    mm = params["mmha"]
    w_qkv_s = jnp.concatenate([mm["wq"].T * scale, mm["wk"].T, mm["wv"].T],
                              axis=1).astype(cdt)                               # (E, 3E)
    b_qkv_s = jnp.concatenate([mm["bq"] * scale, mm["bk"], mm["bv"]]
                              ).reshape(1, 3 * E).astype(f32)
    w_o_s = mm["wo"].T.astype(cdt)                                              # (E, E)
    b_o_s = mm["bo"].reshape(1, E).astype(f32)

    mh = params["mha"]
    w_q_c = (mh["wq"].T * scale).astype(cdt)                                    # (E, E)
    b_q_c = (mh["bq"] * scale).reshape(1, E).astype(f32)
    w_kv_c = jnp.concatenate([mh["wk"].T, mh["wv"].T], axis=1).astype(cdt)      # (E, 2E)
    b_kv_c = jnp.concatenate([mh["bk"], mh["bv"]]).reshape(1, 2 * E).astype(f32)
    w_o_c = mh["wo"].T.astype(cdt)                                              # (E, E)
    b_o_c = mh["bo"].reshape(1, E).astype(f32)

    ffp = params["ff"]
    w_ff1 = ffp["w1"].T.astype(cdt)                                             # (E, d_ff)
    d_ff = w_ff1.shape[1]
    b_ff1 = ffp["b1"].reshape(1, d_ff).astype(f32)
    w_ff2 = ffp["w2"].T.astype(cdt)                                             # (d_ff, E)
    b_ff2 = ffp["b2"].reshape(1, E).astype(f32)

    ln1_g = params["ln1"]["g"].reshape(1, E).astype(f32)
    ln1_b = params["ln1"]["b"].reshape(1, E).astype(f32)
    ln2_g = params["ln2"]["g"].reshape(1, E).astype(f32)
    ln2_b = params["ln2"]["b"].reshape(1, E).astype(f32)
    ln3_g = params["ln3"]["g"].reshape(1, E).astype(f32)
    ln3_b = params["ln3"]["b"].reshape(1, E).astype(f32)

    rep2 = lambda shape: pl.BlockSpec(shape, lambda b: (0, 0))

    in_specs = [
        pl.BlockSpec((1, S_tgt, E), lambda b: (b, 0, 0)),      # x
        pl.BlockSpec((1, S_src, E), lambda b: (b, 0, 0)),      # memory
        rep2((E, 3 * E)), rep2((1, 3 * E)),                    # fused self-attn qkv
        rep2((E, E)), rep2((1, E)),                            # self-attn out proj
        rep2((1, E)), rep2((1, E)),                            # ln1
        rep2((E, E)), rep2((1, E)),                            # cross-attn q
        rep2((E, 2 * E)), rep2((1, 2 * E)),                    # fused cross-attn kv
        rep2((E, E)), rep2((1, E)),                            # cross-attn out proj
        rep2((1, E)), rep2((1, E)),                            # ln2
        rep2((E, d_ff)), rep2((1, d_ff)),                      # ffn 1
        rep2((d_ff, E)), rep2((1, E)),                         # ffn 2
        rep2((1, E)), rep2((1, E)),                            # ln3
    ]

    operands = (x, memory, w_qkv_s, b_qkv_s, w_o_s, b_o_s, ln1_g, ln1_b,
                w_q_c, b_q_c, w_kv_c, b_kv_c, w_o_c, b_o_c, ln2_g, ln2_b,
                w_ff1, b_ff1, w_ff2, b_ff2, ln3_g, ln3_b)

    # Advisory cost estimate (helps XLA schedule around the fused custom call).
    flops_b = (2 * S_tgt * E * 3 * E                # fused qkv projection
               + 2 * 2 * S_tgt * S_tgt * E          # self-attn scores + PV
               + 2 * S_tgt * E * E                  # self-attn out proj
               + 2 * S_tgt * E * E                  # cross q
               + 2 * S_src * E * 2 * E              # cross kv
               + 2 * 2 * S_tgt * S_src * E          # cross scores + PV
               + 2 * S_tgt * E * E                  # cross out proj
               + 2 * 2 * S_tgt * E * d_ff)          # ffn
    transc_b = n_heads * (S_tgt * S_tgt + S_tgt * S_src)       # exp() in softmax
    bytes_accessed = int(sum(int(a.size) * a.dtype.itemsize for a in operands)
                         + B * S_tgt * E * x.dtype.itemsize)
    cost = pl.CostEstimate(flops=int(B * flops_b),
                           transcendentals=int(B * transc_b),
                           bytes_accessed=bytes_accessed)

    kernel = functools.partial(_decoder_layer_kernel,
                               n_heads=n_heads, head_dim=head_dim, embed_size=E,
                               compute_dtype=cdt,
                               approx_recip=(cdt != jnp.float32))

    return pl.pallas_call(
        kernel,
        out_shape=jax.ShapeDtypeStruct((B, S_tgt, E), x.dtype),
        grid_spec=pltpu.PrefetchScalarGridSpec(
            num_scalar_prefetch=0,
            grid=(B,),
            in_specs=in_specs,
            out_specs=pl.BlockSpec((1, S_tgt, E), lambda b: (b, 0, 0)),
        ),
        compiler_params=pltpu.CompilerParams(
            dimension_semantics=("parallel",),
            vmem_limit_bytes=48 * 1024 * 1024),
        cost_estimate=cost,
    )(*operands)


# ----------------------------- pure-JAX reference -----------------------------
def _reference(x, memory, causal_mask, params, *, n_heads: int):
    E = x.shape[-1]
    head_dim = E // n_heads

    def linear(t, w, b):
        return t @ w.T + b

    def mha(q, k, v, p, mask):
        B, Sq, _ = q.shape
        Skv = k.shape[1]
        qp = linear(q, p["wq"], p["bq"]).reshape(B, Sq, n_heads, head_dim).transpose(0, 2, 1, 3)
        kp = linear(k, p["wk"], p["bk"]).reshape(B, Skv, n_heads, head_dim).transpose(0, 2, 1, 3)
        vp = linear(v, p["wv"], p["bv"]).reshape(B, Skv, n_heads, head_dim).transpose(0, 2, 1, 3)
        aw = jnp.einsum("bhqd,bhkd->bhqk", qp, kp) / math.sqrt(head_dim)
        if mask is not None:
            aw = jnp.where(mask[:, None, :, :] == 0, -jnp.inf, aw)
        aw = jax.nn.softmax(aw, axis=-1)
        o = jnp.einsum("bhqk,bhkd->bhqd", aw, vp)
        o = o.transpose(0, 2, 1, 3).reshape(B, Sq, E)
        return linear(o, p["wo"], p["bo"])

    def layer_norm(t, pln, eps=1e-5):
        mu = t.mean(-1, keepdims=True)
        var = ((t - mu) ** 2).mean(-1, keepdims=True)
        return (t - mu) / jnp.sqrt(var + eps) * pln["g"] + pln["b"]

    def ff(t, p):
        h = jnp.maximum(linear(t, p["w1"], p["b1"]), 0.0)
        return linear(h, p["w2"], p["b2"])

    a = layer_norm(x + mha(x, x, x, params["mmha"], causal_mask), params["ln1"])
    a = layer_norm(a + mha(a, memory, memory, params["mha"], None), params["ln2"])
    return layer_norm(a + ff(a, params["ff"]), params["ln3"])


def _init_params(key, *, embed_size, d_ff):
    E = embed_size
    keys = jax.random.split(key, 6)

    def linear(k, fan_in, fan_out):
        bound = 1.0 / math.sqrt(fan_in)
        kw, kb = jax.random.split(k)
        return (jax.random.uniform(kw, (fan_out, fan_in), jnp.float32, -bound, bound),
                jax.random.uniform(kb, (fan_out,), jnp.float32, -bound, bound))

    def mha(k):
        kq, kk, kv, ko = jax.random.split(k, 4)
        wq, bq = linear(kq, E, E)
        wk, bk = linear(kk, E, E)
        wv, bv = linear(kv, E, E)
        wo, bo = linear(ko, E, E)
        return dict(wq=wq, bq=bq, wk=wk, bk=bk, wv=wv, bv=bv, wo=wo, bo=bo)

    def ln(k):
        kg, kb = jax.random.split(k)
        return dict(g=jax.random.uniform(kg, (E,), jnp.float32, 0.9, 1.1),
                    b=jax.random.uniform(kb, (E,), jnp.float32, -0.1, 0.1))

    k1, k2 = jax.random.split(keys[0])
    w1, b1 = linear(k1, E, d_ff)
    w2, b2 = linear(k2, d_ff, E)
    return dict(mmha=mha(keys[1]), mha=mha(keys[2]),
                ff=dict(w1=w1, b1=b1, w2=w2, b2=b2),
                ln1=ln(keys[3]), ln2=ln(keys[4]), ln3=ln(keys[5]))


if __name__ == "__main__":
    B, S_TGT, S_SRC, E, H, D_FF = 2, 8, 16, 32, 4, 64

    key = jax.random.PRNGKey(0)
    k_param, k_x, k_mem = jax.random.split(key, 3)

    params = _init_params(k_param, embed_size=E, d_ff=D_FF)
    x = jax.random.normal(k_x, (B, S_TGT, E), jnp.float32)
    memory = jax.random.normal(k_mem, (B, S_SRC, E), jnp.float32)
    causal_mask = jnp.tril(jnp.ones((1, S_TGT, S_TGT), jnp.float32))

    ref = _reference(x, memory, causal_mask, params, n_heads=H)

    # Strict correctness check: f32 MXU operands, exact reciprocal.
    out_f32 = decoder_layer(x, memory, causal_mask, params, n_heads=H,
                            compute_dtype=jnp.float32)
    out_f32 = jax.block_until_ready(out_f32)
    np.testing.assert_allclose(np.asarray(out_f32), np.asarray(ref),
                               rtol=1e-4, atol=1e-4)

    # Performance path: bf16 MXU operands (f32 accumulation / softmax / LN),
    # approx reciprocal — looser tolerance due to bf16 operand rounding.
    out_bf16 = decoder_layer(x, memory, causal_mask, params, n_heads=H,
                             compute_dtype=jnp.bfloat16)
    out_bf16 = jax.block_until_ready(out_bf16)
    np.testing.assert_allclose(np.asarray(out_bf16), np.asarray(ref),
                               rtol=5e-2, atol=5e-2)

    print("KERNEL_OK")
</pallas_src>

<mosaic_0001>
module attributes {stable_mosaic.version = 11 : i64} {
  func.func @_decoder_layer_kernel(%arg0: i32, %arg1: memref<1x8x32xf32, #tpu.memory_space<vmem>>, %arg2: memref<1x16x32xf32, #tpu.memory_space<vmem>>, %arg3: memref<32x96xf32, #tpu.memory_space<vmem>>, %arg4: memref<1x96xf32, #tpu.memory_space<vmem>>, %arg5: memref<32x32xf32, #tpu.memory_space<vmem>>, %arg6: memref<1x32xf32, #tpu.memory_space<vmem>>, %arg7: memref<1x32xf32, #tpu.memory_space<vmem>>, %arg8: memref<1x32xf32, #tpu.memory_space<vmem>>, %arg9: memref<32x32xf32, #tpu.memory_space<vmem>>, %arg10: memref<1x32xf32, #tpu.memory_space<vmem>>, %arg11: memref<32x64xf32, #tpu.memory_space<vmem>>, %arg12: memref<1x64xf32, #tpu.memory_space<vmem>>, %arg13: memref<32x32xf32, #tpu.memory_space<vmem>>, %arg14: memref<1x32xf32, #tpu.memory_space<vmem>>, %arg15: memref<1x32xf32, #tpu.memory_space<vmem>>, %arg16: memref<1x32xf32, #tpu.memory_space<vmem>>, %arg17: memref<32x64xf32, #tpu.memory_space<vmem>>, %arg18: memref<1x64xf32, #tpu.memory_space<vmem>>, %arg19: memref<64x32xf32, #tpu.memory_space<vmem>>, %arg20: memref<1x32xf32, #tpu.memory_space<vmem>>, %arg21: memref<1x32xf32, #tpu.memory_space<vmem>>, %arg22: memref<1x32xf32, #tpu.memory_space<vmem>>, %arg23: memref<1x8x32xf32, #tpu.memory_space<vmem>>) attributes {dimension_semantics = [#tpu.dimension_semantics<parallel>], iteration_bounds = array<i64: 2>, scalar_prefetch = 0 : i64, scratch_operands = 0 : i64, tpu.core_type = #tpu.core_type<tc>, window_params = [{transform_indices = @transform_0, window_bounds = array<i64: 1, 8, 32>}, {transform_indices = @transform_1, window_bounds = array<i64: 1, 16, 32>}, {pipeline_mode = #tpu.pipeline_mode<synchronous>, transform_indices = @transform_2, window_bounds = array<i64: 32, 96>}, {pipeline_mode = #tpu.pipeline_mode<synchronous>, transform_indices = @transform_3, window_bounds = array<i64: 1, 96>}, {pipeline_mode = #tpu.pipeline_mode<synchronous>, transform_indices = @transform_4, window_bounds = array<i64: 32, 32>}, {pipeline_mode = #tpu.pipeline_mode<synchronous>, transform_indices = @transform_5, window_bounds = array<i64: 1, 32>}, {pipeline_mode = #tpu.pipeline_mode<synchronous>, transform_indices = @transform_6, window_bounds = array<i64: 1, 32>}, {pipeline_mode = #tpu.pipeline_mode<synchronous>, transform_indices = @transform_7, window_bounds = array<i64: 1, 32>}, {pipeline_mode = #tpu.pipeline_mode<synchronous>, transform_indices = @transform_8, window_bounds = array<i64: 32, 32>}, {pipeline_mode = #tpu.pipeline_mode<synchronous>, transform_indices = @transform_9, window_bounds = array<i64: 1, 32>}, {pipeline_mode = #tpu.pipeline_mode<synchronous>, transform_indices = @transform_10, window_bounds = array<i64: 32, 64>}, {pipeline_mode = #tpu.pipeline_mode<synchronous>, transform_indices = @transform_11, window_bounds = array<i64: 1, 64>}, {pipeline_mode = #tpu.pipeline_mode<synchronous>, transform_indices = @transform_12, window_bounds = array<i64: 32, 32>}, {pipeline_mode = #tpu.pipeline_mode<synchronous>, transform_indices = @transform_13, window_bounds = array<i64: 1, 32>}, {pipeline_mode = #tpu.pipeline_mode<synchronous>, transform_indices = @transform_14, window_bounds = array<i64: 1, 32>}, {pipeline_mode = #tpu.pipeline_mode<synchronous>, transform_indices = @transform_15, window_bounds = array<i64: 1, 32>}, {pipeline_mode = #tpu.pipeline_mode<synchronous>, transform_indices = @transform_16, window_bounds = array<i64: 32, 64>}, {pipeline_mode = #tpu.pipeline_mode<synchronous>, transform_indices = @transform_17, window_bounds = array<i64: 1, 64>}, {pipeline_mode = #tpu.pipeline_mode<synchronous>, transform_indices = @transform_18, window_bounds = array<i64: 64, 32>}, {pipeline_mode = #tpu.pipeline_mode<synchronous>, transform_indices = @transform_19, window_bounds = array<i64: 1, 32>}, {pipeline_mode = #tpu.pipeline_mode<synchronous>, transform_indices = @transform_20, window_bounds = array<i64: 1, 32>}, {pipeline_mode = #tpu.pipeline_mode<synchronous>, transform_indices = @transform_21, window_bounds = array<i64: 1, 32>}, {transform_indices = @transform_22, window_bounds = array<i64: 1, 8, 32>}]} {
    %c0 = arith.constant 0 : index
    %c0_0 = arith.constant 0 : index
    %c0_1 = arith.constant 0 : index
    %0 = vector.load %arg1[%c0, %c0_0, %c0_1] : memref<1x8x32xf32, #tpu.memory_space<vmem>>, vector<1x8x32xf32>
    %1 = vector.shape_cast %0 : vector<1x8x32xf32> to vector<8x32xf32>
    %c0_2 = arith.constant 0 : index
    %c0_3 = arith.constant 0 : index
    %c0_4 = arith.constant 0 : index
    %2 = vector.load %arg2[%c0_2, %c0_3, %c0_4] : memref<1x16x32xf32, #tpu.memory_space<vmem>>, vector<1x16x32xf32>
    %3 = vector.shape_cast %2 : vector<1x16x32xf32> to vector<16x32xf32>
    %4 = tpu.iota {dimensions = array<i32: 0>} : vector<8x8xi32>
    %5 = tpu.iota {dimensions = array<i32: 1>} : vector<8x8xi32>
    %6 = arith.cmpi sle, %5, %4 : vector<8x8xi32>
    %cst = arith.constant 0.000000e+00 : f32
    %cst_5 = arith.constant -1.000000e+30 : f32
    %7 = vector.broadcast %cst : f32 to vector<8x8xf32>
    %8 = vector.broadcast %cst_5 : f32 to vector<8x8xf32>
    %9 = arith.select %6, %7, %8 : vector<8x8xi1>, vector<8x8xf32>
    %c0_6 = arith.constant 0 : index
    %c0_7 = arith.constant 0 : index
    %10 = vector.load %arg3[%c0_6, %c0_7] : memref<32x96xf32, #tpu.memory_space<vmem>>, vector<32x96xf32>
    %cst_8 = arith.constant dense<0.000000e+00> : vector<8x96xf32>
    %11 = tpu.matmul %1, %10, %cst_8 {dimension_numbers = #tpu.dot_dimension_numbers<[1], [0], [0], [1], [0, 0, 1, 1], [], []>} : vector<8x32xf32>, vector<32x96xf32>, vector<8x96xf32> -> vector<8x96xf32>
    %c0_9 = arith.constant 0 : index
    %c0_10 = arith.constant 0 : index
    %12 = vector.load %arg4[%c0_9, %c0_10] : memref<1x96xf32, #tpu.memory_space<vmem>>, vector<1x96xf32>
    %13 = vector.broadcast %12 : vector<1x96xf32> to vector<8x96xf32>
    %14 = arith.addf %11, %13 : vector<8x96xf32>
    %15 = vector.extract_strided_slice %14 {offsets = [0, 0], sizes = [8, 32], strides = [1, 1]} : vector<8x96xf32> to vector<8x32xf32>
    %16 = vector.extract_strided_slice %14 {offsets = [0, 32], sizes = [8, 32], strides = [1, 1]} : vector<8x96xf32> to vector<8x32xf32>
    %17 = vector.extract_strided_slice %14 {offsets = [0, 64], sizes = [8, 32], strides = [1, 1]} : vector<8x96xf32> to vector<8x32xf32>
    %c0_11 = arith.constant 0 : index
    %c0_12 = arith.constant 0 : index
    %18 = vector.load %arg5[%c0_11, %c0_12] : memref<32x32xf32, #tpu.memory_space<vmem>>, vector<32x32xf32>
    %c0_13 = arith.constant 0 : index
    %c0_14 = arith.constant 0 : index
    %19 = vector.load %arg6[%c0_13, %c0_14] : memref<1x32xf32, #tpu.memory_space<vmem>>, vector<1x32xf32>
    %20 = vector.extract_strided_slice %15 {offsets = [0, 0], sizes = [8, 8], strides = [1, 1]} : vector<8x32xf32> to vector<8x8xf32>
    %21 = vector.extract_strided_slice %15 {offsets = [0, 8], sizes = [8, 8], strides = [1, 1]} : vector<8x32xf32> to vector<8x8xf32>
    %22 = vector.extract_strided_slice %15 {offsets = [0, 16], sizes = [8, 8], strides = [1, 1]} : vector<8x32xf32> to vector<8x8xf32>
    %23 = vector.extract_strided_slice %15 {offsets = [0, 24], sizes = [8, 8], strides = [1, 1]} : vector<8x32xf32> to vector<8x8xf32>
    %24 = vector.shape_cast %20 : vector<8x8xf32> to vector<1x8x8xf32>
    %25 = vector.shape_cast %21 : vector<8x8xf32> to vector<1x8x8xf32>
    %26 = vector.shape_cast %22 : vector<8x8xf32> to vector<1x8x8xf32>
    %27 = vector.shape_cast %23 : vector<8x8xf32> to vector<1x8x8xf32>
    %28 = tpu.concatenate %24, %25, %26, %27 in 0 : vector<1x8x8xf32>, vector<1x8x8xf32>, vector<1x8x8xf32>, vector<1x8x8xf32> -> vector<4x8x8xf32>
    %29 = vector.extract_strided_slice %16 {offsets = [0, 0], sizes = [8, 8], strides = [1, 1]} : vector<8x32xf32> to vector<8x8xf32>
    %30 = vector.extract_strided_slice %16 {offsets = [0, 8], sizes = [8, 8], strides = [1, 1]} : vector<8x32xf32> to vector<8x8xf32>
    %31 = vector.extract_strided_slice %16 {offsets = [0, 16], sizes = [8, 8], strides = [1, 1]} : vector<8x32xf32> to vector<8x8xf32>
    %32 = vector.extract_strided_slice %16 {offsets = [0, 24], sizes = [8, 8], strides = [1, 1]} : vector<8x32xf32> to vector<8x8xf32>
    %33 = vector.shape_cast %29 : vector<8x8xf32> to vector<1x8x8xf32>
    %34 = vector.shape_cast %30 : vector<8x8xf32> to vector<1x8x8xf32>
    %35 = vector.shape_cast %31 : vector<8x8xf32> to vector<1x8x8xf32>
    %36 = vector.shape_cast %32 : vector<8x8xf32> to vector<1x8x8xf32>
    %37 = tpu.concatenate %33, %34, %35, %36 in 0 : vector<1x8x8xf32>, vector<1x8x8xf32>, vector<1x8x8xf32>, vector<1x8x8xf32> -> vector<4x8x8xf32>
    %38 = vector.extract_strided_slice %17 {offsets = [0, 0], sizes = [8, 8], strides = [1, 1]} : vector<8x32xf32> to vector<8x8xf32>
    %39 = vector.extract_strided_slice %17 {offsets = [0, 8], sizes = [8, 8], strides = [1, 1]} : vector<8x32xf32> to vector<8x8xf32>
    %40 = vector.extract_strided_slice %17 {offsets = [0, 16], sizes = [8, 8], strides = [1, 1]} : vector<8x32xf32> to vector<8x8xf32>
    %41 = vector.extract_strided_slice %17 {offsets = [0, 24], sizes = [8, 8], strides = [1, 1]} : vector<8x32xf32> to vector<8x8xf32>
    %42 = vector.shape_cast %38 : vector<8x8xf32> to vector<1x8x8xf32>
    %43 = vector.shape_cast %39 : vector<8x8xf32> to vector<1x8x8xf32>
    %44 = vector.shape_cast %40 : vector<8x8xf32> to vector<1x8x8xf32>
    %45 = vector.shape_cast %41 : vector<8x8xf32> to vector<1x8x8xf32>
    %46 = tpu.concatenate %42, %43, %44, %45 in 0 : vector<1x8x8xf32>, vector<1x8x8xf32>, vector<1x8x8xf32>, vector<1x8x8xf32> -> vector<4x8x8xf32>
    "tpu.trace_start"() <{level = 10 : i32, message = "hqd,hkd->hqk"}> : () -> ()
    %cst_15 = arith.constant dense<0.000000e+00> : vector<4x8x8xf32>
    %47 = tpu.matmul %28, %37, %cst_15 {dimension_numbers = #tpu.dot_dimension_numbers<[2], [2], [1], [1], [0, 0, 0, 1, 1, 1], [0], [0]>} : vector<4x8x8xf32>, vector<4x8x8xf32>, vector<4x8x8xf32> -> vector<4x8x8xf32>
    "tpu.trace_stop"() : () -> ()
    %48 = vector.shape_cast %9 : vector<8x8xf32> to vector<1x8x8xf32>
    %49 = vector.broadcast %48 : vector<1x8x8xf32> to vector<4x8x8xf32>
    %50 = arith.addf %47, %49 : vector<4x8x8xf32>
    %cst_16 = arith.constant dense<0xFF800000> : vector<4x8xf32>
    %51 = vector.multi_reduction <maximumf>, %50, %cst_16 [2] : vector<4x8x8xf32> to vector<4x8xf32>
    %52 = vector.shape_cast %51 : vector<4x8xf32> to vector<4x8x1xf32>
    %53 = vector.broadcast %52 : vector<4x8x1xf32> to vector<4x8x8xf32>
    %54 = arith.subf %50, %53 : vector<4x8x8xf32>
    %55 = math.exp %54 : vector<4x8x8xf32>
    %cst_17 = arith.constant dense<0.000000e+00> : vector<4x8xf32>
    %56 = vector.multi_reduction <add>, %55, %cst_17 [2] : vector<4x8x8xf32> to vector<4x8xf32>
    %57 = vector.shape_cast %56 : vector<4x8xf32> to vector<4x8x1xf32>
    %58 = tpu.reciprocal %57 : vector<4x8x1xf32> -> vector<4x8x1xf32>
    %59 = vector.broadcast %58 : vector<4x8x1xf32> to vector<4x8x8xf32>
    %60 = arith.mulf %55, %59 : vector<4x8x8xf32>
    "tpu.trace_start"() <{level = 10 : i32, message = "hqk,hkd->hqd"}> : () -> ()
    %cst_18 = arith.constant dense<0.000000e+00> : vector<4x8x8xf32>
    %61 = tpu.matmul %60, %46, %cst_18 {dimension_numbers = #tpu.dot_dimension_numbers<[2], [1], [1], [2], [0, 0, 0, 1, 1, 2], [0], [0]>} : vector<4x8x8xf32>, vector<4x8x8xf32>, vector<4x8x8xf32> -> vector<4x8x8xf32>
    "tpu.trace_stop"() : () -> ()
    %62 = vector.extract_strided_slice %61 {offsets = [0, 0, 0], sizes = [1, 8, 8], strides = [1, 1, 1]} : vector<4x8x8xf32> to vector<1x8x8xf32>
    %63 = vector.shape_cast %62 : vector<1x8x8xf32> to vector<8x8xf32>
    %64 = vector.extract_strided_slice %61 {offsets = [1, 0, 0], sizes = [1, 8, 8], strides = [1, 1, 1]} : vector<4x8x8xf32> to vector<1x8x8xf32>
    %65 = vector.shape_cast %64 : vector<1x8x8xf32> to vector<8x8xf32>
    %66 = vector.extract_strided_slice %61 {offsets = [2, 0, 0], sizes = [1, 8, 8], strides = [1, 1, 1]} : vector<4x8x8xf32> to vector<1x8x8xf32>
    %67 = vector.shape_cast %66 : vector<1x8x8xf32> to vector<8x8xf32>
    %68 = vector.extract_strided_slice %61 {offsets = [3, 0, 0], sizes = [1, 8, 8], strides = [1, 1, 1]} : vector<4x8x8xf32> to vector<1x8x8xf32>
    %69 = vector.shape_cast %68 : vector<1x8x8xf32> to vector<8x8xf32>
    %70 = tpu.concatenate %63, %65, %67, %69 in 1 : vector<8x8xf32>, vector<8x8xf32>, vector<8x8xf32>, vector<8x8xf32> -> vector<8x32xf32>
    %cst_19 = arith.constant dense<0.000000e+00> : vector<8x32xf32>
    %71 = tpu.matmul %70, %18, %cst_19 {dimension_numbers = #tpu.dot_dimension_numbers<[1], [0], [0], [1], [0, 0, 1, 1], [], []>} : vector<8x32xf32>, vector<32x32xf32>, vector<8x32xf32> -> vector<8x32xf32>
    %72 = vector.broadcast %19 : vector<1x32xf32> to vector<8x32xf32>
    %73 = arith.addf %71, %72 : vector<8x32xf32>
    %74 = arith.addf %1, %73 : vector<8x32xf32>
    %c0_20 = arith.constant 0 : index
    %c0_21 = arith.constant 0 : index
    %75 = vector.load %arg7[%c0_20, %c0_21] : memref<1x32xf32, #tpu.memory_space<vmem>>, vector<1x32xf32>
    %c0_22 = arith.constant 0 : index
    %c0_23 = arith.constant 0 : index
    %76 = vector.load %arg8[%c0_22, %c0_23] : memref<1x32xf32, #tpu.memory_space<vmem>>, vector<1x32xf32>
    %cst_24 = arith.constant dense<0.000000e+00> : vector<8xf32>
    %77 = vector.multi_reduction <add>, %74, %cst_24 [1] : vector<8x32xf32> to vector<8xf32>
    %78 = vector.shape_cast %77 : vector<8xf32> to vector<8x1xf32>
    %cst_25 = arith.constant 3.200000e+01 : f32
    %79 = vector.broadcast %cst_25 : f32 to vector<8x1xf32>
    %80 = arith.divf %78, %79 : vector<8x1xf32>
    %81 = vector.broadcast %80 : vector<8x1xf32> to vector<8x32xf32>
    %82 = arith.subf %74, %81 : vector<8x32xf32>
    %83 = arith.mulf %82, %82 : vector<8x32xf32>
    %cst_26 = arith.constant dense<0.000000e+00> : vector<8xf32>
    %84 = vector.multi_reduction <add>, %83, %cst_26 [1] : vector<8x32xf32> to vector<8xf32>
    %85 = vector.shape_cast %84 : vector<8xf32> to vector<8x1xf32>
    %cst_27 = arith.constant 3.200000e+01 : f32
    %86 = vector.broadcast %cst_27 : f32 to vector<8x1xf32>
    %87 = arith.divf %85, %86 : vector<8x1xf32>
    %cst_28 = arith.constant 9.99999974E-6 : f32
    %88 = vector.broadcast %cst_28 : f32 to vector<8x1xf32>
    %89 = arith.addf %87, %88 : vector<8x1xf32>
    %90 = math.rsqrt %89 : vector<8x1xf32>
    %91 = vector.broadcast %90 : vector<8x1xf32> to vector<8x32xf32>
    %92 = arith.mulf %82, %91 : vector<8x32xf32>
    %93 = vector.broadcast %75 : vector<1x32xf32> to vector<8x32xf32>
    %94 = arith.mulf %92, %93 : vector<8x32xf32>
    %95 = vector.broadcast %76 : vector<1x32xf32> to vector<8x32xf32>
    %96 = arith.addf %94, %95 : vector<8x32xf32>
    %c0_29 = arith.constant 0 : index
    %c0_30 = arith.constant 0 : index
    %97 = vector.load %arg9[%c0_29, %c0_30] : memref<32x32xf32, #tpu.memory_space<vmem>>, vector<32x32xf32>
    %cst_31 = arith.constant dense<0.000000e+00> : vector<8x32xf32>
    %98 = tpu.matmul %96, %97, %cst_31 {dimension_numbers = #tpu.dot_dimension_numbers<[1], [0], [0], [1], [0, 0, 1, 1], [], []>} : vector<8x32xf32>, vector<32x32xf32>, vector<8x32xf32> -> vector<8x32xf32>
    %c0_32 = arith.constant 0 : index
    %c0_33 = arith.constant 0 : index
    %99 = vector.load %arg10[%c0_32, %c0_33] : memref<1x32xf32, #tpu.memory_space<vmem>>, vector<1x32xf32>
    %100 = vector.broadcast %99 : vector<1x32xf32> to vector<8x32xf32>
    %101 = arith.addf %98, %100 : vector<8x32xf32>
    %c0_34 = arith.constant 0 : index
    %c0_35 = arith.constant 0 : index
    %102 = vector.load %arg11[%c0_34, %c0_35] : memref<32x64xf32, #tpu.memory_space<vmem>>, vector<32x64xf32>
    %cst_36 = arith.constant dense<0.000000e+00> : vector<16x64xf32>
    %103 = tpu.matmul %3, %102, %cst_36 {dimension_numbers = #tpu.dot_dimension_numbers<[1], [0], [0], [1], [0, 0, 1, 1], [], []>} : vector<16x32xf32>, vector<32x64xf32>, vector<16x64xf32> -> vector<16x64xf32>
    %c0_37 = arith.constant 0 : index
    %c0_38 = arith.constant 0 : index
    %104 = vector.load %arg12[%c0_37, %c0_38] : memref<1x64xf32, #tpu.memory_space<vmem>>, vector<1x64xf32>
    %105 = vector.broadcast %104 : vector<1x64xf32> to vector<16x64xf32>
    %106 = arith.addf %103, %105 : vector<16x64xf32>
    %107 = vector.extract_strided_slice %106 {offsets = [0, 0], sizes = [16, 32], strides = [1, 1]} : vector<16x64xf32> to vector<16x32xf32>
    %108 = vector.extract_strided_slice %106 {offsets = [0, 32], sizes = [16, 32], strides = [1, 1]} : vector<16x64xf32> to vector<16x32xf32>
    %c0_39 = arith.constant 0 : index
    %c0_40 = arith.constant 0 : index
    %109 = vector.load %arg13[%c0_39, %c0_40] : memref<32x32xf32, #tpu.memory_space<vmem>>, vector<32x32xf32>
    %c0_41 = arith.constant 0 : index
    %c0_42 = arith.constant 0 : index
    %110 = vector.load %arg14[%c0_41, %c0_42] : memref<1x32xf32, #tpu.memory_space<vmem>>, vector<1x32xf32>
    %111 = vector.extract_strided_slice %101 {offsets = [0, 0], sizes = [8, 8], strides = [1, 1]} : vector<8x32xf32> to vector<8x8xf32>
    %112 = vector.extract_strided_slice %101 {offsets = [0, 8], sizes = [8, 8], strides = [1, 1]} : vector<8x32xf32> to vector<8x8xf32>
    %113 = vector.extract_strided_slice %101 {offsets = [0, 16], sizes = [8, 8], strides = [1, 1]} : vector<8x32xf32> to vector<8x8xf32>
    %114 = vector.extract_strided_slice %101 {offsets = [0, 24], sizes = [8, 8], strides = [1, 1]} : vector<8x32xf32> to vector<8x8xf32>
    %115 = vector.shape_cast %111 : vector<8x8xf32> to vector<1x8x8xf32>
    %116 = vector.shape_cast %112 : vector<8x8xf32> to vector<1x8x8xf32>
    %117 = vector.shape_cast %113 : vector<8x8xf32> to vector<1x8x8xf32>
    %118 = vector.shape_cast %114 : vector<8x8xf32> to vector<1x8x8xf32>
    %119 = tpu.concatenate %115, %116, %117, %118 in 0 : vector<1x8x8xf32>, vector<1x8x8xf32>, vector<1x8x8xf32>, vector<1x8x8xf32> -> vector<4x8x8xf32>
    %120 = vector.extract_strided_slice %107 {offsets = [0, 0], sizes = [16, 8], strides = [1, 1]} : vector<16x32xf32> to vector<16x8xf32>
    %121 = vector.extract_strided_slice %107 {offsets = [0, 8], sizes = [16, 8], strides = [1, 1]} : vector<16x32xf32> to vector<16x8xf32>
    %122 = vector.extract_strided_slice %107 {offsets = [0, 16], sizes = [16, 8], strides = [1, 1]} : vector<16x32xf32> to vector<16x8xf32>
    %123 = vector.extract_strided_slice %107 {offsets = [0, 24], sizes = [16, 8], strides = [1, 1]} : vector<16x32xf32> to vector<16x8xf32>
    %124 = vector.shape_cast %120 : vector<16x8xf32> to vector<1x16x8xf32>
    %125 = vector.shape_cast %121 : vector<16x8xf32> to vector<1x16x8xf32>
    %126 = vector.shape_cast %122 : vector<16x8xf32> to vector<1x16x8xf32>
    %127 = vector.shape_cast %123 : vector<16x8xf32> to vector<1x16x8xf32>
    %128 = tpu.concatenate %124, %125, %126, %127 in 0 : vector<1x16x8xf32>, vector<1x16x8xf32>, vector<1x16x8xf32>, vector<1x16x8xf32> -> vector<4x16x8xf32>
    %129 = vector.extract_strided_slice %108 {offsets = [0, 0], sizes = [16, 8], strides = [1, 1]} : vector<16x32xf32> to vector<16x8xf32>
    %130 = vector.extract_strided_slice %108 {offsets = [0, 8], sizes = [16, 8], strides = [1, 1]} : vector<16x32xf32> to vector<16x8xf32>
    %131 = vector.extract_strided_slice %108 {offsets = [0, 16], sizes = [16, 8], strides = [1, 1]} : vector<16x32xf32> to vector<16x8xf32>
    %132 = vector.extract_strided_slice %108 {offsets = [0, 24], sizes = [16, 8], strides = [1, 1]} : vector<16x32xf32> to vector<16x8xf32>
    %133 = vector.shape_cast %129 : vector<16x8xf32> to vector<1x16x8xf32>
    %134 = vector.shape_cast %130 : vector<16x8xf32> to vector<1x16x8xf32>
    %135 = vector.shape_cast %131 : vector<16x8xf32> to vector<1x16x8xf32>
    %136 = vector.shape_cast %132 : vector<16x8xf32> to vector<1x16x8xf32>
    %137 = tpu.concatenate %133, %134, %135, %136 in 0 : vector<1x16x8xf32>, vector<1x16x8xf32>, vector<1x16x8xf32>, vector<1x16x8xf32> -> vector<4x16x8xf32>
    "tpu.trace_start"() <{level = 10 : i32, message = "hqd,hkd->hqk"}> : () -> ()
    %cst_43 = arith.constant dense<0.000000e+00> : vector<4x8x16xf32>
    %138 = tpu.matmul %119, %128, %cst_43 {dimension_numbers = #tpu.dot_dimension_numbers<[2], [2], [1], [1], [0, 0, 0, 1, 1, 1], [0], [0]>} : vector<4x8x8xf32>, vector<4x16x8xf32>, vector<4x8x16xf32> -> vector<4x8x16xf32>
    "tpu.trace_stop"() : () -> ()
    %cst_44 = arith.constant dense<0xFF800000> : vector<4x8xf32>
    %139 = vector.multi_reduction <maximumf>, %138, %cst_44 [2] : vector<4x8x16xf32> to vector<4x8xf32>
    %140 = vector.shape_cast %139 : vector<4x8xf32> to vector<4x8x1xf32>
    %141 = vector.broadcast %140 : vector<4x8x1xf32> to vector<4x8x16xf32>
    %142 = arith.subf %138, %141 : vector<4x8x16xf32>
    %143 = math.exp %142 : vector<4x8x16xf32>
    %cst_45 = arith.constant dense<0.000000e+00> : vector<4x8xf32>
    %144 = vector.multi_reduction <add>, %143, %cst_45 [2] : vector<4x8x16xf32> to vector<4x8xf32>
    %145 = vector.shape_cast %144 : vector<4x8xf32> to vector<4x8x1xf32>
    %146 = tpu.reciprocal %145 : vector<4x8x1xf32> -> vector<4x8x1xf32>
    %147 = vector.broadcast %146 : vector<4x8x1xf32> to vector<4x8x16xf32>
    %148 = arith.mulf %143, %147 : vector<4x8x16xf32>
    "tpu.trace_start"() <{level = 10 : i32, message = "hqk,hkd->hqd"}> : () -> ()
    %cst_46 = arith.constant dense<0.000000e+00> : vector<4x8x8xf32>
    %149 = tpu.matmul %148, %137, %cst_46 {dimension_numbers = #tpu.dot_dimension_numbers<[2], [1], [1], [2], [0, 0, 0, 1, 1, 2], [0], [0]>} : vector<4x8x16xf32>, vector<4x16x8xf32>, vector<4x8x8xf32> -> vector<4x8x8xf32>
    "tpu.trace_stop"() : () -> ()
    %150 = vector.extract_strided_slice %149 {offsets = [0, 0, 0], sizes = [1, 8, 8], strides = [1, 1, 1]} : vector<4x8x8xf32> to vector<1x8x8xf32>
    %151 = vector.shape_cast %150 : vector<1x8x8xf32> to vector<8x8xf32>
    %152 = vector.extract_strided_slice %149 {offsets = [1, 0, 0], sizes = [1, 8, 8], strides = [1, 1, 1]} : vector<4x8x8xf32> to vector<1x8x8xf32>
    %153 = vector.shape_cast %152 : vector<1x8x8xf32> to vector<8x8xf32>
    %154 = vector.extract_strided_slice %149 {offsets = [2, 0, 0], sizes = [1, 8, 8], strides = [1, 1, 1]} : vector<4x8x8xf32> to vector<1x8x8xf32>
    %155 = vector.shape_cast %154 : vector<1x8x8xf32> to vector<8x8xf32>
    %156 = vector.extract_strided_slice %149 {offsets = [3, 0, 0], sizes = [1, 8, 8], strides = [1, 1, 1]} : vector<4x8x8xf32> to vector<1x8x8xf32>
    %157 = vector.shape_cast %156 : vector<1x8x8xf32> to vector<8x8xf32>
    %158 = tpu.concatenate %151, %153, %155, %157 in 1 : vector<8x8xf32>, vector<8x8xf32>, vector<8x8xf32>, vector<8x8xf32> -> vector<8x32xf32>
    %cst_47 = arith.constant dense<0.000000e+00> : vector<8x32xf32>
    %159 = tpu.matmul %158, %109, %cst_47 {dimension_numbers = #tpu.dot_dimension_numbers<[1], [0], [0], [1], [0, 0, 1, 1], [], []>} : vector<8x32xf32>, vector<32x32xf32>, vector<8x32xf32> -> vector<8x32xf32>
    %160 = vector.broadcast %110 : vector<1x32xf32> to vector<8x32xf32>
    %161 = arith.addf %159, %160 : vector<8x32xf32>
    %162 = arith.addf %96, %161 : vector<8x32xf32>
    %c0_48 = arith.constant 0 : index
    %c0_49 = arith.constant 0 : index
    %163 = vector.load %arg15[%c0_48, %c0_49] : memref<1x32xf32, #tpu.memory_space<vmem>>, vector<1x32xf32>
    %c0_50 = arith.constant 0 : index
    %c0_51 = arith.constant 0 : index
    %164 = vector.load %arg16[%c0_50, %c0_51] : memref<1x32xf32, #tpu.memory_space<vmem>>, vector<1x32xf32>
    %cst_52 = arith.constant dense<0.000000e+00> : vector<8xf32>
    %165 = vector.multi_reduction <add>, %162, %cst_52 [1] : vector<8x32xf32> to vector<8xf32>
    %166 = vector.shape_cast %165 : vector<8xf32> to vector<8x1xf32>
    %cst_53 = arith.constant 3.200000e+01 : f32
    %167 = vector.broadcast %cst_53 : f32 to vector<8x1xf32>
    %168 = arith.divf %166, %167 : vector<8x1xf32>
    %169 = vector.broadcast %168 : vector<8x1xf32> to vector<8x32xf32>
    %170 = arith.subf %162, %169 : vector<8x32xf32>
    %171 = arith.mulf %170, %170 : vector<8x32xf32>
    %cst_54 = arith.constant dense<0.000000e+00> : vector<8xf32>
    %172 = vector.multi_reduction <add>, %171, %cst_54 [1] : vector<8x32xf32> to vector<8xf32>
    %173 = vector.shape_cast %172 : vector<8xf32> to vector<8x1xf32>
    %cst_55 = arith.constant 3.200000e+01 : f32
    %174 = vector.broadcast %cst_55 : f32 to vector<8x1xf32>
    %175 = arith.divf %173, %174 : vector<8x1xf32>
    %cst_56 = arith.constant 9.99999974E-6 : f32
    %176 = vector.broadcast %cst_56 : f32 to vector<8x1xf32>
    %177 = arith.addf %175, %176 : vector<8x1xf32>
    %178 = math.rsqrt %177 : vector<8x1xf32>
    %179 = vector.broadcast %178 : vector<8x1xf32> to vector<8x32xf32>
    %180 = arith.mulf %170, %179 : vector<8x32xf32>
    %181 = vector.broadcast %163 : vector<1x32xf32> to vector<8x32xf32>
    %182 = arith.mulf %180, %181 : vector<8x32xf32>
    %183 = vector.broadcast %164 : vector<1x32xf32> to vector<8x32xf32>
    %184 = arith.addf %182, %183 : vector<8x32xf32>
    %c0_57 = arith.constant 0 : index
    %c0_58 = arith.constant 0 : index
    %185 = vector.load %arg17[%c0_57, %c0_58] : memref<32x64xf32, #tpu.memory_space<vmem>>, vector<32x64xf32>
    %cst_59 = arith.constant dense<0.000000e+00> : vector<8x64xf32>
    %186 = tpu.matmul %184, %185, %cst_59 {dimension_numbers = #tpu.dot_dimension_numbers<[1], [0], [0], [1], [0, 0, 1, 1], [], []>} : vector<8x32xf32>, vector<32x64xf32>, vector<8x64xf32> -> vector<8x64xf32>
    %c0_60 = arith.constant 0 : index
    %c0_61 = arith.constant 0 : index
    %187 = vector.load %arg18[%c0_60, %c0_61] : memref<1x64xf32, #tpu.memory_space<vmem>>, vector<1x64xf32>
    %188 = vector.broadcast %187 : vector<1x64xf32> to vector<8x64xf32>
    %189 = arith.addf %186, %188 : vector<8x64xf32>
    %cst_62 = arith.constant 0.000000e+00 : f32
    %190 = vector.broadcast %cst_62 : f32 to vector<8x64xf32>
    %191 = arith.maximumf %189, %190 : vector<8x64xf32>
    %c0_63 = arith.constant 0 : index
    %c0_64 = arith.constant 0 : index
    %192 = vector.load %arg19[%c0_63, %c0_64] : memref<64x32xf32, #tpu.memory_space<vmem>>, vector<64x32xf32>
    %cst_65 = arith.constant dense<0.000000e+00> : vector<8x32xf32>
    %193 = tpu.matmul %191, %192, %cst_65 {dimension_numbers = #tpu.dot_dimension_numbers<[1], [0], [0], [1], [0, 0, 1, 1], [], []>} : vector<8x64xf32>, vector<64x32xf32>, vector<8x32xf32> -> vector<8x32xf32>
    %c0_66 = arith.constant 0 : index
    %c0_67 = arith.constant 0 : index
    %194 = vector.load %arg20[%c0_66, %c0_67] : memref<1x32xf32, #tpu.memory_space<vmem>>, vector<1x32xf32>
    %195 = vector.broadcast %194 : vector<1x32xf32> to vector<8x32xf32>
    %196 = arith.addf %193, %195 : vector<8x32xf32>
    %197 = arith.addf %184, %196 : vector<8x32xf32>
    %c0_68 = arith.constant 0 : index
    %c0_69 = arith.constant 0 : index
    %198 = vector.load %arg21[%c0_68, %c0_69] : memref<1x32xf32, #tpu.memory_space<vmem>>, vector<1x32xf32>
    %c0_70 = arith.constant 0 : index
    %c0_71 = arith.constant 0 : index
    %199 = vector.load %arg22[%c0_70, %c0_71] : memref<1x32xf32, #tpu.memory_space<vmem>>, vector<1x32xf32>
    %cst_72 = arith.constant dense<0.000000e+00> : vector<8xf32>
    %200 = vector.multi_reduction <add>, %197, %cst_72 [1] : vector<8x32xf32> to vector<8xf32>
    %201 = vector.shape_cast %200 : vector<8xf32> to vector<8x1xf32>
    %cst_73 = arith.constant 3.200000e+01 : f32
    %202 = vector.broadcast %cst_73 : f32 to vector<8x1xf32>
    %203 = arith.divf %201, %202 : vector<8x1xf32>
    %204 = vector.broadcast %203 : vector<8x1xf32> to vector<8x32xf32>
    %205 = arith.subf %197, %204 : vector<8x32xf32>
    %206 = arith.mulf %205, %205 : vector<8x32xf32>
    %cst_74 = arith.constant dense<0.000000e+00> : vector<8xf32>
    %207 = vector.multi_reduction <add>, %206, %cst_74 [1] : vector<8x32xf32> to vector<8xf32>
    %208 = vector.shape_cast %207 : vector<8xf32> to vector<8x1xf32>
    %cst_75 = arith.constant 3.200000e+01 : f32
    %209 = vector.broadcast %cst_75 : f32 to vector<8x1xf32>
    %210 = arith.divf %208, %209 : vector<8x1xf32>
    %cst_76 = arith.constant 9.99999974E-6 : f32
    %211 = vector.broadcast %cst_76 : f32 to vector<8x1xf32>
    %212 = arith.addf %210, %211 : vector<8x1xf32>
    %213 = math.rsqrt %212 : vector<8x1xf32>
    %214 = vector.broadcast %213 : vector<8x1xf32> to vector<8x32xf32>
    %215 = arith.mulf %205, %214 : vector<8x32xf32>
    %216 = vector.broadcast %198 : vector<1x32xf32> to vector<8x32xf32>
    %217 = arith.mulf %215, %216 : vector<8x32xf32>
    %218 = vector.broadcast %199 : vector<1x32xf32> to vector<8x32xf32>
    %219 = arith.addf %217, %218 : vector<8x32xf32>
    %c0_77 = arith.constant 0 : index
    %c0_78 = arith.constant 0 : index
    %c0_79 = arith.constant 0 : index
    %220 = vector.load %arg23[%c0_77, %c0_78, %c0_79] : memref<1x8x32xf32, #tpu.memory_space<vmem>>, vector<1x8x32xf32>
    %221 = vector.shape_cast %220 : vector<1x8x32xf32> to vector<8x32xf32>
    %222 = vector.shape_cast %219 : vector<8x32xf32> to vector<1x8x32xf32>
    tpu.vector_store %arg23[%c0_77, %c0_78, %c0_79], %222 {strides = array<i32>} : memref<1x8x32xf32, #tpu.memory_space<vmem>>, vector<1x8x32xf32>,
    return
  }
  func.func @transform_0(%arg0: i32) -> (i32, i32, i32) {
    %c0_i32 = arith.constant 0 : i32
    %c0_i32_0 = arith.constant 0 : i32
    %c0_i32_1 = arith.constant 0 : i32
    return %arg0, %c0_i32, %c0_i32_0 : i32, i32, i32
  }
  func.func @transform_1(%arg0: i32) -> (i32, i32, i32) {
    %c0_i32 = arith.constant 0 : i32
    %c0_i32_0 = arith.constant 0 : i32
    %c0_i32_1 = arith.constant 0 : i32
    return %arg0, %c0_i32, %c0_i32_0 : i32, i32, i32
  }
  func.func @transform_2(%arg0: i32) -> (i32, i32) {
    %c0_i32 = arith.constant 0 : i32
    %c0_i32_0 = arith.constant 0 : i32
    %c0_i32_1 = arith.constant 0 : i32
    return %c0_i32, %c0_i32_0 : i32, i32
  }
  func.func @transform_3(%arg0: i32) -> (i32, i32) {
    %c0_i32 = arith.constant 0 : i32
    %c0_i32_0 = arith.constant 0 : i32
    %c0_i32_1 = arith.constant 0 : i32
    return %c0_i32, %c0_i32_0 : i32, i32
  }
  func.func @transform_4(%arg0: i32) -> (i32, i32) {
    %c0_i32 = arith.constant 0 : i32
    %c0_i32_0 = arith.constant 0 : i32
    %c0_i32_1 = arith.constant 0 : i32
    return %c0_i32, %c0_i32_0 : i32, i32
  }
  func.func @transform_5(%arg0: i32) -> (i32, i32) {
    %c0_i32 = arith.constant 0 : i32
    %c0_i32_0 = arith.constant 0 : i32
    %c0_i32_1 = arith.constant 0 : i32
    return %c0_i32, %c0_i32_0 : i32, i32
  }
  func.func @transform_6(%arg0: i32) -> (i32, i32) {
    %c0_i32 = arith.constant 0 : i32
    %c0_i32_0 = arith.constant 0 : i32
    %c0_i32_1 = arith.constant 0 : i32
    return %c0_i32, %c0_i32_0 : i32, i32
  }
  func.func @transform_7(%arg0: i32) -> (i32, i32) {
    %c0_i32 = arith.constant 0 : i32
    %c0_i32_0 = arith.constant 0 : i32
    %c0_i32_1 = arith.constant 0 : i32
    return %c0_i32, %c0_i32_0 : i32, i32
  }
  func.func @transform_8(%arg0: i32) -> (i32, i32) {
    %c0_i32 = arith.constant 0 : i32
    %c0_i32_0 = arith.constant 0 : i32
    %c0_i32_1 = arith.constant 0 : i32
    return %c0_i32, %c0_i32_0 : i32, i32
  }
  func.func @transform_9(%arg0: i32) -> (i32, i32) {
    %c0_i32 = arith.constant 0 : i32
    %c0_i32_0 = arith.constant 0 : i32
    %c0_i32_1 = arith.constant 0 : i32
    return %c0_i32, %c0_i32_0 : i32, i32
  }
  func.func @transform_10(%arg0: i32) -> (i32, i32) {
    %c0_i32 = arith.constant 0 : i32
    %c0_i32_0 = arith.constant 0 : i32
    %c0_i32_1 = arith.constant 0 : i32
    return %c0_i32, %c0_i32_0 : i32, i32
  }
  func.func @transform_11(%arg0: i32) -> (i32, i32) {
    %c0_i32 = arith.constant 0 : i32
    %c0_i32_0 = arith.constant 0 : i32
    %c0_i32_1 = arith.constant 0 : i32
    return %c0_i32, %c0_i32_0 : i32, i32
  }
  func.func @transform_12(%arg0: i32) -> (i32, i32) {
    %c0_i32 = arith.constant 0 : i32
    %c0_i32_0 = arith.constant 0 : i32
    %c0_i32_1 = arith.constant 0 : i32
    return %c0_i32, %c0_i32_0 : i32, i32
  }
  func.func @transform_13(%arg0: i32) -> (i32, i32) {
    %c0_i32 = arith.constant 0 : i32
    %c0_i32_0 = arith.constant 0 : i32
    %c0_i32_1 = arith.constant 0 : i32
    return %c0_i32, %c0_i32_0 : i32, i32
  }
  func.func @transform_14(%arg0: i32) -> (i32, i32) {
    %c0_i32 = arith.constant 0 : i32
    %c0_i32_0 = arith.constant 0 : i32
    %c0_i32_1 = arith.constant 0 : i32
    return %c0_i32, %c0_i32_0 : i32, i32
  }
  func.func @transform_15(%arg0: i32) -> (i32, i32) {
    %c0_i32 = arith.constant 0 : i32
    %c0_i32_0 = arith.constant 0 : i32
    %c0_i32_1 = arith.constant 0 : i32
    return %c0_i32, %c0_i32_0 : i32, i32
  }
  func.func @transform_16(%arg0: i32) -> (i32, i32) {
    %c0_i32 = arith.constant 0 : i32
    %c0_i32_0 = arith.constant 0 : i32
    %c0_i32_1 = arith.constant 0 : i32
    return %c0_i32, %c0_i32_0 : i32, i32
  }
  func.func @transform_17(%arg0: i32) -> (i32, i32) {
    %c0_i32 = arith.constant 0 : i32
    %c0_i32_0 = arith.constant 0 : i32
    %c0_i32_1 = arith.constant 0 : i32
    return %c0_i32, %c0_i32_0 : i32, i32
  }
  func.func @transform_18(%arg0: i32) -> (i32, i32) {
    %c0_i32 = arith.constant 0 : i32
    %c0_i32_0 = arith.constant 0 : i32
    %c0_i32_1 = arith.constant 0 : i32
    return %c0_i32, %c0_i32_0 : i32, i32
  }
  func.func @transform_19(%arg0: i32) -> (i32, i32) {
    %c0_i32 = arith.constant 0 : i32
    %c0_i32_0 = arith.constant 0 : i32
    %c0_i32_1 = arith.constant 0 : i32
    return %c0_i32, %c0_i32_0 : i32, i32
  }
  func.func @transform_20(%arg0: i32) -> (i32, i32) {
    %c0_i32 = arith.constant 0 : i32
    %c0_i32_0 = arith.constant 0 : i32
    %c0_i32_1 = arith.constant 0 : i32
    return %c0_i32, %c0_i32_0 : i32, i32
  }
  func.func @transform_21(%arg0: i32) -> (i32, i32) {
    %c0_i32 = arith.constant 0 : i32
    %c0_i32_0 = arith.constant 0 : i32
    %c0_i32_1 = arith.constant 0 : i32
    return %c0_i32, %c0_i32_0 : i32, i32
  }
  func.func @transform_22(%arg0: i32) -> (i32, i32, i32) {
    %c0_i32 = arith.constant 0 : i32
    %c0_i32_0 = arith.constant 0 : i32
    %c0_i32_1 = arith.constant 0 : i32
    return %arg0, %c0_i32, %c0_i32_0 : i32, i32, i32
  }
}

</mosaic_0001>

<llo_original>
// kernel: tpu_custom_call.1
$region0: #{tpu_custom_call.1}
  #allocation0 [shape = 'u32[]', space=smem, size = 0x4, offset = 0x4, fixed_abs, tag = 'smem constant byte address 0x4 - core index']
  #allocation1 [shape = 'u32[144,128]{1,0:T(1,128)}', space=vmem, size = 0x12000, scoped, tag = 'internal scratch']
  %s0 = inlined_call_operand.hbm [shape: f32[2,8,32], index: 0, kind: input, shape index: {}]
  %s1 = inlined_call_operand.vmem [shape: f32[2,16,32], index: 1, kind: input, shape index: {}]
  %s2 = inlined_call_operand.vmem [shape: f32[32,96], index: 2, kind: input, shape index: {}]
  %s3 = inlined_call_operand.hbm [shape: f32[1,96], index: 3, kind: input, shape index: {}]
  %s4 = inlined_call_operand.vmem [shape: f32[32,32], index: 4, kind: input, shape index: {}]
  %s5 = inlined_call_operand.hbm [shape: f32[1,32], index: 5, kind: input, shape index: {}]
  %s6 = inlined_call_operand.hbm [shape: f32[1,32], index: 6, kind: input, shape index: {}]
  %s7 = inlined_call_operand.hbm [shape: f32[1,32], index: 7, kind: input, shape index: {}]
  %s8 = inlined_call_operand.hbm [shape: f32[32,32], index: 8, kind: input, shape index: {}]
  %s9 = inlined_call_operand.hbm [shape: f32[1,32], index: 9, kind: input, shape index: {}]
  %s10 = inlined_call_operand.vmem [shape: f32[32,64], index: 10, kind: input, shape index: {}]
  %s11 = inlined_call_operand.hbm [shape: f32[1,64], index: 11, kind: input, shape index: {}]
  %s12 = inlined_call_operand.hbm [shape: f32[32,32], index: 12, kind: input, shape index: {}]
  %s13 = inlined_call_operand.hbm [shape: f32[1,32], index: 13, kind: input, shape index: {}]
  %s14 = inlined_call_operand.hbm [shape: f32[1,32], index: 14, kind: input, shape index: {}]
  %s15 = inlined_call_operand.hbm [shape: f32[1,32], index: 15, kind: input, shape index: {}]
  %s16 = inlined_call_operand.hbm [shape: f32[32,64], index: 16, kind: input, shape index: {}]
  %s17 = inlined_call_operand.hbm [shape: f32[1,64], index: 17, kind: input, shape index: {}]
  %s18 = inlined_call_operand.vmem [shape: f32[64,32], index: 18, kind: input, shape index: {}]
  %s19 = inlined_call_operand.vmem [shape: f32[1,32], index: 19, kind: input, shape index: {}]
  %s20 = inlined_call_operand.vmem [shape: f32[1,32], index: 20, kind: input, shape index: {}]
  %s21 = inlined_call_operand.vmem [shape: f32[1,32], index: 21, kind: input, shape index: {}]
  %s22 = inlined_call_operand.hbm [shape: f32[2,8,32], index: 22, kind: output, shape index: {}]
  %s23 = sld [smem:[#allocation0]]
  $region177: #{tpu_custom_call.1} parent=0
    _
  %s25 = ssub.s32 1, %s23
  %s26 = scalar_select 0, %s25, %s23
  $region1: #{tpu_custom_call.1} parent=0
    #allocation2 [shape = 'u8[8192]{0}', space=vmem, size = 0x2000, scoped, tag = 'input window, operand 0']
    #allocation3 [shape = 's32[2]{0}', space=sflag, size = 0x8, scoped, tag = 'scoped memory for tpu_custom_call.1']
    #allocation4 [shape = 's32[2]{0}', space=sflag, size = 0x8, scoped, tag = 'scoped memory for tpu_custom_call.1']
    #allocation5 [shape = 'u8[512]{0}', space=vmem, size = 0x400, scoped, tag = 'input window, operand 3, single buffered']
    #allocation6 [shape = 's32[1]{0}', space=sflag, size = 0x4, scoped, tag = 'scoped memory for tpu_custom_call.1']
    #allocation7 [shape = 'u8[512]{0}', space=vmem, size = 0x400, scoped, tag = 'input window, operand 5, single buffered']
    #allocation8 [shape = 'u8[512]{0}', space=vmem, size = 0x400, scoped, tag = 'input window, operand 6, single buffered']
    #allocation9 [shape = 's32[1]{0}', space=sflag, size = 0x4, scoped, tag = 'scoped memory for tpu_custom_call.1']
    #allocation10 [shape = 'u8[512]{0}', space=vmem, size = 0x400, scoped, tag = 'input window, operand 7, single buffered']
    #allocation11 [shape = 'u8[16384]{0}', space=vmem, size = 0x4000, scoped, tag = 'input window, operand 8, single buffered']
    #allocation12 [shape = 's32[1]{0}', space=sflag, size = 0x4, scoped, tag = 'scoped memory for tpu_custom_call.1']
    #allocation13 [shape = 'u8[512]{0}', space=vmem, size = 0x400, scoped, tag = 'input window, operand 9, single buffered']
    #allocation14 [shape = 'u8[512]{0}', space=vmem, size = 0x400, scoped, tag = 'input window, operand 11, single buffered']
    #allocation15 [shape = 's32[1]{0}', space=sflag, size = 0x4, scoped, tag = 'scoped memory for tpu_custom_call.1']
    #allocation16 [shape = 'u8[16384]{0}', space=vmem, size = 0x4000, scoped, tag = 'input window, operand 12, single buffered']
    #allocation17 [shape = 'u8[512]{0}', space=vmem, size = 0x400, scoped, tag = 'input window, operand 13, single buffered']
    #allocation18 [shape = 's32[1]{0}', space=sflag, size = 0x4, scoped, tag = 'scoped memory for tpu_custom_call.1']
    #allocation19 [shape = 'u8[512]{0}', space=vmem, size = 0x400, scoped, tag = 'input window, operand 14, single buffered']
    #allocation20 [shape = 'u8[512]{0}', space=vmem, size = 0x400, scoped, tag = 'input window, operand 15, single buffered']
    #allocation21 [shape = 's32[1]{0}', space=sflag, size = 0x4, scoped, tag = 'scoped memory for tpu_custom_call.1']
    #allocation22 [shape = 'u8[16384]{0}', space=vmem, size = 0x4000, scoped, tag = 'input window, operand 16, single buffered']
    #allocation23 [shape = 'u8[512]{0}', space=vmem, size = 0x400, scoped, tag = 'input window, operand 17, single buffered']
    #allocation24 [shape = 's32[1]{0}', space=sflag, size = 0x4, scoped, tag = 'scoped memory for tpu_custom_call.1']
    #allocation25 [shape = 'u8[8192]{0}', space=vmem, size = 0x2000, scoped, tag = 'output window, operand 0']
    %27 = vsyncpa [#allocation3], 0
    %s28 = scalar_lea.sflag [#allocation3], 1
    %29 = vsyncpa %s28, 0
    %30 = vsyncpa [#allocation6], 0
    %31 = vsyncpa [#allocation9], 0
    %32 = vsyncpa [#allocation12], 0
    %33 = vsyncpa [#allocation15], 0
    %34 = vsyncpa [#allocation18], 0
    %35 = vsyncpa [#allocation21], 0
    %36 = vsyncpa [#allocation24], 0
    %37 = vsyncpa [#allocation4], 0
    %s38 = scalar_lea.sflag [#allocation4], 1
    %39 = vsyncpa %s38, 0
    loop: start=0, step=1, limit=4
    $region2: #{tpu_custom_call.1} parent=1 // loop_pre_header
      _
    $region3: #{tpu_custom_call.1} parent=1 // loop_header
      %s41 = sphi 0, %s45
      %p42 = scmp.ge.s32.totalorder %s41, 4
      %s51 = sphi 0, %s53
      %s54 = sphi 0, %s51
      %s55 = sphi 0, %s54
      %s71 = sphi 0, %s55
      %s77 = sphi 0, %s79
      %s80 = sphi 0, %s77
      %s81 = sphi 0, %s80
      %s97 = sphi 0, %s81
      %s101 = sphi 0, %s101
      %s103 = sphi 0, %s101
      %s104 = sphi 0, %s103
      %s118 = sphi 0, %s104
      %s122 = sphi 0, %s122
      %s124 = sphi 0, %s122
      %s125 = sphi 0, %s124
      %s139 = sphi 0, %s125
      %s143 = sphi 0, %s143
      %s145 = sphi 0, %s143
      %s146 = sphi 0, %s145
      %s160 = sphi 0, %s146
      %s164 = sphi 0, %s164
      %s166 = sphi 0, %s164
      %s167 = sphi 0, %s166
      %s181 = sphi 0, %s167
      %s185 = sphi 0, %s185
      %s187 = sphi 0, %s185
      %s188 = sphi 0, %s187
      %s202 = sphi 0, %s188
      %s206 = sphi 0, %s206
      %s208 = sphi 0, %s206
      %s209 = sphi 0, %s208
      %s223 = sphi 0, %s209
      %s227 = sphi 0, %s227
      %s229 = sphi 0, %s227
      %s230 = sphi 0, %s229
      %s244 = sphi 0, %s230
      %s248 = sphi 0, %s248
      %s250 = sphi 0, %s248
      %s251 = sphi 0, %s250
      %s265 = sphi 0, %s251
      %s269 = sphi 0, %s269
      %s271 = sphi 0, %s269
      %s272 = sphi 0, %s271
      %s286 = sphi 0, %s272
      %s290 = sphi 0, %s290
      %s292 = sphi 0, %s290
      %s293 = sphi 0, %s292
      %s307 = sphi 0, %s293
      %s311 = sphi 0, %s311
      %s313 = sphi 0, %s311
      %s314 = sphi 0, %s313
      %s328 = sphi 0, %s314
      %s332 = sphi 0, %s332
      %s334 = sphi 0, %s332
      %s335 = sphi 0, %s334
      %s349 = sphi 0, %s335
      %s353 = sphi 0, %s353
      %s355 = sphi 0, %s353
      %s356 = sphi 0, %s355
      %s370 = sphi 0, %s356
      %s374 = sphi 0, %s374
      %s376 = sphi 0, %s374
      %s377 = sphi 0, %s376
      %s391 = sphi 0, %s377
      %s395 = sphi 0, %s395
      %s397 = sphi 0, %s395
      %s398 = sphi 0, %s397
      %s412 = sphi 0, %s398
      %s416 = sphi 0, %s416
      %s418 = sphi 0, %s416
      %s419 = sphi 0, %s418
      %s433 = sphi 0, %s419
      %s437 = sphi 0, %s437
      %s439 = sphi 0, %s437
      %s440 = sphi 0, %s439
      %s454 = sphi 0, %s440
      %s458 = sphi 0, %s458
      %s460 = sphi 0, %s458
      %s461 = sphi 0, %s460
      %s475 = sphi 0, %s461
      %s479 = sphi 0, %s479
      %s481 = sphi 0, %s479
      %s482 = sphi 0, %s481
      %s496 = sphi 0, %s482
      %s500 = sphi 0, %s500
      %s502 = sphi 0, %s500
      %s503 = sphi 0, %s502
      %s517 = sphi 0, %s503
      %s523 = sphi 0, %s525
      %s526 = sphi 0, %s523
      %s527 = sphi 0, %s526
      %s543 = sphi 0, %s527
    $region4: #{tpu_custom_call.1} parent=1 // loop_header_branch
      %44 = sbr.rel (%p42) target = $region8
    $region5: #{tpu_custom_call.1} parent=1 // loop_body
      %s46 = ssub.s32 %s41, 1
      %s47 = ssub.s32 %s41, 2
      %s48 = sadd.s32 %s41, 1
      %s49 = ssub.s32 %s41, %s48
      %p50 = scmp.eq.s32.totalorder %s49, 0
      %s52 = sadd.s32 %s51, 1
      %s53 = scalar_select %p50, %s51, %s52
      %p56 = pneg %p50
      %p57 = scmp.eq.s32.totalorder %s41, 1
      %p58 = por %p56, %p57
      %p59 = scmp.ne.s32.totalorder %s51, %s54
      %p60 = scmp.eq.s32.totalorder %s41, 0
      %p61 = por %p59, %p60
      %p62 = scmp.ne.s32.totalorder %s51, %s54
      %p63 = scmp.eq.s32.totalorder %s46, 1
      %p64 = por %p62, %p63
      %p65 = scmp.ne.s32.totalorder %s54, %s55
      %p66 = scmp.eq.s32.totalorder %s46, 0
      %p67 = por %p65, %p66
      %p68 = scmp.ne.s32.totalorder %s54, %s55
      %p69 = scmp.eq.s32.totalorder %s47, 1
      %p70 = por %p68, %p69
      %p72 = scmp.ne.s32.totalorder %s55, %s71
      %p73 = scmp.eq.s32.totalorder %s47, 0
      %p74 = por %p72, %p73
      %s75 = ssub.s32 %s41, %s48
      %p76 = scmp.eq.s32.totalorder %s75, 0
      %s78 = sadd.s32 %s77, 1
      %s79 = scalar_select %p76, %s77, %s78
      %p82 = pneg %p76
      %p83 = scmp.eq.s32.totalorder %s41, 1
      %p84 = por %p82, %p83
      %p85 = scmp.ne.s32.totalorder %s77, %s80
      %p86 = scmp.eq.s32.totalorder %s41, 0
      %p87 = por %p85, %p86
      %p88 = scmp.ne.s32.totalorder %s77, %s80
      %p89 = scmp.eq.s32.totalorder %s46, 1
      %p90 = por %p88, %p89
      %p91 = scmp.ne.s32.totalorder %s80, %s81
      %p92 = scmp.eq.s32.totalorder %s46, 0
      %p93 = por %p91, %p92
      %p94 = scmp.ne.s32.totalorder %s80, %s81
      %p95 = scmp.eq.s32.totalorder %s47, 1
      %p96 = por %p94, %p95
      %p98 = scmp.ne.s32.totalorder %s81, %s97
      %p99 = scmp.eq.s32.totalorder %s47, 0
      %p100 = por %p98, %p99
      %s102 = sadd.s32 %s101, 1
      %p105 = scmp.eq.s32.totalorder %s41, 1
      %p106 = scmp.ne.s32.totalorder %s101, %s103
      %p107 = scmp.eq.s32.totalorder %s41, 0
      %p108 = por %p106, %p107
      %p109 = scmp.ne.s32.totalorder %s101, %s103
      %p110 = scmp.eq.s32.totalorder %s46, 1
      %p111 = por %p109, %p110
      %p112 = scmp.ne.s32.totalorder %s103, %s104
      %p113 = scmp.eq.s32.totalorder %s46, 0
      %p114 = por %p112, %p113
      %p115 = scmp.ne.s32.totalorder %s103, %s104
      %p116 = scmp.eq.s32.totalorder %s47, 1
      %p117 = por %p115, %p116
      %p119 = scmp.ne.s32.totalorder %s104, %s118
      %p120 = scmp.eq.s32.totalorder %s47, 0
      %p121 = por %p119, %p120
      %s123 = sadd.s32 %s122, 1
      %p126 = scmp.eq.s32.totalorder %s41, 1
      %p127 = scmp.ne.s32.totalorder %s122, %s124
      %p128 = scmp.eq.s32.totalorder %s41, 0
      %p129 = por %p127, %p128
      %p130 = scmp.ne.s32.totalorder %s122, %s124
      %p131 = scmp.eq.s32.totalorder %s46, 1
      %p132 = por %p130, %p131
      %p133 = scmp.ne.s32.totalorder %s124, %s125
      %p134 = scmp.eq.s32.totalorder %s46, 0
      %p135 = por %p133, %p134
      %p136 = scmp.ne.s32.totalorder %s124, %s125
      %p137 = scmp.eq.s32.totalorder %s47, 1
      %p138 = por %p136, %p137
      %p140 = scmp.ne.s32.totalorder %s125, %s139
      %p141 = scmp.eq.s32.totalorder %s47, 0
      %p142 = por %p140, %p141
      %s144 = sadd.s32 %s143, 1
      %p147 = scmp.eq.s32.totalorder %s41, 1
      %p148 = scmp.ne.s32.totalorder %s143, %s145
      %p149 = scmp.eq.s32.totalorder %s41, 0
      %p150 = por %p148, %p149
      %p151 = scmp.ne.s32.totalorder %s143, %s145
      %p152 = scmp.eq.s32.totalorder %s46, 1
      %p153 = por %p151, %p152
      %p154 = scmp.ne.s32.totalorder %s145, %s146
      %p155 = scmp.eq.s32.totalorder %s46, 0
      %p156 = por %p154, %p155
      %p157 = scmp.ne.s32.totalorder %s145, %s146
      %p158 = scmp.eq.s32.totalorder %s47, 1
      %p159 = por %p157, %p158
      %p161 = scmp.ne.s32.totalorder %s146, %s160
      %p162 = scmp.eq.s32.totalorder %s47, 0
      %p163 = por %p161, %p162
      %s165 = sadd.s32 %s164, 1
      %p168 = scmp.eq.s32.totalorder %s41, 1
      %p169 = scmp.ne.s32.totalorder %s164, %s166
      %p170 = scmp.eq.s32.totalorder %s41, 0
      %p171 = por %p169, %p170
      %p172 = scmp.ne.s32.totalorder %s164, %s166
      %p173 = scmp.eq.s32.totalorder %s46, 1
      %p174 = por %p172, %p173
      %p175 = scmp.ne.s32.totalorder %s166, %s167
      %p176 = scmp.eq.s32.totalorder %s46, 0
      %p177 = por %p175, %p176
      %p178 = scmp.ne.s32.totalorder %s166, %s167
      %p179 = scmp.eq.s32.totalorder %s47, 1
      %p180 = por %p178, %p179
      %p182 = scmp.ne.s32.totalorder %s167, %s181
      %p183 = scmp.eq.s32.totalorder %s47, 0
      %p184 = por %p182, %p183
      %s186 = sadd.s32 %s185, 1
      %p189 = scmp.eq.s32.totalorder %s41, 1
      %p190 = scmp.ne.s32.totalorder %s185, %s187
      %p191 = scmp.eq.s32.totalorder %s41, 0
      %p192 = por %p190, %p191
      %p193 = scmp.ne.s32.totalorder %s185, %s187
      %p194 = scmp.eq.s32.totalorder %s46, 1
      %p195 = por %p193, %p194
      %p196 = scmp.ne.s32.totalorder %s187, %s188
      %p197 = scmp.eq.s32.totalorder %s46, 0
      %p198 = por %p196, %p197
      %p199 = scmp.ne.s32.totalorder %s187, %s188
      %p200 = scmp.eq.s32.totalorder %s47, 1
      %p201 = por %p199, %p200
      %p203 = scmp.ne.s32.totalorder %s188, %s202
      %p204 = scmp.eq.s32.totalorder %s47, 0
      %p205 = por %p203, %p204
      %s207 = sadd.s32 %s206, 1
      %p210 = scmp.eq.s32.totalorder %s41, 1
      %p211 = scmp.ne.s32.totalorder %s206, %s208
      %p212 = scmp.eq.s32.totalorder %s41, 0
      %p213 = por %p211, %p212
      %p214 = scmp.ne.s32.totalorder %s206, %s208
      %p215 = scmp.eq.s32.totalorder %s46, 1
      %p216 = por %p214, %p215
      %p217 = scmp.ne.s32.totalorder %s208, %s209
      %p218 = scmp.eq.s32.totalorder %s46, 0
      %p219 = por %p217, %p218
      %p220 = scmp.ne.s32.totalorder %s208, %s209
      %p221 = scmp.eq.s32.totalorder %s47, 1
      %p222 = por %p220, %p221
      %p224 = scmp.ne.s32.totalorder %s209, %s223
      %p225 = scmp.eq.s32.totalorder %s47, 0
      %p226 = por %p224, %p225
      %s228 = sadd.s32 %s227, 1
      %p231 = scmp.eq.s32.totalorder %s41, 1
      %p232 = scmp.ne.s32.totalorder %s227, %s229
      %p233 = scmp.eq.s32.totalorder %s41, 0
      %p234 = por %p232, %p233
      %p235 = scmp.ne.s32.totalorder %s227, %s229
      %p236 = scmp.eq.s32.totalorder %s46, 1
      %p237 = por %p235, %p236
      %p238 = scmp.ne.s32.totalorder %s229, %s230
      %p239 = scmp.eq.s32.totalorder %s46, 0
      %p240 = por %p238, %p239
      %p241 = scmp.ne.s32.totalorder %s229, %s230
      %p242 = scmp.eq.s32.totalorder %s47, 1
      %p243 = por %p241, %p242
      %p245 = scmp.ne.s32.totalorder %s230, %s244
      %p246 = scmp.eq.s32.totalorder %s47, 0
      %p247 = por %p245, %p246
      %s249 = sadd.s32 %s248, 1
      %p252 = scmp.eq.s32.totalorder %s41, 1
      %p253 = scmp.ne.s32.totalorder %s248, %s250
      %p254 = scmp.eq.s32.totalorder %s41, 0
      %p255 = por %p253, %p254
      %p256 = scmp.ne.s32.totalorder %s248, %s250
      %p257 = scmp.eq.s32.totalorder %s46, 1
      %p258 = por %p256, %p257
      %p259 = scmp.ne.s32.totalorder %s250, %s251
      %p260 = scmp.eq.s32.totalorder %s46, 0
      %p261 = por %p259, %p260
      %p262 = scmp.ne.s32.totalorder %s250, %s251
      %p263 = scmp.eq.s32.totalorder %s47, 1
      %p264 = por %p262, %p263
      %p266 = scmp.ne.s32.totalorder %s251, %s265
      %p267 = scmp.eq.s32.totalorder %s47, 0
      %p268 = por %p266, %p267
      %s270 = sadd.s32 %s269, 1
      %p273 = scmp.eq.s32.totalorder %s41, 1
      %p274 = scmp.ne.s32.totalorder %s269, %s271
      %p275 = scmp.eq.s32.totalorder %s41, 0
      %p276 = por %p274, %p275
      %p277 = scmp.ne.s32.totalorder %s269, %s271
      %p278 = scmp.eq.s32.totalorder %s46, 1
      %p279 = por %p277, %p278
      %p280 = scmp.ne.s32.totalorder %s271, %s272
      %p281 = scmp.eq.s32.totalorder %s46, 0
      %p282 = por %p280, %p281
      %p283 = scmp.ne.s32.totalorder %s271, %s272
      %p284 = scmp.eq.s32.totalorder %s47, 1
      %p285 = por %p283, %p284
      %p287 = scmp.ne.s32.totalorder %s272, %s286
      %p288 = scmp.eq.s32.totalorder %s47, 0
      %p289 = por %p287, %p288
      %s291 = sadd.s32 %s290, 1
      %p294 = scmp.eq.s32.totalorder %s41, 1
      %p295 = scmp.ne.s32.totalorder %s290, %s292
      %p296 = scmp.eq.s32.totalorder %s41, 0
      %p297 = por %p295, %p296
      %p298 = scmp.ne.s32.totalorder %s290, %s292
      %p299 = scmp.eq.s32.totalorder %s46, 1
      %p300 = por %p298, %p299
      %p301 = scmp.ne.s32.totalorder %s292, %s293
      %p302 = scmp.eq.s32.totalorder %s46, 0
      %p303 = por %p301, %p302
      %p304 = scmp.ne.s32.totalorder %s292, %s293
      %p305 = scmp.eq.s32.totalorder %s47, 1
      %p306 = por %p304, %p305
      %p308 = scmp.ne.s32.totalorder %s293, %s307
      %p309 = scmp.eq.s32.totalorder %s47, 0
      %p310 = por %p308, %p309
      %s312 = sadd.s32 %s311, 1
      %p315 = scmp.eq.s32.totalorder %s41, 1
      %p316 = scmp.ne.s32.totalorder %s311, %s313
      %p317 = scmp.eq.s32.totalorder %s41, 0
      %p318 = por %p316, %p317
      %p319 = scmp.ne.s32.totalorder %s311, %s313
      %p320 = scmp.eq.s32.totalorder %s46, 1
      %p321 = por %p319, %p320
      %p322 = scmp.ne.s32.totalorder %s313, %s314
      %p323 = scmp.eq.s32.totalorder %s46, 0
      %p324 = por %p322, %p323
      %p325 = scmp.ne.s32.totalorder %s313, %s314
      %p326 = scmp.eq.s32.totalorder %s47, 1
      %p327 = por %p325, %p326
      %p329 = scmp.ne.s32.totalorder %s314, %s328
      %p330 = scmp.eq.s32.totalorder %s47, 0
      %p331 = por %p329, %p330
      %s333 = sadd.s32 %s332, 1
      %p336 = scmp.eq.s32.totalorder %s41, 1
      %p337 = scmp.ne.s32.totalorder %s332, %s334
      %p338 = scmp.eq.s32.totalorder %s41, 0
      %p339 = por %p337, %p338
      %p340 = scmp.ne.s32.totalorder %s332, %s334
      %p341 = scmp.eq.s32.totalorder %s46, 1
      %p342 = por %p340, %p341
      %p343 = scmp.ne.s32.totalorder %s334, %s335
      %p344 = scmp.eq.s32.totalorder %s46, 0
      %p345 = por %p343, %p344
      %p346 = scmp.ne.s32.totalorder %s334, %s335
      %p347 = scmp.eq.s32.totalorder %s47, 1
      %p348 = por %p346, %p347
      %p350 = scmp.ne.s32.totalorder %s335, %s349
      %p351 = scmp.eq.s32.totalorder %s47, 0
      %p352 = por %p350, %p351
      %s354 = sadd.s32 %s353, 1
      %p357 = scmp.eq.s32.totalorder %s41, 1
      %p358 = scmp.ne.s32.totalorder %s353, %s355
      %p359 = scmp.eq.s32.totalorder %s41, 0
      %p360 = por %p358, %p359
      %p361 = scmp.ne.s32.totalorder %s353, %s355
      %p362 = scmp.eq.s32.totalorder %s46, 1
      %p363 = por %p361, %p362
      %p364 = scmp.ne.s32.totalorder %s355, %s356
      %p365 = scmp.eq.s32.totalorder %s46, 0
      %p366 = por %p364, %p365
      %p367 = scmp.ne.s32.totalorder %s355, %s356
      %p368 = scmp.eq.s32.totalorder %s47, 1
      %p369 = por %p367, %p368
      %p371 = scmp.ne.s32.totalorder %s356, %s370
      %p372 = scmp.eq.s32.totalorder %s47, 0
      %p373 = por %p371, %p372
      %s375 = sadd.s32 %s374, 1
      %p378 = scmp.eq.s32.totalorder %s41, 1
      %p379 = scmp.ne.s32.totalorder %s374, %s376
      %p380 = scmp.eq.s32.totalorder %s41, 0
      %p381 = por %p379, %p380
      %p382 = scmp.ne.s32.totalorder %s374, %s376
      %p383 = scmp.eq.s32.totalorder %s46, 1
      %p384 = por %p382, %p383
      %p385 = scmp.ne.s32.totalorder %s376, %s377
      %p386 = scmp.eq.s32.totalorder %s46, 0
      %p387 = por %p385, %p386
      %p388 = scmp.ne.s32.totalorder %s376, %s377
      %p389 = scmp.eq.s32.totalorder %s47, 1
      %p390 = por %p388, %p389
      %p392 = scmp.ne.s32.totalorder %s377, %s391
      %p393 = scmp.eq.s32.totalorder %s47, 0
      %p394 = por %p392, %p393
      %s396 = sadd.s32 %s395, 1
      %p399 = scmp.eq.s32.totalorder %s41, 1
      %p400 = scmp.ne.s32.totalorder %s395, %s397
      %p401 = scmp.eq.s32.totalorder %s41, 0
      %p402 = por %p400, %p401
      %p403 = scmp.ne.s32.totalorder %s395, %s397
      %p404 = scmp.eq.s32.totalorder %s46, 1
      %p405 = por %p403, %p404
      %p406 = scmp.ne.s32.totalorder %s397, %s398
      %p407 = scmp.eq.s32.totalorder %s46, 0
      %p408 = por %p406, %p407
      %p409 = scmp.ne.s32.totalorder %s397, %s398
      %p410 = scmp.eq.s32.totalorder %s47, 1
      %p411 = por %p409, %p410
      %p413 = scmp.ne.s32.totalorder %s398, %s412
      %p414 = scmp.eq.s32.totalorder %s47, 0
      %p415 = por %p413, %p414
      %s417 = sadd.s32 %s416, 1
      %p420 = scmp.eq.s32.totalorder %s41, 1
      %p421 = scmp.ne.s32.totalorder %s416, %s418
      %p422 = scmp.eq.s32.totalorder %s41, 0
      %p423 = por %p421, %p422
      %p424 = scmp.ne.s32.totalorder %s416, %s418
      %p425 = scmp.eq.s32.totalorder %s46, 1
      %p426 = por %p424, %p425
      %p427 = scmp.ne.s32.totalorder %s418, %s419
      %p428 = scmp.eq.s32.totalorder %s46, 0
      %p429 = por %p427, %p428
      %p430 = scmp.ne.s32.totalorder %s418, %s419
      %p431 = scmp.eq.s32.totalorder %s47, 1
      %p432 = por %p430, %p431
      %p434 = scmp.ne.s32.totalorder %s419, %s433
      %p435 = scmp.eq.s32.totalorder %s47, 0
      %p436 = por %p434, %p435
      %s438 = sadd.s32 %s437, 1
      %p441 = scmp.eq.s32.totalorder %s41, 1
      %p442 = scmp.ne.s32.totalorder %s437, %s439
      %p443 = scmp.eq.s32.totalorder %s41, 0
      %p444 = por %p442, %p443
      %p445 = scmp.ne.s32.totalorder %s437, %s439
      %p446 = scmp.eq.s32.totalorder %s46, 1
      %p447 = por %p445, %p446
      %p448 = scmp.ne.s32.totalorder %s439, %s440
      %p449 = scmp.eq.s32.totalorder %s46, 0
      %p450 = por %p448, %p449
      %p451 = scmp.ne.s32.totalorder %s439, %s440
      %p452 = scmp.eq.s32.totalorder %s47, 1
      %p453 = por %p451, %p452
      %p455 = scmp.ne.s32.totalorder %s440, %s454
      %p456 = scmp.eq.s32.totalorder %s47, 0
      %p457 = por %p455, %p456
      %s459 = sadd.s32 %s458, 1
      %p462 = scmp.eq.s32.totalorder %s41, 1
      %p463 = scmp.ne.s32.totalorder %s458, %s460
      %p464 = scmp.eq.s32.totalorder %s41, 0
      %p465 = por %p463, %p464
      %p466 = scmp.ne.s32.totalorder %s458, %s460
      %p467 = scmp.eq.s32.totalorder %s46, 1
      %p468 = por %p466, %p467
      %p469 = scmp.ne.s32.totalorder %s460, %s461
      %p470 = scmp.eq.s32.totalorder %s46, 0
      %p471 = por %p469, %p470
      %p472 = scmp.ne.s32.totalorder %s460, %s461
      %p473 = scmp.eq.s32.totalorder %s47, 1
      %p474 = por %p472, %p473
      %p476 = scmp.ne.s32.totalorder %s461, %s475
      %p477 = scmp.eq.s32.totalorder %s47, 0
      %p478 = por %p476, %p477
      %s480 = sadd.s32 %s479, 1
      %p483 = scmp.eq.s32.totalorder %s41, 1
      %p484 = scmp.ne.s32.totalorder %s479, %s481
      %p485 = scmp.eq.s32.totalorder %s41, 0
      %p486 = por %p484, %p485
      %p487 = scmp.ne.s32.totalorder %s479, %s481
      %p488 = scmp.eq.s32.totalorder %s46, 1
      %p489 = por %p487, %p488
      %p490 = scmp.ne.s32.totalorder %s481, %s482
      %p491 = scmp.eq.s32.totalorder %s46, 0
      %p492 = por %p490, %p491
      %p493 = scmp.ne.s32.totalorder %s481, %s482
      %p494 = scmp.eq.s32.totalorder %s47, 1
      %p495 = por %p493, %p494
      %p497 = scmp.ne.s32.totalorder %s482, %s496
      %p498 = scmp.eq.s32.totalorder %s47, 0
      %p499 = por %p497, %p498
      %s501 = sadd.s32 %s500, 1
      %p504 = scmp.eq.s32.totalorder %s41, 1
      %p505 = scmp.ne.s32.totalorder %s500, %s502
      %p506 = scmp.eq.s32.totalorder %s41, 0
      %p507 = por %p505, %p506
      %p508 = scmp.ne.s32.totalorder %s500, %s502
      %p509 = scmp.eq.s32.totalorder %s46, 1
      %p510 = por %p508, %p509
      %p511 = scmp.ne.s32.totalorder %s502, %s503
      %p512 = scmp.eq.s32.totalorder %s46, 0
      %p513 = por %p511, %p512
      %p514 = scmp.ne.s32.totalorder %s502, %s503
      %p515 = scmp.eq.s32.totalorder %s47, 1
      %p516 = por %p514, %p515
      %p518 = scmp.ne.s32.totalorder %s503, %s517
      %p519 = scmp.eq.s32.totalorder %s47, 0
      %p520 = por %p518, %p519
      %s521 = ssub.s32 %s41, %s48
      %p522 = scmp.eq.s32.totalorder %s521, 0
      %s524 = sadd.s32 %s523, 1
      %s525 = scalar_select %p522, %s523, %s524
      %p528 = pneg %p522
      %p529 = scmp.eq.s32.totalorder %s41, 1
      %p530 = por %p528, %p529
      %p531 = scmp.ne.s32.totalorder %s523, %s526
      %p532 = scmp.eq.s32.totalorder %s41, 0
      %p533 = por %p531, %p532
      %p534 = scmp.ne.s32.totalorder %s523, %s526
      %p535 = scmp.eq.s32.totalorder %s46, 1
      %p536 = por %p534, %p535
      %p537 = scmp.ne.s32.totalorder %s526, %s527
      %p538 = scmp.eq.s32.totalorder %s46, 0
      %p539 = por %p537, %p538
      %p540 = scmp.ne.s32.totalorder %s526, %s527
      %p541 = scmp.eq.s32.totalorder %s47, 1
      %p542 = por %p540, %p541
      %p544 = scmp.ne.s32.totalorder %s527, %s543
      %p545 = scmp.eq.s32.totalorder %s47, 0
      %p546 = por %p544, %p545
      %p547 = scmp.le.s32.totalorder 1, %s41
      %p548 = scmp.lt.s32.totalorder %s41, 3
      %p549 = pnand %p547, %p548
      %p550 = pneg %p549
      // Predicated region
      $region9: #{tpu_custom_call.1} parent=5 // pred_check
        _
      $region10: #{tpu_custom_call.1} parent=5 // pred_check_branch
        %552 = sbr.rel (%p549) target = $region12
      $region11: #{tpu_custom_call.1} parent=5 // pred_region
        %s553 = ssub.s32 %s41, 1
        // Predicated region
        $region13: #{tpu_custom_call.1} parent=11 // pred_check
          %p554 = pneg %p114
        $region14: #{tpu_custom_call.1} parent=11 // pred_check_branch
          %556 = sbr.rel (%p554) target = $region16
        $region15: #{tpu_custom_call.1} parent=11 // pred_region
          _
        $region16: #{tpu_custom_call.1} parent=11 // pred_fallthru
          _
        // Predicated region
        $region17: #{tpu_custom_call.1} parent=11 // pred_check
          %p557 = pneg %p135
        $region18: #{tpu_custom_call.1} parent=11 // pred_check_branch
          %559 = sbr.rel (%p557) target = $region20
        $region19: #{tpu_custom_call.1} parent=11 // pred_region
          %s561 = ssub.s32 16, 16
          %562 = vsyncadd [#allocation6], %s561
          %s564 = sshll.u32 [#allocation5], 4
          %s565 = int_to_ptr.vmem [resolvable:$true] %s564
          %567 = dma.hbm_to_vmem [thread:$0]  %s3, 16, %s565, [#allocation6]
        $region20: #{tpu_custom_call.1} parent=11 // pred_fallthru
          _
        // Predicated region
        $region21: #{tpu_custom_call.1} parent=11 // pred_check
          %p568 = pneg %p156
        $region22: #{tpu_custom_call.1} parent=11 // pred_check_branch
          %570 = sbr.rel (%p568) target = $region24
        $region23: #{tpu_custom_call.1} parent=11 // pred_region
          _
        $region24: #{tpu_custom_call.1} parent=11 // pred_fallthru
          _
        // Predicated region
        $region25: #{tpu_custom_call.1} parent=11 // pred_check
          %p571 = pneg %p177
        $region26: #{tpu_custom_call.1} parent=11 // pred_check_branch
          %573 = sbr.rel (%p571) target = $region28
        $region27: #{tpu_custom_call.1} parent=11 // pred_region
          %s575 = ssub.s32 16, 16
          %576 = vsyncadd [#allocation6], %s575
          %s578 = sshll.u32 [#allocation7], 4
          %s579 = int_to_ptr.vmem [resolvable:$true] %s578
          %581 = dma.hbm_to_vmem [thread:$0]  %s5, 16, %s579, [#allocation6]
        $region28: #{tpu_custom_call.1} parent=11 // pred_fallthru
          _
        // Predicated region
        $region29: #{tpu_custom_call.1} parent=11 // pred_check
          %p582 = pneg %p198
        $region30: #{tpu_custom_call.1} parent=11 // pred_check_branch
          %584 = sbr.rel (%p582) target = $region32
        $region31: #{tpu_custom_call.1} parent=11 // pred_region
          %s586 = ssub.s32 16, 16
          %587 = vsyncadd [#allocation9], %s586
          %s589 = sshll.u32 [#allocation8], 4
          %s590 = int_to_ptr.vmem [resolvable:$true] %s589
          %592 = dma.hbm_to_vmem [thread:$0]  %s6, 16, %s590, [#allocation9]
        $region32: #{tpu_custom_call.1} parent=11 // pred_fallthru
          _
        // Predicated region
        $region33: #{tpu_custom_call.1} parent=11 // pred_check
          %p593 = pneg %p219
        $region34: #{tpu_custom_call.1} parent=11 // pred_check_branch
          %595 = sbr.rel (%p593) target = $region36
        $region35: #{tpu_custom_call.1} parent=11 // pred_region
          %s597 = ssub.s32 16, 16
          %598 = vsyncadd [#allocation9], %s597
          %s600 = sshll.u32 [#allocation10], 4
          %s601 = int_to_ptr.vmem [resolvable:$true] %s600
          %603 = dma.hbm_to_vmem [thread:$0]  %s7, 16, %s601, [#allocation9]
        $region36: #{tpu_custom_call.1} parent=11 // pred_fallthru
          _
        // Predicated region
        $region37: #{tpu_custom_call.1} parent=11 // pred_check
          %p604 = pneg %p240
        $region38: #{tpu_custom_call.1} parent=11 // pred_check_branch
          %606 = sbr.rel (%p604) target = $region40
        $region39: #{tpu_custom_call.1} parent=11 // pred_region
          %s608 = ssub.s32 512, 512
          %609 = vsyncadd [#allocation12], %s608
          %s610 = sshll.u32 [#allocation11], 4
          %s611 = int_to_ptr.vmem [resolvable:$true] %s610
          %616 = dma.hbm_to_vmem [thread:$0]  %s8, 512, %s611, [#allocation12], 128, 128, 8
        $region40: #{tpu_custom_call.1} parent=11 // pred_fallthru
          _
        // Predicated region
        $region41: #{tpu_custom_call.1} parent=11 // pred_check
          %p617 = pneg %p261
        $region42: #{tpu_custom_call.1} parent=11 // pred_check_branch
          %619 = sbr.rel (%p617) target = $region44
        $region43: #{tpu_custom_call.1} parent=11 // pred_region
          %s621 = ssub.s32 16, 16
          %622 = vsyncadd [#allocation12], %s621
          %s624 = sshll.u32 [#allocation13], 4
          %s625 = int_to_ptr.vmem [resolvable:$true] %s624
          %627 = dma.hbm_to_vmem [thread:$0]  %s9, 16, %s625, [#allocation12]
        $region44: #{tpu_custom_call.1} parent=11 // pred_fallthru
          _
        // Predicated region
        $region45: #{tpu_custom_call.1} parent=11 // pred_check
          %p628 = pneg %p282
        $region46: #{tpu_custom_call.1} parent=11 // pred_check_branch
          %630 = sbr.rel (%p628) target = $region48
        $region47: #{tpu_custom_call.1} parent=11 // pred_region
          _
        $region48: #{tpu_custom_call.1} parent=11 // pred_fallthru
          _
        // Predicated region
        $region49: #{tpu_custom_call.1} parent=11 // pred_check
          %p631 = pneg %p303
        $region50: #{tpu_custom_call.1} parent=11 // pred_check_branch
          %633 = sbr.rel (%p631) target = $region52
        $region51: #{tpu_custom_call.1} parent=11 // pred_region
          %s635 = ssub.s32 16, 16
          %636 = vsyncadd [#allocation15], %s635
          %s638 = sshll.u32 [#allocation14], 4
          %s639 = int_to_ptr.vmem [resolvable:$true] %s638
          %641 = dma.hbm_to_vmem [thread:$0]  %s11, 16, %s639, [#allocation15]
        $region52: #{tpu_custom_call.1} parent=11 // pred_fallthru
          _
        // Predicated region
        $region53: #{tpu_custom_call.1} parent=11 // pred_check
          %p642 = pneg %p324
        $region54: #{tpu_custom_call.1} parent=11 // pred_check_branch
          %644 = sbr.rel (%p642) target = $region56
        $region55: #{tpu_custom_call.1} parent=11 // pred_region
          %s646 = ssub.s32 512, 512
          %647 = vsyncadd [#allocation15], %s646
          %s648 = sshll.u32 [#allocation16], 4
          %s649 = int_to_ptr.vmem [resolvable:$true] %s648
          %654 = dma.hbm_to_vmem [thread:$0]  %s12, 512, %s649, [#allocation15], 128, 128, 8
        $region56: #{tpu_custom_call.1} parent=11 // pred_fallthru
          _
        // Predicated region
        $region57: #{tpu_custom_call.1} parent=11 // pred_check
          %p655 = pneg %p345
        $region58: #{tpu_custom_call.1} parent=11 // pred_check_branch
          %657 = sbr.rel (%p655) target = $region60
        $region59: #{tpu_custom_call.1} parent=11 // pred_region
          %s659 = ssub.s32 16, 16
          %660 = vsyncadd [#allocation18], %s659
          %s662 = sshll.u32 [#allocation17], 4
          %s663 = int_to_ptr.vmem [resolvable:$true] %s662
          %665 = dma.hbm_to_vmem [thread:$0]  %s13, 16, %s663, [#allocation18]
        $region60: #{tpu_custom_call.1} parent=11 // pred_fallthru
          _
        // Predicated region
        $region61: #{tpu_custom_call.1} parent=11 // pred_check
          %p666 = pneg %p366
        $region62: #{tpu_custom_call.1} parent=11 // pred_check_branch
          %668 = sbr.rel (%p666) target = $region64
        $region63: #{tpu_custom_call.1} parent=11 // pred_region
          %s670 = ssub.s32 16, 16
          %671 = vsyncadd [#allocation18], %s670
          %s673 = sshll.u32 [#allocation19], 4
          %s674 = int_to_ptr.vmem [resolvable:$true] %s673
          %676 = dma.hbm_to_vmem [thread:$0]  %s14, 16, %s674, [#allocation18]
        $region64: #{tpu_custom_call.1} parent=11 // pred_fallthru
          _
        // Predicated region
        $region65: #{tpu_custom_call.1} parent=11 // pred_check
          %p677 = pneg %p387
        $region66: #{tpu_custom_call.1} parent=11 // pred_check_branch
          %679 = sbr.rel (%p677) target = $region68
        $region67: #{tpu_custom_call.1} parent=11 // pred_region
          %s681 = ssub.s32 16, 16
          %682 = vsyncadd [#allocation21], %s681
          %s684 = sshll.u32 [#allocation20], 4
          %s685 = int_to_ptr.vmem [resolvable:$true] %s684
          %687 = dma.hbm_to_vmem [thread:$0]  %s15, 16, %s685, [#allocation21]
        $region68: #{tpu_custom_call.1} parent=11 // pred_fallthru
          _
        // Predicated region
        $region69: #{tpu_custom_call.1} parent=11 // pred_check
          %p688 = pneg %p408
        $region70: #{tpu_custom_call.1} parent=11 // pred_check_branch
          %690 = sbr.rel (%p688) target = $region72
        $region71: #{tpu_custom_call.1} parent=11 // pred_region
          %s692 = ssub.s32 512, 512
          %693 = vsyncadd [#allocation21], %s692
          %s694 = sshll.u32 [#allocation22], 4
          %s695 = int_to_ptr.vmem [resolvable:$true] %s694
          %700 = dma.hbm_to_vmem [thread:$0]  %s16, 512, %s695, [#allocation21], 128, 128, 8
        $region72: #{tpu_custom_call.1} parent=11 // pred_fallthru
          _
        // Predicated region
        $region73: #{tpu_custom_call.1} parent=11 // pred_check
          %p701 = pneg %p429
        $region74: #{tpu_custom_call.1} parent=11 // pred_check_branch
          %703 = sbr.rel (%p701) target = $region76
        $region75: #{tpu_custom_call.1} parent=11 // pred_region
          %s705 = ssub.s32 16, 16
          %706 = vsyncadd [#allocation24], %s705
          %s708 = sshll.u32 [#allocation23], 4
          %s709 = int_to_ptr.vmem [resolvable:$true] %s708
          %711 = dma.hbm_to_vmem [thread:$0]  %s17, 16, %s709, [#allocation24]
        $region76: #{tpu_custom_call.1} parent=11 // pred_fallthru
          _
        // Predicated region
        $region77: #{tpu_custom_call.1} parent=11 // pred_check
          %p712 = pneg %p450
        $region78: #{tpu_custom_call.1} parent=11 // pred_check_branch
          %714 = sbr.rel (%p712) target = $region80
        $region79: #{tpu_custom_call.1} parent=11 // pred_region
          _
        $region80: #{tpu_custom_call.1} parent=11 // pred_fallthru
          _
        // Predicated region
        $region81: #{tpu_custom_call.1} parent=11 // pred_check
          %p715 = pneg %p471
        $region82: #{tpu_custom_call.1} parent=11 // pred_check_branch
          %717 = sbr.rel (%p715) target = $region84
        $region83: #{tpu_custom_call.1} parent=11 // pred_region
          _
        $region84: #{tpu_custom_call.1} parent=11 // pred_fallthru
          _
        // Predicated region
        $region85: #{tpu_custom_call.1} parent=11 // pred_check
          %p718 = pneg %p492
        $region86: #{tpu_custom_call.1} parent=11 // pred_check_branch
          %720 = sbr.rel (%p718) target = $region88
        $region87: #{tpu_custom_call.1} parent=11 // pred_region
          _
        $region88: #{tpu_custom_call.1} parent=11 // pred_fallthru
          _
        // Predicated region
        $region89: #{tpu_custom_call.1} parent=11 // pred_check
          %p721 = pneg %p513
        $region90: #{tpu_custom_call.1} parent=11 // pred_check_branch
          %723 = sbr.rel (%p721) target = $region92
        $region91: #{tpu_custom_call.1} parent=11 // pred_region
          _
        $region92: #{tpu_custom_call.1} parent=11 // pred_fallthru
          _
      $region12: #{tpu_custom_call.1} parent=5 // pred_fallthru
        _
      %p724 = scmp.lt.s32.totalorder %s41, 2
      // Predicated region
      $region93: #{tpu_custom_call.1} parent=5 // pred_check
        %p725 = pneg %p724
      $region94: #{tpu_custom_call.1} parent=5 // pred_check_branch
        %727 = sbr.rel (%p725) target = $region96
      $region95: #{tpu_custom_call.1} parent=5 // pred_region
        // Predicated region
        $region97: #{tpu_custom_call.1} parent=95 // pred_check
          %p728 = pneg %p61
        $region98: #{tpu_custom_call.1} parent=95 // pred_check_branch
          %730 = sbr.rel (%p728) target = $region100
        $region99: #{tpu_custom_call.1} parent=95 // pred_region
          %s731 = sand.u32 %s51, 1
          %s732 = scalar_lea.sflag [#allocation3], %s731
          %s733 = sand.u32 %s51, 1
          %s734 = smul.addr %s733, 8
          %s735 = scalar_lea.vmem [#allocation2], %s734
          %s737 = ssub.s32 128, 128
          %738 = vsyncadd %s732, %s737
          %s739 = smul.addr %s41, 128
          %s740 = scalar_lea.hbm %s0, %s739
          %s742 = sshll.u32 %s735, 4
          %s743 = int_to_ptr.vmem [resolvable:$true] %s742
          %745 = dma.hbm_to_vmem [thread:$0]  %s740, 128, %s743, %s732
        $region100: #{tpu_custom_call.1} parent=95 // pred_fallthru
          _
        // Predicated region
        $region101: #{tpu_custom_call.1} parent=95 // pred_check
          %p746 = pneg %p87
        $region102: #{tpu_custom_call.1} parent=95 // pred_check_branch
          %748 = sbr.rel (%p746) target = $region104
        $region103: #{tpu_custom_call.1} parent=95 // pred_region
          %p749 = scmp.lt.s32.totalorder %s41, 1
          %s750 = scalar_select %p749, %s41, 1
          %s751 = smul.addr %s750, 2
          %s752 = smul.addr %s751, 8
          %s753 = scalar_lea.vmem %s1, %s752
        $region104: #{tpu_custom_call.1} parent=95 // pred_fallthru
          _
      $region96: #{tpu_custom_call.1} parent=5 // pred_fallthru
        _
      %p754 = scmp.le.s32.totalorder 1, %s41
      %p755 = scmp.lt.s32.totalorder %s41, 3
      %p756 = pnand %p754, %p755
      %p757 = pneg %p756
      // Predicated region
      $region105: #{tpu_custom_call.1} parent=5 // pred_check
        _
      $region106: #{tpu_custom_call.1} parent=5 // pred_check_branch
        %759 = sbr.rel (%p756) target = $region108
      $region107: #{tpu_custom_call.1} parent=5 // pred_region
        %s760 = ssub.s32 %s41, 1
        %s761 = sand.u32 %s54, 1
        %s762 = scalar_lea.sflag [#allocation3], %s761
        %s763 = sand.u32 %s54, 1
        %s764 = smul.addr %s763, 8
        %s765 = scalar_lea.vmem [#allocation2], %s764
        // Predicated region
        $region109: #{tpu_custom_call.1} parent=107 // pred_check
          %p766 = pneg %p67
        $region110: #{tpu_custom_call.1} parent=107 // pred_check_branch
          %768 = sbr.rel (%p766) target = $region112
        $region111: #{tpu_custom_call.1} parent=107 // pred_region
          %769 = dma.done %s762, 128
        $region112: #{tpu_custom_call.1} parent=107 // pred_fallthru
          _
        // Predicated region
        $region113: #{tpu_custom_call.1} parent=107 // pred_check
          %p770 = pneg %p135
        $region114: #{tpu_custom_call.1} parent=107 // pred_check_branch
          %772 = sbr.rel (%p770) target = $region116
        $region115: #{tpu_custom_call.1} parent=107 // pred_region
          %773 = dma.done [#allocation6], 16
        $region116: #{tpu_custom_call.1} parent=107 // pred_fallthru
          _
        // Predicated region
        $region117: #{tpu_custom_call.1} parent=107 // pred_check
          %p774 = pneg %p177
        $region118: #{tpu_custom_call.1} parent=107 // pred_check_branch
          %776 = sbr.rel (%p774) target = $region120
        $region119: #{tpu_custom_call.1} parent=107 // pred_region
          %777 = dma.done [#allocation6], 16
        $region120: #{tpu_custom_call.1} parent=107 // pred_fallthru
          _
        // Predicated region
        $region121: #{tpu_custom_call.1} parent=107 // pred_check
          %p778 = pneg %p198
        $region122: #{tpu_custom_call.1} parent=107 // pred_check_branch
          %780 = sbr.rel (%p778) target = $region124
        $region123: #{tpu_custom_call.1} parent=107 // pred_region
          %781 = dma.done [#allocation9], 16
        $region124: #{tpu_custom_call.1} parent=107 // pred_fallthru
          _
        // Predicated region
        $region125: #{tpu_custom_call.1} parent=107 // pred_check
          %p782 = pneg %p219
        $region126: #{tpu_custom_call.1} parent=107 // pred_check_branch
          %784 = sbr.rel (%p782) target = $region128
        $region127: #{tpu_custom_call.1} parent=107 // pred_region
          %785 = dma.done [#allocation9], 16
        $region128: #{tpu_custom_call.1} parent=107 // pred_fallthru
          _
        // Predicated region
        $region129: #{tpu_custom_call.1} parent=107 // pred_check
          %p786 = pneg %p240
        $region130: #{tpu_custom_call.1} parent=107 // pred_check_branch
          %788 = sbr.rel (%p786) target = $region132
        $region131: #{tpu_custom_call.1} parent=107 // pred_region
          %789 = dma.done [#allocation12], 512
        $region132: #{tpu_custom_call.1} parent=107 // pred_fallthru
          _
        // Predicated region
        $region133: #{tpu_custom_call.1} parent=107 // pred_check
          %p790 = pneg %p261
        $region134: #{tpu_custom_call.1} parent=107 // pred_check_branch
          %792 = sbr.rel (%p790) target = $region136
        $region135: #{tpu_custom_call.1} parent=107 // pred_region
          %793 = dma.done [#allocation12], 16
        $region136: #{tpu_custom_call.1} parent=107 // pred_fallthru
          _
        // Predicated region
        $region137: #{tpu_custom_call.1} parent=107 // pred_check
          %p794 = pneg %p303
        $region138: #{tpu_custom_call.1} parent=107 // pred_check_branch
          %796 = sbr.rel (%p794) target = $region140
        $region139: #{tpu_custom_call.1} parent=107 // pred_region
          %797 = dma.done [#allocation15], 16
        $region140: #{tpu_custom_call.1} parent=107 // pred_fallthru
          _
        // Predicated region
        $region141: #{tpu_custom_call.1} parent=107 // pred_check
          %p798 = pneg %p324
        $region142: #{tpu_custom_call.1} parent=107 // pred_check_branch
          %800 = sbr.rel (%p798) target = $region144
        $region143: #{tpu_custom_call.1} parent=107 // pred_region
          %801 = dma.done [#allocation15], 512
        $region144: #{tpu_custom_call.1} parent=107 // pred_fallthru
          _
        // Predicated region
        $region145: #{tpu_custom_call.1} parent=107 // pred_check
          %p802 = pneg %p345
        $region146: #{tpu_custom_call.1} parent=107 // pred_check_branch
          %804 = sbr.rel (%p802) target = $region148
        $region147: #{tpu_custom_call.1} parent=107 // pred_region
          %805 = dma.done [#allocation18], 16
        $region148: #{tpu_custom_call.1} parent=107 // pred_fallthru
          _
        // Predicated region
        $region149: #{tpu_custom_call.1} parent=107 // pred_check
          %p806 = pneg %p366
        $region150: #{tpu_custom_call.1} parent=107 // pred_check_branch
          %808 = sbr.rel (%p806) target = $region152
        $region151: #{tpu_custom_call.1} parent=107 // pred_region
          %809 = dma.done [#allocation18], 16
        $region152: #{tpu_custom_call.1} parent=107 // pred_fallthru
          _
        // Predicated region
        $region153: #{tpu_custom_call.1} parent=107 // pred_check
          %p810 = pneg %p387
        $region154: #{tpu_custom_call.1} parent=107 // pred_check_branch
          %812 = sbr.rel (%p810) target = $region156
        $region155: #{tpu_custom_call.1} parent=107 // pred_region
          %813 = dma.done [#allocation21], 16
        $region156: #{tpu_custom_call.1} parent=107 // pred_fallthru
          _
        // Predicated region
        $region157: #{tpu_custom_call.1} parent=107 // pred_check
          %p814 = pneg %p408
        $region158: #{tpu_custom_call.1} parent=107 // pred_check_branch
          %816 = sbr.rel (%p814) target = $region160
        $region159: #{tpu_custom_call.1} parent=107 // pred_region
          %817 = dma.done [#allocation21], 512
        $region160: #{tpu_custom_call.1} parent=107 // pred_fallthru
          _
        // Predicated region
        $region161: #{tpu_custom_call.1} parent=107 // pred_check
          %p818 = pneg %p429
        $region162: #{tpu_custom_call.1} parent=107 // pred_check_branch
          %820 = sbr.rel (%p818) target = $region164
        $region163: #{tpu_custom_call.1} parent=107 // pred_region
          %821 = dma.done [#allocation24], 16
        $region164: #{tpu_custom_call.1} parent=107 // pred_fallthru
          _
        %s822 = sand.u32 %s54, 1
        %s823 = scalar_lea.sflag [#allocation3], %s822
        %s824 = sand.u32 %s54, 1
        %s825 = smul.addr %s824, 8
        %s826 = scalar_lea.vmem [#allocation2], %s825
        %p827 = pneg %p67
        %p828 = pneg %p64
        %p829 = scmp.lt.s32.totalorder %s46, 1
        %s830 = scalar_select %p829, %s46, 1
        %s831 = smul.addr %s830, 2
        %s832 = smul.addr %s831, 8
        %s833 = scalar_lea.vmem %s1, %s832
        %p834 = pneg %p93
        %p835 = pneg %p90
        %p836 = pneg %p114
        %p837 = pneg %p111
        %p838 = pneg %p135
        %p839 = pneg %p132
        %p840 = pneg %p156
        %p841 = pneg %p153
        %p842 = pneg %p177
        %p843 = pneg %p174
        %p844 = pneg %p198
        %p845 = pneg %p195
        %p846 = pneg %p219
        %p847 = pneg %p216
        %p848 = pneg %p240
        %p849 = pneg %p237
        %p850 = pneg %p261
        %p851 = pneg %p258
        %p852 = pneg %p282
        %p853 = pneg %p279
        %p854 = pneg %p303
        %p855 = pneg %p300
        %p856 = pneg %p324
        %p857 = pneg %p321
        %p858 = pneg %p345
        %p859 = pneg %p342
        %p860 = pneg %p366
        %p861 = pneg %p363
        %p862 = pneg %p387
        %p863 = pneg %p384
        %p864 = pneg %p408
        %p865 = pneg %p405
        %p866 = pneg %p429
        %p867 = pneg %p426
        %p868 = pneg %p450
        %p869 = pneg %p447
        %p870 = pneg %p471
        %p871 = pneg %p468
        %p872 = pneg %p492
        %p873 = pneg %p489
        %p874 = pneg %p513
        %p875 = pneg %p510
        %p876 = pneg %p539
        %p877 = pneg %p536
        %s878 = sand.u32 %s526, 1
        %s879 = scalar_lea.sflag [#allocation4], %s878
        %s880 = sand.u32 %s526, 1
        %s881 = smul.addr %s880, 8
        %s882 = scalar_lea.vmem [#allocation25], %s881
        %p883 = scmp.lt.s32.totalorder %s46, 1
        %s884 = scalar_select %p883, %s46, 1
        %s885 = smul.addr %s884, 2
        %s886 = smul.addr %s885, 8
        %s887 = scalar_lea.vmem %s1, %s886
        %v888 = vld [vmem:[%s765] sm:$0xff]
        %v889 = vld [vmem:[%s887] sm:$0xff]
        %v890 = vld [vmem:[%s887 + $0x8] sm:$0xff]
        %v891 = vlaneseq
        %v892 = vshrl.u32 %v891, 7
        %v893 = vlaneseq
        %v894 = vand.u32 %v893, 127
        %vm895 = vcmp.le.s32.totalorder %v894, %v892
        %v896 = vsel %vm895, 0.0, -1e+30
        %v897 = vld [vmem:[%s2] sm:$0xff]
        %v898 = vld [vmem:[%s2 + $0x8] sm:$0xff]
        %v899 = vld [vmem:[%s2 + $0x10] sm:$0xff]
        %v900 = vld [vmem:[%s2 + $0x18] sm:$0xff]
        %v901 = vld [vmem:[#allocation5] sm:$0x1]
        %v903 = vlaneseq
        %v904 = vshrl.u32 %v903, 7
        %v905 = vsub.s32 0, %v904
        %v906 = vrot.slane %v901, %v905
        %vm908 = vcmask 261120
        %v910 = vsel %vm908, %v888, 0
        %912 = vmatprep.subr.mxu0 0.0
        %913 = vmatpush1.msra.mxu0 %v897
        %914 = vmatprep.subr.mxu0 0.0
        %915 = vmatpush1.msra.mxu0 %v898
        %916 = vmatprep.subr.mxu0 0.0
        %917 = vmatpush1.msra.mxu0 %v899
        %918 = vmatprep.subr.mxu0 0.0
        %919 = vmatpush1.msra.mxu0 %v900
        %920 = vmatprep.subr.mxu0 0.0
        %921 = vmatpush1.msra.mxu0 0.0
        %922 = vmatprep.subr.mxu0 0.0
        %923 = vmatpush1.msra.mxu0 0.0
        %924 = vmatprep.subr.mxu0 0.0
        %925 = vmatpush1.msra.mxu0 0.0
        %926 = vmatprep.subr.mxu0 0.0
        %927 = vmatpush1.msra.mxu0 0.0
        %928 = vmatprep.subr.mxu0 0.0
        %929 = vmatpush1.msra.mxu0 0.0
        %930 = vmatprep.subr.mxu0 0.0
        %931 = vmatpush1.msra.mxu0 0.0
        %932 = vmatprep.subr.mxu0 0.0
        %933 = vmatpush1.msra.mxu0 0.0
        %934 = vmatprep.subr.mxu0 0.0
        %935 = vmatpush1.msra.mxu0 0.0
        %936 = vmatprep.subr.mxu0 0.0
        %937 = vmatpush1.msra.mxu0 0.0
        %938 = vmatprep.subr.mxu0 0.0
        %939 = vmatpush1.msra.mxu0 0.0
        %940 = vmatprep.subr.mxu0 0.0
        %941 = vmatpush1.msra.mxu0 0.0
        %942 = vmatprep.subr.mxu0 0.0
        %943 = vmatpush1.msra.mxu0 0.0
        %944 = vmatprep.subr.mxu0 0.0
        %945 = vmatpush1.msra.mxu0 0.0
        %946 = vmatprep.subr.mxu0 0.0
        %947 = vmatpush1.msra.mxu0 0.0
        %948 = vmatprep.subr.mxu0 0.0
        %949 = vmatpush1.msra.mxu0 0.0
        %950 = vmatprep.subr.mxu0 0.0
        %951 = vmatpush1.msra.mxu0 0.0
        %952 = vmatprep.subr.mxu0 0.0
        %953 = vmatpush1.msra.mxu0 0.0
        %954 = vmatprep.subr.mxu0 0.0
        %955 = vmatpush1.msra.mxu0 0.0
        %956 = vmatprep.subr.mxu0 0.0
        %957 = vmatpush1.msra.mxu0 0.0
        %958 = vmatprep.subr.mxu0 0.0
        %959 = vmatpush1.msra.mxu0 0.0
        %960 = vmatprep.subr.mxu0 0.0
        %961 = vmatpush1.msra.mxu0 0.0
        %962 = vmatprep.subr.mxu0 0.0
        %963 = vmatpush1.msra.mxu0 0.0
        %964 = vmatprep.subr.mxu0 0.0
        %965 = vmatpush1.msra.mxu0 0.0
        %966 = vmatprep.subr.mxu0 0.0
        %967 = vmatpush1.msra.mxu0 0.0
        %968 = vmatprep.subr.mxu0 0.0
        %969 = vmatpush1.msra.mxu0 0.0
        %970 = vmatprep.subr.mxu0 0.0
        %971 = vmatpush1.msra.mxu0 0.0
        %972 = vmatprep.subr.mxu0 0.0
        %973 = vmatpush1.msra.mxu0 0.0
        %974 = vmatprep.subr.mxu0 0.0
        %975 = vmatpush1.msra.mxu0 0.0
        %976 = vmatprep.mubr.f32.mxu0 0.0
        %977 = vmatmul.mubr.f32.gmra.mrb[0].mxu0 %v910
        %v978 = vpop.f32.mrb[0].mxu0
        %v979 = vadd.f32 %v906, %v978
        %v980 = vpop.f32.mrb[0].mxu0
        %981 = vdwg.mxu0
        %v982 = vld [vmem:[%s4] sm:$0xff]
        %v983 = vld [vmem:[%s4 + $0x8] sm:$0xff]
        %v984 = vld [vmem:[%s4 + $0x10] sm:$0xff]
        %v985 = vld [vmem:[%s4 + $0x18] sm:$0xff]
        %v986 = vld [vmem:[#allocation7] sm:$0x1]
        %988 = vrot.lane.b32.xlu0 %v979, 120
        %v989 = vpop.permute.xlu0 %988
        %990 = vrot.lane.b32.xlu0 %v979, 112
        %v991 = vpop.permute.xlu0 %990
        %992 = vrot.lane.b32.xlu0 %v979, 104
        %v993 = vpop.permute.xlu0 %992
        %994 = vrot.lane.b32.xlu0 %v979, 96
        %v995 = vpop.permute.xlu0 %994
        %vm996 = vcmask 64512
        %v997 = vsel %vm996, %v979, 0
        %v999 = vsel %vm996, %v995, 0
        %1001 = vmatprep.subr.mxu0 0.0
        %1002 = vmatpush1.xpose.msra.mxu0 %v999
        %1003 = vmatprep.subr.mxu0 0.0
        %1004 = vmatpush1.xpose.msra.mxu0 0.0
        %1005 = vmatprep.subr.mxu0 0.0
        %1006 = vmatpush1.xpose.msra.mxu0 0.0
        %1007 = vmatprep.subr.mxu0 0.0
        %1008 = vmatpush1.xpose.msra.mxu0 0.0
        %1009 = vmatprep.subr.mxu0 0.0
        %1010 = vmatpush1.xpose.msra.mxu0 0.0
        %1011 = vmatprep.subr.mxu0 0.0
        %1012 = vmatpush1.xpose.msra.mxu0 0.0
        %1013 = vmatprep.subr.mxu0 0.0
        %1014 = vmatpush1.xpose.msra.mxu0 0.0
        %1015 = vmatprep.subr.mxu0 0.0
        %1016 = vmatpush1.xpose.msra.mxu0 0.0
        %1017 = vmatprep.subr.mxu0 0.0
        %1018 = vmatpush1.xpose.msra.mxu0 0.0
        %1019 = vmatprep.subr.mxu0 0.0
        %1020 = vmatpush1.xpose.msra.mxu0 0.0
        %1021 = vmatprep.subr.mxu0 0.0
        %1022 = vmatpush1.xpose.msra.mxu0 0.0
        %1023 = vmatprep.subr.mxu0 0.0
        %1024 = vmatpush1.xpose.msra.mxu0 0.0
        %1025 = vmatprep.subr.mxu0 0.0
        %1026 = vmatpush1.xpose.msra.mxu0 0.0
        %1027 = vmatprep.subr.mxu0 0.0
        %1028 = vmatpush1.xpose.msra.mxu0 0.0
        %1029 = vmatprep.subr.mxu0 0.0
        %1030 = vmatpush1.xpose.msra.mxu0 0.0
        %1031 = vmatprep.subr.mxu0 0.0
        %1032 = vmatpush1.xpose.msra.mxu0 0.0
        %1033 = vmatprep.subr.mxu0 0.0
        %1034 = vmatpush1.xpose.msra.mxu0 0.0
        %1035 = vmatprep.subr.mxu0 0.0
        %1036 = vmatpush1.xpose.msra.mxu0 0.0
        %1037 = vmatprep.subr.mxu0 0.0
        %1038 = vmatpush1.xpose.msra.mxu0 0.0
        %1039 = vmatprep.subr.mxu0 0.0
        %1040 = vmatpush1.xpose.msra.mxu0 0.0
        %1041 = vmatprep.subr.mxu0 0.0
        %1042 = vmatpush1.xpose.msra.mxu0 0.0
        %1043 = vmatprep.subr.mxu0 0.0
        %1044 = vmatpush1.xpose.msra.mxu0 0.0
        %1045 = vmatprep.subr.mxu0 0.0
        %1046 = vmatpush1.xpose.msra.mxu0 0.0
        %1047 = vmatprep.subr.mxu0 0.0
        %1048 = vmatpush1.xpose.msra.mxu0 0.0
        %1049 = vmatprep.subr.mxu0 0.0
        %1050 = vmatpush1.xpose.msra.mxu0 0.0
        %1051 = vmatprep.subr.mxu0 0.0
        %1052 = vmatpush1.xpose.msra.mxu0 0.0
        %1053 = vmatprep.subr.mxu0 0.0
        %1054 = vmatpush1.xpose.msra.mxu0 0.0
        %1055 = vmatprep.subr.mxu0 0.0
        %1056 = vmatpush1.xpose.msra.mxu0 0.0
        %1057 = vmatprep.subr.mxu0 0.0
        %1058 = vmatpush1.xpose.msra.mxu0 0.0
        %1059 = vmatprep.subr.mxu0 0.0
        %1060 = vmatpush1.xpose.msra.mxu0 0.0
        %1061 = vmatprep.subr.mxu0 0.0
        %1062 = vmatpush1.xpose.msra.mxu0 0.0
        %1063 = vmatprep.subr.mxu0 0.0
        %1064 = vmatpush1.xpose.msra.mxu0 0.0
        %1065 = vmatprep.mubr.f32.mxu0 0.0
        %1066 = vmatmul.mubr.f32.gmra.mrb[0].mxu0 %v997
        %v1067 = vpop.f32.mrb[0].mxu0
        %v1068 = vadd.f32 %v896, %v1067
        %v1069 = vpop.f32.mrb[0].mxu0
        %1070 = vdwg.mxu0
        %1071 = vrot.lane.b32.xlu0 %v989, 96
        %v1072 = vpop.permute.xlu0 %1071
        %v1073 = vsel %vm996, %v989, 0
        %v1075 = vsel %vm996, %v1072, 0
        %1077 = vmatprep.subr.mxu0 0.0
        %1078 = vmatpush1.xpose.msra.mxu0 %v1075
        %1079 = vmatprep.subr.mxu0 0.0
        %1080 = vmatpush1.xpose.msra.mxu0 0.0
        %1081 = vmatprep.subr.mxu0 0.0
        %1082 = vmatpush1.xpose.msra.mxu0 0.0
        %1083 = vmatprep.subr.mxu0 0.0
        %1084 = vmatpush1.xpose.msra.mxu0 0.0
        %1085 = vmatprep.subr.mxu0 0.0
        %1086 = vmatpush1.xpose.msra.mxu0 0.0
        %1087 = vmatprep.subr.mxu0 0.0
        %1088 = vmatpush1.xpose.msra.mxu0 0.0
        %1089 = vmatprep.subr.mxu0 0.0
        %1090 = vmatpush1.xpose.msra.mxu0 0.0
        %1091 = vmatprep.subr.mxu0 0.0
        %1092 = vmatpush1.xpose.msra.mxu0 0.0
        %1093 = vmatprep.subr.mxu0 0.0
        %1094 = vmatpush1.xpose.msra.mxu0 0.0
        %1095 = vmatprep.subr.mxu0 0.0
        %1096 = vmatpush1.xpose.msra.mxu0 0.0
        %1097 = vmatprep.subr.mxu0 0.0
        %1098 = vmatpush1.xpose.msra.mxu0 0.0
        %1099 = vmatprep.subr.mxu0 0.0
        %1100 = vmatpush1.xpose.msra.mxu0 0.0
        %1101 = vmatprep.subr.mxu0 0.0
        %1102 = vmatpush1.xpose.msra.mxu0 0.0
        %1103 = vmatprep.subr.mxu0 0.0
        %1104 = vmatpush1.xpose.msra.mxu0 0.0
        %1105 = vmatprep.subr.mxu0 0.0
        %1106 = vmatpush1.xpose.msra.mxu0 0.0
        %1107 = vmatprep.subr.mxu0 0.0
        %1108 = vmatpush1.xpose.msra.mxu0 0.0
        %1109 = vmatprep.subr.mxu0 0.0
        %1110 = vmatpush1.xpose.msra.mxu0 0.0
        %1111 = vmatprep.subr.mxu0 0.0
        %1112 = vmatpush1.xpose.msra.mxu0 0.0
        %1113 = vmatprep.subr.mxu0 0.0
        %1114 = vmatpush1.xpose.msra.mxu0 0.0
        %1115 = vmatprep.subr.mxu0 0.0
        %1116 = vmatpush1.xpose.msra.mxu0 0.0
        %1117 = vmatprep.subr.mxu0 0.0
        %1118 = vmatpush1.xpose.msra.mxu0 0.0
        %1119 = vmatprep.subr.mxu0 0.0
        %1120 = vmatpush1.xpose.msra.mxu0 0.0
        %1121 = vmatprep.subr.mxu0 0.0
        %1122 = vmatpush1.xpose.msra.mxu0 0.0
        %1123 = vmatprep.subr.mxu0 0.0
        %1124 = vmatpush1.xpose.msra.mxu0 0.0
        %1125 = vmatprep.subr.mxu0 0.0
        %1126 = vmatpush1.xpose.msra.mxu0 0.0
        %1127 = vmatprep.subr.mxu0 0.0
        %1128 = vmatpush1.xpose.msra.mxu0 0.0
        %1129 = vmatprep.subr.mxu0 0.0
        %1130 = vmatpush1.xpose.msra.mxu0 0.0
        %1131 = vmatprep.subr.mxu0 0.0
        %1132 = vmatpush1.xpose.msra.mxu0 0.0
        %1133 = vmatprep.subr.mxu0 0.0
        %1134 = vmatpush1.xpose.msra.mxu0 0.0
        %1135 = vmatprep.subr.mxu0 0.0
        %1136 = vmatpush1.xpose.msra.mxu0 0.0
        %1137 = vmatprep.subr.mxu0 0.0
        %1138 = vmatpush1.xpose.msra.mxu0 0.0
        %1139 = vmatprep.subr.mxu0 0.0
        %1140 = vmatpush1.xpose.msra.mxu0 0.0
        %1141 = vmatprep.mubr.f32.mxu0 0.0
        %1142 = vmatmul.mubr.f32.gmra.mrb[0].mxu0 %v1073
        %v1143 = vpop.f32.mrb[0].mxu0
        %v1144 = vadd.f32 %v896, %v1143
        %v1145 = vpop.f32.mrb[0].mxu0
        %1146 = vdwg.mxu0
        %1147 = vrot.lane.b32.xlu0 %v991, 96
        %v1148 = vpop.permute.xlu0 %1147
        %v1149 = vsel %vm996, %v991, 0
        %v1151 = vsel %vm996, %v1148, 0
        %1153 = vmatprep.subr.mxu0 0.0
        %1154 = vmatpush1.xpose.msra.mxu0 %v1151
        %1155 = vmatprep.subr.mxu0 0.0
        %1156 = vmatpush1.xpose.msra.mxu0 0.0
        %1157 = vmatprep.subr.mxu0 0.0
        %1158 = vmatpush1.xpose.msra.mxu0 0.0
        %1159 = vmatprep.subr.mxu0 0.0
        %1160 = vmatpush1.xpose.msra.mxu0 0.0
        %1161 = vmatprep.subr.mxu0 0.0
        %1162 = vmatpush1.xpose.msra.mxu0 0.0
        %1163 = vmatprep.subr.mxu0 0.0
        %1164 = vmatpush1.xpose.msra.mxu0 0.0
        %1165 = vmatprep.subr.mxu0 0.0
        %1166 = vmatpush1.xpose.msra.mxu0 0.0
        %1167 = vmatprep.subr.mxu0 0.0
        %1168 = vmatpush1.xpose.msra.mxu0 0.0
        %1169 = vmatprep.subr.mxu0 0.0
        %1170 = vmatpush1.xpose.msra.mxu0 0.0
        %1171 = vmatprep.subr.mxu0 0.0
        %1172 = vmatpush1.xpose.msra.mxu0 0.0
        %1173 = vmatprep.subr.mxu0 0.0
        %1174 = vmatpush1.xpose.msra.mxu0 0.0
        %1175 = vmatprep.subr.mxu0 0.0
        %1176 = vmatpush1.xpose.msra.mxu0 0.0
        %1177 = vmatprep.subr.mxu0 0.0
        %1178 = vmatpush1.xpose.msra.mxu0 0.0
        %1179 = vmatprep.subr.mxu0 0.0
        %1180 = vmatpush1.xpose.msra.mxu0 0.0
        %1181 = vmatprep.subr.mxu0 0.0
        %1182 = vmatpush1.xpose.msra.mxu0 0.0
        %1183 = vmatprep.subr.mxu0 0.0
        %1184 = vmatpush1.xpose.msra.mxu0 0.0
        %1185 = vmatprep.subr.mxu0 0.0
        %1186 = vmatpush1.xpose.msra.mxu0 0.0
        %1187 = vmatprep.subr.mxu0 0.0
        %1188 = vmatpush1.xpose.msra.mxu0 0.0
        %1189 = vmatprep.subr.mxu0 0.0
        %1190 = vmatpush1.xpose.msra.mxu0 0.0
        %1191 = vmatprep.subr.mxu0 0.0
        %1192 = vmatpush1.xpose.msra.mxu0 0.0
        %1193 = vmatprep.subr.mxu0 0.0
        %1194 = vmatpush1.xpose.msra.mxu0 0.0
        %1195 = vmatprep.subr.mxu0 0.0
        %1196 = vmatpush1.xpose.msra.mxu0 0.0
        %1197 = vmatprep.subr.mxu0 0.0
        %1198 = vmatpush1.xpose.msra.mxu0 0.0
        %1199 = vmatprep.subr.mxu0 0.0
        %1200 = vmatpush1.xpose.msra.mxu0 0.0
        %1201 = vmatprep.subr.mxu0 0.0
        %1202 = vmatpush1.xpose.msra.mxu0 0.0
        %1203 = vmatprep.subr.mxu0 0.0
        %1204 = vmatpush1.xpose.msra.mxu0 0.0
        %1205 = vmatprep.subr.mxu0 0.0
        %1206 = vmatpush1.xpose.msra.mxu0 0.0
        %1207 = vmatprep.subr.mxu0 0.0
        %1208 = vmatpush1.xpose.msra.mxu0 0.0
        %1209 = vmatprep.subr.mxu0 0.0
        %1210 = vmatpush1.xpose.msra.mxu0 0.0
        %1211 = vmatprep.subr.mxu0 0.0
        %1212 = vmatpush1.xpose.msra.mxu0 0.0
        %1213 = vmatprep.subr.mxu0 0.0
        %1214 = vmatpush1.xpose.msra.mxu0 0.0
        %1215 = vmatprep.subr.mxu0 0.0
        %1216 = vmatpush1.xpose.msra.mxu0 0.0
        %1217 = vmatprep.mubr.f32.mxu0 0.0
        %1218 = vmatmul.mubr.f32.gmra.mrb[0].mxu0 %v1149
        %v1219 = vpop.f32.mrb[0].mxu0
        %v1220 = vadd.f32 %v896, %v1219
        %v1221 = vpop.f32.mrb[0].mxu0
        %1222 = vdwg.mxu0
        %1223 = vrot.lane.b32.xlu0 %v993, 96
        %v1224 = vpop.permute.xlu0 %1223
        %v1225 = vsel %vm996, %v993, 0
        %v1227 = vsel %vm996, %v1224, 0
        %1229 = vmatprep.subr.mxu0 0.0
        %1230 = vmatpush1.xpose.msra.mxu0 %v1227
        %1231 = vmatprep.subr.mxu0 0.0
        %1232 = vmatpush1.xpose.msra.mxu0 0.0
        %1233 = vmatprep.subr.mxu0 0.0
        %1234 = vmatpush1.xpose.msra.mxu0 0.0
        %1235 = vmatprep.subr.mxu0 0.0
        %1236 = vmatpush1.xpose.msra.mxu0 0.0
        %1237 = vmatprep.subr.mxu0 0.0
        %1238 = vmatpush1.xpose.msra.mxu0 0.0
        %1239 = vmatprep.subr.mxu0 0.0
        %1240 = vmatpush1.xpose.msra.mxu0 0.0
        %1241 = vmatprep.subr.mxu0 0.0
        %1242 = vmatpush1.xpose.msra.mxu0 0.0
        %1243 = vmatprep.subr.mxu0 0.0
        %1244 = vmatpush1.xpose.msra.mxu0 0.0
        %1245 = vmatprep.subr.mxu0 0.0
        %1246 = vmatpush1.xpose.msra.mxu0 0.0
        %1247 = vmatprep.subr.mxu0 0.0
        %1248 = vmatpush1.xpose.msra.mxu0 0.0
        %1249 = vmatprep.subr.mxu0 0.0
        %1250 = vmatpush1.xpose.msra.mxu0 0.0
        %1251 = vmatprep.subr.mxu0 0.0
        %1252 = vmatpush1.xpose.msra.mxu0 0.0
        %1253 = vmatprep.subr.mxu0 0.0
        %1254 = vmatpush1.xpose.msra.mxu0 0.0
        %1255 = vmatprep.subr.mxu0 0.0
        %1256 = vmatpush1.xpose.msra.mxu0 0.0
        %1257 = vmatprep.subr.mxu0 0.0
        %1258 = vmatpush1.xpose.msra.mxu0 0.0
        %1259 = vmatprep.subr.mxu0 0.0
        %1260 = vmatpush1.xpose.msra.mxu0 0.0
        %1261 = vmatprep.subr.mxu0 0.0
        %1262 = vmatpush1.xpose.msra.mxu0 0.0
        %1263 = vmatprep.subr.mxu0 0.0
        %1264 = vmatpush1.xpose.msra.mxu0 0.0
        %1265 = vmatprep.subr.mxu0 0.0
        %1266 = vmatpush1.xpose.msra.mxu0 0.0
        %1267 = vmatprep.subr.mxu0 0.0
        %1268 = vmatpush1.xpose.msra.mxu0 0.0
        %1269 = vmatprep.subr.mxu0 0.0
        %1270 = vmatpush1.xpose.msra.mxu0 0.0
        %1271 = vmatprep.subr.mxu0 0.0
        %1272 = vmatpush1.xpose.msra.mxu0 0.0
        %1273 = vmatprep.subr.mxu0 0.0
        %1274 = vmatpush1.xpose.msra.mxu0 0.0
        %1275 = vmatprep.subr.mxu0 0.0
        %1276 = vmatpush1.xpose.msra.mxu0 0.0
        %1277 = vmatprep.subr.mxu0 0.0
        %1278 = vmatpush1.xpose.msra.mxu0 0.0
        %1279 = vmatprep.subr.mxu0 0.0
        %1280 = vmatpush1.xpose.msra.mxu0 0.0
        %1281 = vmatprep.subr.mxu0 0.0
        %1282 = vmatpush1.xpose.msra.mxu0 0.0
        %1283 = vmatprep.subr.mxu0 0.0
        %1284 = vmatpush1.xpose.msra.mxu0 0.0
        %1285 = vmatprep.subr.mxu0 0.0
        %1286 = vmatpush1.xpose.msra.mxu0 0.0
        %1287 = vmatprep.subr.mxu0 0.0
        %1288 = vmatpush1.xpose.msra.mxu0 0.0
        %1289 = vmatprep.subr.mxu0 0.0
        %1290 = vmatpush1.xpose.msra.mxu0 0.0
        %1291 = vmatprep.subr.mxu0 0.0
        %1292 = vmatpush1.xpose.msra.mxu0 0.0
        %1293 = vmatprep.mubr.f32.mxu0 0.0
        %1294 = vmatmul.mubr.f32.gmra.mrb[0].mxu0 %v1225
        %v1295 = vpop.f32.mrb[0].mxu0
        %v1296 = vadd.f32 %v896, %v1295
        %v1297 = vpop.f32.mrb[0].mxu0
        %1298 = vdwg.mxu0
        %v1299 = vsel %vm996, %v1068, -inf
        %1300 = vmax.xlane.f32.xlu0 %v1299
        %v1301 = vpop.xlane.xlu0 %1300
        %v1302 = vsel %vm996, %v1144, -inf
        %1303 = vmax.xlane.f32.xlu0 %v1302
        %v1304 = vpop.xlane.xlu0 %1303
        %v1305 = vsel %vm996, %v1220, -inf
        %1306 = vmax.xlane.f32.xlu0 %v1305
        %v1307 = vpop.xlane.xlu0 %1306
        %v1308 = vsel %vm996, %v1296, -inf
        %1309 = vmax.xlane.f32.xlu0 %v1308
        %v1310 = vpop.xlane.xlu0 %1309
        %v1311 = vsub.f32 %v1068, %v1301
        %v1312 = vsub.f32 %v1144, %v1304
        %v1313 = vsub.f32 %v1220, %v1307
        %v1314 = vsub.f32 %v1296, %v1310
        %v1315 = vmul.f32 %v1311, 1.442695
        %v1316 = vpow.pop %v1315
        %v1317 = vmul.f32 %v1312, 1.442695
        %v1318 = vpow.pop %v1317
        %v1319 = vmul.f32 %v1313, 1.442695
        %v1320 = vpow.pop %v1319
        %v1321 = vmul.f32 %v1314, 1.442695
        %v1322 = vpow.pop %v1321
        %v1323 = vsel %vm996, %v1316, 0.0
        %1324 = vadd.xlane.f32.xlu0 %v1323
        %v1325 = vpop.xlane.xlu0 %1324
        %v1326 = vsel %vm996, %v1318, 0.0
        %1327 = vadd.xlane.f32.xlu0 %v1326
        %v1328 = vpop.xlane.xlu0 %1327
        %v1329 = vsel %vm996, %v1320, 0.0
        %1330 = vadd.xlane.f32.xlu0 %v1329
        %v1331 = vpop.xlane.xlu0 %1330
        %v1332 = vsel %vm996, %v1322, 0.0
        %1333 = vadd.xlane.f32.xlu0 %v1332
        %v1334 = vpop.xlane.xlu0 %1333
        %v1335 = vrcp.pop %v1325
        %v1336 = vrcp.pop %v1328
        %v1337 = vrcp.pop %v1331
        %v1338 = vrcp.pop %v1334
        %v1339 = vmul.f32 %v1316, %v1335
        %v1340 = vmul.f32 %v1318, %v1336
        %v1341 = vmul.f32 %v1320, %v1337
        %v1342 = vmul.f32 %v1322, %v1338
        %1343 = vrot.lane.b32.xlu0 %v979, 64
        %v1344 = vpop.permute.xlu0 %1343
        %v1347 = vsel %vm996, %v1339, 0
        %1349 = vmatprep.subr.mxu0 0.0
        %1350 = vmatpush1.msra.mxu0 %v1344
        %1351 = vmatprep.subr.mxu0 0.0
        %1352 = vmatpush1.msra.mxu0 0.0
        %1353 = vmatprep.subr.mxu0 0.0
        %1354 = vmatpush1.msra.mxu0 0.0
        %1355 = vmatprep.subr.mxu0 0.0
        %1356 = vmatpush1.msra.mxu0 0.0
        %1357 = vmatprep.subr.mxu0 0.0
        %1358 = vmatpush1.msra.mxu0 0.0
        %1359 = vmatprep.subr.mxu0 0.0
        %1360 = vmatpush1.msra.mxu0 0.0
        %1361 = vmatprep.subr.mxu0 0.0
        %1362 = vmatpush1.msra.mxu0 0.0
        %1363 = vmatprep.subr.mxu0 0.0
        %1364 = vmatpush1.msra.mxu0 0.0
        %1365 = vmatprep.subr.mxu0 0.0
        %1366 = vmatpush1.msra.mxu0 0.0
        %1367 = vmatprep.subr.mxu0 0.0
        %1368 = vmatpush1.msra.mxu0 0.0
        %1369 = vmatprep.subr.mxu0 0.0
        %1370 = vmatpush1.msra.mxu0 0.0
        %1371 = vmatprep.subr.mxu0 0.0
        %1372 = vmatpush1.msra.mxu0 0.0
        %1373 = vmatprep.subr.mxu0 0.0
        %1374 = vmatpush1.msra.mxu0 0.0
        %1375 = vmatprep.subr.mxu0 0.0
        %1376 = vmatpush1.msra.mxu0 0.0
        %1377 = vmatprep.subr.mxu0 0.0
        %1378 = vmatpush1.msra.mxu0 0.0
        %1379 = vmatprep.subr.mxu0 0.0
        %1380 = vmatpush1.msra.mxu0 0.0
        %1381 = vmatprep.subr.mxu0 0.0
        %1382 = vmatpush1.msra.mxu0 0.0
        %1383 = vmatprep.subr.mxu0 0.0
        %1384 = vmatpush1.msra.mxu0 0.0
        %1385 = vmatprep.subr.mxu0 0.0
        %1386 = vmatpush1.msra.mxu0 0.0
        %1387 = vmatprep.subr.mxu0 0.0
        %1388 = vmatpush1.msra.mxu0 0.0
        %1389 = vmatprep.subr.mxu0 0.0
        %1390 = vmatpush1.msra.mxu0 0.0
        %1391 = vmatprep.subr.mxu0 0.0
        %1392 = vmatpush1.msra.mxu0 0.0
        %1393 = vmatprep.subr.mxu0 0.0
        %1394 = vmatpush1.msra.mxu0 0.0
        %1395 = vmatprep.subr.mxu0 0.0
        %1396 = vmatpush1.msra.mxu0 0.0
        %1397 = vmatprep.subr.mxu0 0.0
        %1398 = vmatpush1.msra.mxu0 0.0
        %1399 = vmatprep.subr.mxu0 0.0
        %1400 = vmatpush1.msra.mxu0 0.0
        %1401 = vmatprep.subr.mxu0 0.0
        %1402 = vmatpush1.msra.mxu0 0.0
        %1403 = vmatprep.subr.mxu0 0.0
        %1404 = vmatpush1.msra.mxu0 0.0
        %1405 = vmatprep.subr.mxu0 0.0
        %1406 = vmatpush1.msra.mxu0 0.0
        %1407 = vmatprep.subr.mxu0 0.0
        %1408 = vmatpush1.msra.mxu0 0.0
        %1409 = vmatprep.subr.mxu0 0.0
        %1410 = vmatpush1.msra.mxu0 0.0
        %1411 = vmatprep.subr.mxu0 0.0
        %1412 = vmatpush1.msra.mxu0 0.0
        %1413 = vmatprep.mubr.f32.mxu0 0.0
        %1414 = vmatmul.mubr.f32.gmra.mrb[0].mxu0 %v1347
        %v1415 = vpop.f32.mrb[0].mxu0
        %v1416 = vadd.f32 0.0, %v1415
        %v1417 = vpop.f32.mrb[0].mxu0
        %1418 = vdwg.mxu0
        %1419 = vrot.lane.b32.xlu0 %v989, 64
        %v1420 = vpop.permute.xlu0 %1419
        %v1423 = vsel %vm996, %v1340, 0
        %1425 = vmatprep.subr.mxu0 0.0
        %1426 = vmatpush1.msra.mxu0 %v1420
        %1427 = vmatprep.subr.mxu0 0.0
        %1428 = vmatpush1.msra.mxu0 0.0
        %1429 = vmatprep.subr.mxu0 0.0
        %1430 = vmatpush1.msra.mxu0 0.0
        %1431 = vmatprep.subr.mxu0 0.0
        %1432 = vmatpush1.msra.mxu0 0.0
        %1433 = vmatprep.subr.mxu0 0.0
        %1434 = vmatpush1.msra.mxu0 0.0
        %1435 = vmatprep.subr.mxu0 0.0
        %1436 = vmatpush1.msra.mxu0 0.0
        %1437 = vmatprep.subr.mxu0 0.0
        %1438 = vmatpush1.msra.mxu0 0.0
        %1439 = vmatprep.subr.mxu0 0.0
        %1440 = vmatpush1.msra.mxu0 0.0
        %1441 = vmatprep.subr.mxu0 0.0
        %1442 = vmatpush1.msra.mxu0 0.0
        %1443 = vmatprep.subr.mxu0 0.0
        %1444 = vmatpush1.msra.mxu0 0.0
        %1445 = vmatprep.subr.mxu0 0.0
        %1446 = vmatpush1.msra.mxu0 0.0
        %1447 = vmatprep.subr.mxu0 0.0
        %1448 = vmatpush1.msra.mxu0 0.0
        %1449 = vmatprep.subr.mxu0 0.0
        %1450 = vmatpush1.msra.mxu0 0.0
        %1451 = vmatprep.subr.mxu0 0.0
        %1452 = vmatpush1.msra.mxu0 0.0
        %1453 = vmatprep.subr.mxu0 0.0
        %1454 = vmatpush1.msra.mxu0 0.0
        %1455 = vmatprep.subr.mxu0 0.0
        %1456 = vmatpush1.msra.mxu0 0.0
        %1457 = vmatprep.subr.mxu0 0.0
        %1458 = vmatpush1.msra.mxu0 0.0
        %1459 = vmatprep.subr.mxu0 0.0
        %1460 = vmatpush1.msra.mxu0 0.0
        %1461 = vmatprep.subr.mxu0 0.0
        %1462 = vmatpush1.msra.mxu0 0.0
        %1463 = vmatprep.subr.mxu0 0.0
        %1464 = vmatpush1.msra.mxu0 0.0
        %1465 = vmatprep.subr.mxu0 0.0
        %1466 = vmatpush1.msra.mxu0 0.0
        %1467 = vmatprep.subr.mxu0 0.0
        %1468 = vmatpush1.msra.mxu0 0.0
        %1469 = vmatprep.subr.mxu0 0.0
        %1470 = vmatpush1.msra.mxu0 0.0
        %1471 = vmatprep.subr.mxu0 0.0
        %1472 = vmatpush1.msra.mxu0 0.0
        %1473 = vmatprep.subr.mxu0 0.0
        %1474 = vmatpush1.msra.mxu0 0.0
        %1475 = vmatprep.subr.mxu0 0.0
        %1476 = vmatpush1.msra.mxu0 0.0
        %1477 = vmatprep.subr.mxu0 0.0
        %1478 = vmatpush1.msra.mxu0 0.0
        %1479 = vmatprep.subr.mxu0 0.0
        %1480 = vmatpush1.msra.mxu0 0.0
        %1481 = vmatprep.subr.mxu0 0.0
        %1482 = vmatpush1.msra.mxu0 0.0
        %1483 = vmatprep.subr.mxu0 0.0
        %1484 = vmatpush1.msra.mxu0 0.0
        %1485 = vmatprep.subr.mxu0 0.0
        %1486 = vmatpush1.msra.mxu0 0.0
        %1487 = vmatprep.subr.mxu0 0.0
        %1488 = vmatpush1.msra.mxu0 0.0
        %1489 = vmatprep.mubr.f32.mxu0 0.0
        %1490 = vmatmul.mubr.f32.gmra.mrb[0].mxu0 %v1423
        %v1491 = vpop.f32.mrb[0].mxu0
        %v1492 = vadd.f32 0.0, %v1491
        %v1493 = vpop.f32.mrb[0].mxu0
        %1494 = vdwg.mxu0
        %1495 = vrot.lane.b32.xlu0 %v991, 64
        %v1496 = vpop.permute.xlu0 %1495
        %v1499 = vsel %vm996, %v1341, 0
        %1501 = vmatprep.subr.mxu0 0.0
        %1502 = vmatpush1.msra.mxu0 %v1496
        %1503 = vmatprep.subr.mxu0 0.0
        %1504 = vmatpush1.msra.mxu0 0.0
        %1505 = vmatprep.subr.mxu0 0.0
        %1506 = vmatpush1.msra.mxu0 0.0
        %1507 = vmatprep.subr.mxu0 0.0
        %1508 = vmatpush1.msra.mxu0 0.0
        %1509 = vmatprep.subr.mxu0 0.0
        %1510 = vmatpush1.msra.mxu0 0.0
        %1511 = vmatprep.subr.mxu0 0.0
        %1512 = vmatpush1.msra.mxu0 0.0
        %1513 = vmatprep.subr.mxu0 0.0
        %1514 = vmatpush1.msra.mxu0 0.0
        %1515 = vmatprep.subr.mxu0 0.0
        %1516 = vmatpush1.msra.mxu0 0.0
        %1517 = vmatprep.subr.mxu0 0.0
        %1518 = vmatpush1.msra.mxu0 0.0
        %1519 = vmatprep.subr.mxu0 0.0
        %1520 = vmatpush1.msra.mxu0 0.0
        %1521 = vmatprep.subr.mxu0 0.0
        %1522 = vmatpush1.msra.mxu0 0.0
        %1523 = vmatprep.subr.mxu0 0.0
        %1524 = vmatpush1.msra.mxu0 0.0
        %1525 = vmatprep.subr.mxu0 0.0
        %1526 = vmatpush1.msra.mxu0 0.0
        %1527 = vmatprep.subr.mxu0 0.0
        %1528 = vmatpush1.msra.mxu0 0.0
        %1529 = vmatprep.subr.mxu0 0.0
        %1530 = vmatpush1.msra.mxu0 0.0
        %1531 = vmatprep.subr.mxu0 0.0
        %1532 = vmatpush1.msra.mxu0 0.0
        %1533 = vmatprep.subr.mxu0 0.0
        %1534 = vmatpush1.msra.mxu0 0.0
        %1535 = vmatprep.subr.mxu0 0.0
        %1536 = vmatpush1.msra.mxu0 0.0
        %1537 = vmatprep.subr.mxu0 0.0
        %1538 = vmatpush1.msra.mxu0 0.0
        %1539 = vmatprep.subr.mxu0 0.0
        %1540 = vmatpush1.msra.mxu0 0.0
        %1541 = vmatprep.subr.mxu0 0.0
        %1542 = vmatpush1.msra.mxu0 0.0
        %1543 = vmatprep.subr.mxu0 0.0
        %1544 = vmatpush1.msra.mxu0 0.0
        %1545 = vmatprep.subr.mxu0 0.0
        %1546 = vmatpush1.msra.mxu0 0.0
        %1547 = vmatprep.subr.mxu0 0.0
        %1548 = vmatpush1.msra.mxu0 0.0
        %1549 = vmatprep.subr.mxu0 0.0
        %1550 = vmatpush1.msra.mxu0 0.0
        %1551 = vmatprep.subr.mxu0 0.0
        %1552 = vmatpush1.msra.mxu0 0.0
        %1553 = vmatprep.subr.mxu0 0.0
        %1554 = vmatpush1.msra.mxu0 0.0
        %1555 = vmatprep.subr.mxu0 0.0
        %1556 = vmatpush1.msra.mxu0 0.0
        %1557 = vmatprep.subr.mxu0 0.0
        %1558 = vmatpush1.msra.mxu0 0.0
        %1559 = vmatprep.subr.mxu0 0.0
        %1560 = vmatpush1.msra.mxu0 0.0
        %1561 = vmatprep.subr.mxu0 0.0
        %1562 = vmatpush1.msra.mxu0 0.0
        %1563 = vmatprep.subr.mxu0 0.0
        %1564 = vmatpush1.msra.mxu0 0.0
        %1565 = vmatprep.mubr.f32.mxu0 0.0
        %1566 = vmatmul.mubr.f32.gmra.mrb[0].mxu0 %v1499
        %v1567 = vpop.f32.mrb[0].mxu0
        %v1568 = vadd.f32 0.0, %v1567
        %v1569 = vpop.f32.mrb[0].mxu0
        %1570 = vdwg.mxu0
        %1571 = vrot.lane.b32.xlu0 %v993, 64
        %v1572 = vpop.permute.xlu0 %1571
        %v1575 = vsel %vm996, %v1342, 0
        %1577 = vmatprep.subr.mxu0 0.0
        %1578 = vmatpush1.msra.mxu0 %v1572
        %1579 = vmatprep.subr.mxu0 0.0
        %1580 = vmatpush1.msra.mxu0 0.0
        %1581 = vmatprep.subr.mxu0 0.0
        %1582 = vmatpush1.msra.mxu0 0.0
        %1583 = vmatprep.subr.mxu0 0.0
        %1584 = vmatpush1.msra.mxu0 0.0
        %1585 = vmatprep.subr.mxu0 0.0
        %1586 = vmatpush1.msra.mxu0 0.0
        %1587 = vmatprep.subr.mxu0 0.0
        %1588 = vmatpush1.msra.mxu0 0.0
        %1589 = vmatprep.subr.mxu0 0.0
        %1590 = vmatpush1.msra.mxu0 0.0
        %1591 = vmatprep.subr.mxu0 0.0
        %1592 = vmatpush1.msra.mxu0 0.0
        %1593 = vmatprep.subr.mxu0 0.0
        %1594 = vmatpush1.msra.mxu0 0.0
        %1595 = vmatprep.subr.mxu0 0.0
        %1596 = vmatpush1.msra.mxu0 0.0
        %1597 = vmatprep.subr.mxu0 0.0
        %1598 = vmatpush1.msra.mxu0 0.0
        %1599 = vmatprep.subr.mxu0 0.0
        %1600 = vmatpush1.msra.mxu0 0.0
        %1601 = vmatprep.subr.mxu0 0.0
        %1602 = vmatpush1.msra.mxu0 0.0
        %1603 = vmatprep.subr.mxu0 0.0
        %1604 = vmatpush1.msra.mxu0 0.0
        %1605 = vmatprep.subr.mxu0 0.0
        %1606 = vmatpush1.msra.mxu0 0.0
        %1607 = vmatprep.subr.mxu0 0.0
        %1608 = vmatpush1.msra.mxu0 0.0
        %1609 = vmatprep.subr.mxu0 0.0
        %1610 = vmatpush1.msra.mxu0 0.0
        %1611 = vmatprep.subr.mxu0 0.0
        %1612 = vmatpush1.msra.mxu0 0.0
        %1613 = vmatprep.subr.mxu0 0.0
        %1614 = vmatpush1.msra.mxu0 0.0
        %1615 = vmatprep.subr.mxu0 0.0
        %1616 = vmatpush1.msra.mxu0 0.0
        %1617 = vmatprep.subr.mxu0 0.0
        %1618 = vmatpush1.msra.mxu0 0.0
        %1619 = vmatprep.subr.mxu0 0.0
        %1620 = vmatpush1.msra.mxu0 0.0
        %1621 = vmatprep.subr.mxu0 0.0
        %1622 = vmatpush1.msra.mxu0 0.0
        %1623 = vmatprep.subr.mxu0 0.0
        %1624 = vmatpush1.msra.mxu0 0.0
        %1625 = vmatprep.subr.mxu0 0.0
        %1626 = vmatpush1.msra.mxu0 0.0
        %1627 = vmatprep.subr.mxu0 0.0
        %1628 = vmatpush1.msra.mxu0 0.0
        %1629 = vmatprep.subr.mxu0 0.0
        %1630 = vmatpush1.msra.mxu0 0.0
        %1631 = vmatprep.subr.mxu0 0.0
        %1632 = vmatpush1.msra.mxu0 0.0
        %1633 = vmatprep.subr.mxu0 0.0
        %1634 = vmatpush1.msra.mxu0 0.0
        %1635 = vmatprep.subr.mxu0 0.0
        %1636 = vmatpush1.msra.mxu0 0.0
        %1637 = vmatprep.subr.mxu0 0.0
        %1638 = vmatpush1.msra.mxu0 0.0
        %1639 = vmatprep.subr.mxu0 0.0
        %1640 = vmatpush1.msra.mxu0 0.0
        %1641 = vmatprep.mubr.f32.mxu0 0.0
        %1642 = vmatmul.mubr.f32.gmra.mrb[0].mxu0 %v1575
        %v1643 = vpop.f32.mrb[0].mxu0
        %v1644 = vadd.f32 0.0, %v1643
        %v1645 = vpop.f32.mrb[0].mxu0
        %1646 = vdwg.mxu0
        %1648 = vrot.lane.b32.xlu0 %v1492, 8
        %v1649 = vpop.permute.xlu0 %1648
        %1652 = vrot.lane.b32.xlu0 %v1568, 16
        %v1653 = vpop.permute.xlu0 %1652
        %1656 = vrot.lane.b32.xlu0 %v1644, 24
        %v1657 = vpop.permute.xlu0 %1656
        %v1659 = vsel %vm996, %v1416, %v1649
        %vm1660 = vcmask 130048
        %v1661 = vsel %vm1660, %v1659, %v1653
        %vm1662 = vcmask 195584
        %v1663 = vsel %vm1662, %v1661, %v1657
        %v1665 = vlaneseq
        %v1666 = vshrl.u32 %v1665, 7
        %v1667 = vsub.s32 0, %v1666
        %v1668 = vrot.slane %v986, %v1667
        %v1671 = vsel %vm908, %v1663, 0
        %1673 = vmatprep.subr.mxu0 0.0
        %1674 = vmatpush1.msra.mxu0 %v982
        %1675 = vmatprep.subr.mxu0 0.0
        %1676 = vmatpush1.msra.mxu0 %v983
        %1677 = vmatprep.subr.mxu0 0.0
        %1678 = vmatpush1.msra.mxu0 %v984
        %1679 = vmatprep.subr.mxu0 0.0
        %1680 = vmatpush1.msra.mxu0 %v985
        %1681 = vmatprep.subr.mxu0 0.0
        %1682 = vmatpush1.msra.mxu0 0.0
        %1683 = vmatprep.subr.mxu0 0.0
        %1684 = vmatpush1.msra.mxu0 0.0
        %1685 = vmatprep.subr.mxu0 0.0
        %1686 = vmatpush1.msra.mxu0 0.0
        %1687 = vmatprep.subr.mxu0 0.0
        %1688 = vmatpush1.msra.mxu0 0.0
        %1689 = vmatprep.subr.mxu0 0.0
        %1690 = vmatpush1.msra.mxu0 0.0
        %1691 = vmatprep.subr.mxu0 0.0
        %1692 = vmatpush1.msra.mxu0 0.0
        %1693 = vmatprep.subr.mxu0 0.0
        %1694 = vmatpush1.msra.mxu0 0.0
        %1695 = vmatprep.subr.mxu0 0.0
        %1696 = vmatpush1.msra.mxu0 0.0
        %1697 = vmatprep.subr.mxu0 0.0
        %1698 = vmatpush1.msra.mxu0 0.0
        %1699 = vmatprep.subr.mxu0 0.0
        %1700 = vmatpush1.msra.mxu0 0.0
        %1701 = vmatprep.subr.mxu0 0.0
        %1702 = vmatpush1.msra.mxu0 0.0
        %1703 = vmatprep.subr.mxu0 0.0
        %1704 = vmatpush1.msra.mxu0 0.0
        %1705 = vmatprep.subr.mxu0 0.0
        %1706 = vmatpush1.msra.mxu0 0.0
        %1707 = vmatprep.subr.mxu0 0.0
        %1708 = vmatpush1.msra.mxu0 0.0
        %1709 = vmatprep.subr.mxu0 0.0
        %1710 = vmatpush1.msra.mxu0 0.0
        %1711 = vmatprep.subr.mxu0 0.0
        %1712 = vmatpush1.msra.mxu0 0.0
        %1713 = vmatprep.subr.mxu0 0.0
        %1714 = vmatpush1.msra.mxu0 0.0
        %1715 = vmatprep.subr.mxu0 0.0
        %1716 = vmatpush1.msra.mxu0 0.0
        %1717 = vmatprep.subr.mxu0 0.0
        %1718 = vmatpush1.msra.mxu0 0.0
        %1719 = vmatprep.subr.mxu0 0.0
        %1720 = vmatpush1.msra.mxu0 0.0
        %1721 = vmatprep.subr.mxu0 0.0
        %1722 = vmatpush1.msra.mxu0 0.0
        %1723 = vmatprep.subr.mxu0 0.0
        %1724 = vmatpush1.msra.mxu0 0.0
        %1725 = vmatprep.subr.mxu0 0.0
        %1726 = vmatpush1.msra.mxu0 0.0
        %1727 = vmatprep.subr.mxu0 0.0
        %1728 = vmatpush1.msra.mxu0 0.0
        %1729 = vmatprep.subr.mxu0 0.0
        %1730 = vmatpush1.msra.mxu0 0.0
        %1731 = vmatprep.subr.mxu0 0.0
        %1732 = vmatpush1.msra.mxu0 0.0
        %1733 = vmatprep.subr.mxu0 0.0
        %1734 = vmatpush1.msra.mxu0 0.0
        %1735 = vmatprep.subr.mxu0 0.0
        %1736 = vmatpush1.msra.mxu0 0.0
        %1737 = vmatprep.mubr.f32.mxu0 0.0
        %1738 = vmatmul.mubr.f32.gmra.mrb[0].mxu0 %v1671
        %v1739 = vpop.f32.mrb[0].mxu0
        %v1740 = vadd.f32 %v1668, %v1739
        %v1741 = vpop.f32.mrb[0].mxu0
        %1742 = vdwg.mxu0
        %v1743 = vadd.f32 %v888, %v1740
        %v1744 = vld [vmem:[#allocation8] sm:$0x1]
        %v1745 = vld [vmem:[#allocation10] sm:$0x1]
        %v1746 = vsel %vm908, %v1743, 0.0
        %1747 = vadd.xlane.f32.xlu0 %v1746
        %v1748 = vpop.xlane.xlu0 %1747
        %v1749 = vrcp.pop 32.0
        %v1750 = vmul.f32 %v1748, %v1749
        %v1751 = vsub.f32 %v1743, %v1750
        %v1752 = vmul.f32 %v1751, %v1751
        %v1753 = vsel %vm908, %v1752, 0.0
        %1754 = vadd.xlane.f32.xlu0 %v1753
        %v1755 = vpop.xlane.xlu0 %1754
        %v1756 = vmul.f32 %v1755, %v1749
        %v1757 = vadd.f32 %v1756, 1e-05
        %v1758 = vrsqrt.pop %v1757
        %v1759 = vmul.f32 %v1751, %v1758
        %v1761 = vlaneseq
        %v1762 = vshrl.u32 %v1761, 7
        %v1763 = vsub.s32 0, %v1762
        %v1764 = vrot.slane %v1744, %v1763
        %v1766 = vmul.f32 %v1759, %v1764
        %v1768 = vlaneseq
        %v1769 = vshrl.u32 %v1768, 7
        %v1770 = vsub.s32 0, %v1769
        %v1771 = vrot.slane %v1745, %v1770
        %v1773 = vadd.f32 %v1766, %v1771
        %v1774 = vld [vmem:[#allocation11] sm:$0xff]
        %v1775 = vld [vmem:[#allocation11 + $0x8] sm:$0xff]
        %v1776 = vld [vmem:[#allocation11 + $0x10] sm:$0xff]
        %v1777 = vld [vmem:[#allocation11 + $0x18] sm:$0xff]
        %v1778 = vld [vmem:[#allocation13] sm:$0x1]
        %v1780 = vlaneseq
        %v1781 = vshrl.u32 %v1780, 7
        %v1782 = vsub.s32 0, %v1781
        %v1783 = vrot.slane %v1778, %v1782
        %v1786 = vsel %vm908, %v1773, 0
        %1788 = vmatprep.subr.mxu0 0.0
        %1789 = vmatpush1.msra.mxu0 %v1774
        %1790 = vmatprep.subr.mxu0 0.0
        %1791 = vmatpush1.msra.mxu0 %v1775
        %1792 = vmatprep.subr.mxu0 0.0
        %1793 = vmatpush1.msra.mxu0 %v1776
        %1794 = vmatprep.subr.mxu0 0.0
        %1795 = vmatpush1.msra.mxu0 %v1777
        %1796 = vmatprep.subr.mxu0 0.0
        %1797 = vmatpush1.msra.mxu0 0.0
        %1798 = vmatprep.subr.mxu0 0.0
        %1799 = vmatpush1.msra.mxu0 0.0
        %1800 = vmatprep.subr.mxu0 0.0
        %1801 = vmatpush1.msra.mxu0 0.0
        %1802 = vmatprep.subr.mxu0 0.0
        %1803 = vmatpush1.msra.mxu0 0.0
        %1804 = vmatprep.subr.mxu0 0.0
        %1805 = vmatpush1.msra.mxu0 0.0
        %1806 = vmatprep.subr.mxu0 0.0
        %1807 = vmatpush1.msra.mxu0 0.0
        %1808 = vmatprep.subr.mxu0 0.0
        %1809 = vmatpush1.msra.mxu0 0.0
        %1810 = vmatprep.subr.mxu0 0.0
        %1811 = vmatpush1.msra.mxu0 0.0
        %1812 = vmatprep.subr.mxu0 0.0
        %1813 = vmatpush1.msra.mxu0 0.0
        %1814 = vmatprep.subr.mxu0 0.0
        %1815 = vmatpush1.msra.mxu0 0.0
        %1816 = vmatprep.subr.mxu0 0.0
        %1817 = vmatpush1.msra.mxu0 0.0
        %1818 = vmatprep.subr.mxu0 0.0
        %1819 = vmatpush1.msra.mxu0 0.0
        %1820 = vmatprep.subr.mxu0 0.0
        %1821 = vmatpush1.msra.mxu0 0.0
        %1822 = vmatprep.subr.mxu0 0.0
        %1823 = vmatpush1.msra.mxu0 0.0
        %1824 = vmatprep.subr.mxu0 0.0
        %1825 = vmatpush1.msra.mxu0 0.0
        %1826 = vmatprep.subr.mxu0 0.0
        %1827 = vmatpush1.msra.mxu0 0.0
        %1828 = vmatprep.subr.mxu0 0.0
        %1829 = vmatpush1.msra.mxu0 0.0
        %1830 = vmatprep.subr.mxu0 0.0
        %1831 = vmatpush1.msra.mxu0 0.0
        %1832 = vmatprep.subr.mxu0 0.0
        %1833 = vmatpush1.msra.mxu0 0.0
        %1834 = vmatprep.subr.mxu0 0.0
        %1835 = vmatpush1.msra.mxu0 0.0
        %1836 = vmatprep.subr.mxu0 0.0
        %1837 = vmatpush1.msra.mxu0 0.0
        %1838 = vmatprep.subr.mxu0 0.0
        %1839 = vmatpush1.msra.mxu0 0.0
        %1840 = vmatprep.subr.mxu0 0.0
        %1841 = vmatpush1.msra.mxu0 0.0
        %1842 = vmatprep.subr.mxu0 0.0
        %1843 = vmatpush1.msra.mxu0 0.0
        %1844 = vmatprep.subr.mxu0 0.0
        %1845 = vmatpush1.msra.mxu0 0.0
        %1846 = vmatprep.subr.mxu0 0.0
        %1847 = vmatpush1.msra.mxu0 0.0
        %1848 = vmatprep.subr.mxu0 0.0
        %1849 = vmatpush1.msra.mxu0 0.0
        %1850 = vmatprep.subr.mxu0 0.0
        %1851 = vmatpush1.msra.mxu0 0.0
        %1852 = vmatprep.mubr.f32.mxu0 0.0
        %1853 = vmatmul.mubr.f32.gmra.mrb[0].mxu0 %v1786
        %v1854 = vpop.f32.mrb[0].mxu0
        %v1855 = vadd.f32 %v1783, %v1854
        %v1856 = vpop.f32.mrb[0].mxu0
        %1857 = vdwg.mxu0
        %v1858 = vld [vmem:[%s10] sm:$0xff]
        %v1859 = vld [vmem:[%s10 + $0x8] sm:$0xff]
        %v1860 = vld [vmem:[%s10 + $0x10] sm:$0xff]
        %v1861 = vld [vmem:[%s10 + $0x18] sm:$0xff]
        %v1862 = vld [vmem:[#allocation14] sm:$0x1]
        %v1864 = vlaneseq
        %v1865 = vshrl.u32 %v1864, 7
        %v1866 = vsub.s32 0, %v1865
        %v1867 = vrot.slane %v1862, %v1866
        %v1870 = vsel %vm908, %v889, 0
        %v1873 = vsel %vm908, %v890, 0
        %1875 = vmatprep.subr.mxu0 0.0
        %1876 = vmatpush1.msra.mxu0 %v1858
        %1877 = vmatprep.subr.mxu0 0.0
        %1878 = vmatpush1.msra.mxu0 %v1859
        %1879 = vmatprep.subr.mxu0 0.0
        %1880 = vmatpush1.msra.mxu0 %v1860
        %1881 = vmatprep.subr.mxu0 0.0
        %1882 = vmatpush1.msra.mxu0 %v1861
        %1883 = vmatprep.subr.mxu0 0.0
        %1884 = vmatpush1.msra.mxu0 0.0
        %1885 = vmatprep.subr.mxu0 0.0
        %1886 = vmatpush1.msra.mxu0 0.0
        %1887 = vmatprep.subr.mxu0 0.0
        %1888 = vmatpush1.msra.mxu0 0.0
        %1889 = vmatprep.subr.mxu0 0.0
        %1890 = vmatpush1.msra.mxu0 0.0
        %1891 = vmatprep.subr.mxu0 0.0
        %1892 = vmatpush1.msra.mxu0 0.0
        %1893 = vmatprep.subr.mxu0 0.0
        %1894 = vmatpush1.msra.mxu0 0.0
        %1895 = vmatprep.subr.mxu0 0.0
        %1896 = vmatpush1.msra.mxu0 0.0
        %1897 = vmatprep.subr.mxu0 0.0
        %1898 = vmatpush1.msra.mxu0 0.0
        %1899 = vmatprep.subr.mxu0 0.0
        %1900 = vmatpush1.msra.mxu0 0.0
        %1901 = vmatprep.subr.mxu0 0.0
        %1902 = vmatpush1.msra.mxu0 0.0
        %1903 = vmatprep.subr.mxu0 0.0
        %1904 = vmatpush1.msra.mxu0 0.0
        %1905 = vmatprep.subr.mxu0 0.0
        %1906 = vmatpush1.msra.mxu0 0.0
        %1907 = vmatprep.subr.mxu0 0.0
        %1908 = vmatpush1.msra.mxu0 0.0
        %1909 = vmatprep.subr.mxu0 0.0
        %1910 = vmatpush1.msra.mxu0 0.0
        %1911 = vmatprep.subr.mxu0 0.0
        %1912 = vmatpush1.msra.mxu0 0.0
        %1913 = vmatprep.subr.mxu0 0.0
        %1914 = vmatpush1.msra.mxu0 0.0
        %1915 = vmatprep.subr.mxu0 0.0
        %1916 = vmatpush1.msra.mxu0 0.0
        %1917 = vmatprep.subr.mxu0 0.0
        %1918 = vmatpush1.msra.mxu0 0.0
        %1919 = vmatprep.subr.mxu0 0.0
        %1920 = vmatpush1.msra.mxu0 0.0
        %1921 = vmatprep.subr.mxu0 0.0
        %1922 = vmatpush1.msra.mxu0 0.0
        %1923 = vmatprep.subr.mxu0 0.0
        %1924 = vmatpush1.msra.mxu0 0.0
        %1925 = vmatprep.subr.mxu0 0.0
        %1926 = vmatpush1.msra.mxu0 0.0
        %1927 = vmatprep.subr.mxu0 0.0
        %1928 = vmatpush1.msra.mxu0 0.0
        %1929 = vmatprep.subr.mxu0 0.0
        %1930 = vmatpush1.msra.mxu0 0.0
        %1931 = vmatprep.subr.mxu0 0.0
        %1932 = vmatpush1.msra.mxu0 0.0
        %1933 = vmatprep.subr.mxu0 0.0
        %1934 = vmatpush1.msra.mxu0 0.0
        %1935 = vmatprep.subr.mxu0 0.0
        %1936 = vmatpush1.msra.mxu0 0.0
        %1937 = vmatprep.subr.mxu0 0.0
        %1938 = vmatpush1.msra.mxu0 0.0
        %1939 = vmatprep.mubr.f32.mxu0 0.0
        %1940 = vmatmul.mubr.f32.gmra.mrb[0].mxu0 %v1870
        %v1941 = vpop.f32.mrb[0].mxu0
        %v1942 = vadd.f32 %v1867, %v1941
        %v1943 = vpop.f32.mrb[0].mxu0
        %1944 = vmatprep.mubr.f32.mxu0 0.0
        %1945 = vmatmul.mubr.f32.gmra.mrb[0].mxu0 %v1873
        %v1946 = vpop.f32.mrb[0].mxu0
        %v1947 = vadd.f32 %v1867, %v1946
        %v1948 = vpop.f32.mrb[0].mxu0
        %1949 = vdwg.mxu0
        %v1950 = vld [vmem:[#allocation16] sm:$0xff]
        %v1951 = vld [vmem:[#allocation16 + $0x8] sm:$0xff]
        %v1952 = vld [vmem:[#allocation16 + $0x10] sm:$0xff]
        %v1953 = vld [vmem:[#allocation16 + $0x18] sm:$0xff]
        %v1954 = vld [vmem:[#allocation17] sm:$0x1]
        %1956 = vrot.lane.b32.xlu0 %v1855, 120
        %v1957 = vpop.permute.xlu0 %1956
        %1958 = vrot.lane.b32.xlu0 %v1855, 112
        %v1959 = vpop.permute.xlu0 %1958
        %1960 = vrot.lane.b32.xlu0 %v1855, 104
        %v1961 = vpop.permute.xlu0 %1960
        %1964 = vrot.lane.b32.xlu0 %v1942, 120
        %v1965 = vpop.permute.xlu0 %1964
        %1966 = vrot.lane.b32.xlu0 %v1947, 120
        %v1967 = vpop.permute.xlu0 %1966
        %1968 = vrot.lane.b32.xlu0 %v1942, 112
        %v1969 = vpop.permute.xlu0 %1968
        %1970 = vrot.lane.b32.xlu0 %v1947, 112
        %v1971 = vpop.permute.xlu0 %1970
        %1972 = vrot.lane.b32.xlu0 %v1942, 104
        %v1973 = vpop.permute.xlu0 %1972
        %1974 = vrot.lane.b32.xlu0 %v1947, 104
        %v1975 = vpop.permute.xlu0 %1974
        %v1976 = vsel %vm996, %v1855, 0
        %v1978 = vsel %vm996, %v1942, 0
        %v1980 = vsel %vm996, %v1947, 0
        %1982 = vmatprep.subr.mxu0 0.0
        %1983 = vmatpush1.xpose.msra.mxu0 %v1978
        %1984 = vmatprep.subr.mxu0 0.0
        %1985 = vmatpush1.xpose.msra.mxu0 %v1980
        %1986 = vmatprep.subr.mxu0 0.0
        %1987 = vmatpush1.xpose.msra.mxu0 0.0
        %1988 = vmatprep.subr.mxu0 0.0
        %1989 = vmatpush1.xpose.msra.mxu0 0.0
        %1990 = vmatprep.subr.mxu0 0.0
        %1991 = vmatpush1.xpose.msra.mxu0 0.0
        %1992 = vmatprep.subr.mxu0 0.0
        %1993 = vmatpush1.xpose.msra.mxu0 0.0
        %1994 = vmatprep.subr.mxu0 0.0
        %1995 = vmatpush1.xpose.msra.mxu0 0.0
        %1996 = vmatprep.subr.mxu0 0.0
        %1997 = vmatpush1.xpose.msra.mxu0 0.0
        %1998 = vmatprep.subr.mxu0 0.0
        %1999 = vmatpush1.xpose.msra.mxu0 0.0
        %2000 = vmatprep.subr.mxu0 0.0
        %2001 = vmatpush1.xpose.msra.mxu0 0.0
        %2002 = vmatprep.subr.mxu0 0.0
        %2003 = vmatpush1.xpose.msra.mxu0 0.0
        %2004 = vmatprep.subr.mxu0 0.0
        %2005 = vmatpush1.xpose.msra.mxu0 0.0
        %2006 = vmatprep.subr.mxu0 0.0
        %2007 = vmatpush1.xpose.msra.mxu0 0.0
        %2008 = vmatprep.subr.mxu0 0.0
        %2009 = vmatpush1.xpose.msra.mxu0 0.0
        %2010 = vmatprep.subr.mxu0 0.0
        %2011 = vmatpush1.xpose.msra.mxu0 0.0
        %2012 = vmatprep.subr.mxu0 0.0
        %2013 = vmatpush1.xpose.msra.mxu0 0.0
        %2014 = vmatprep.subr.mxu0 0.0
        %2015 = vmatpush1.xpose.msra.mxu0 0.0
        %2016 = vmatprep.subr.mxu0 0.0
        %2017 = vmatpush1.xpose.msra.mxu0 0.0
        %2018 = vmatprep.subr.mxu0 0.0
        %2019 = vmatpush1.xpose.msra.mxu0 0.0
        %2020 = vmatprep.subr.mxu0 0.0
        %2021 = vmatpush1.xpose.msra.mxu0 0.0
        %2022 = vmatprep.subr.mxu0 0.0
        %2023 = vmatpush1.xpose.msra.mxu0 0.0
        %2024 = vmatprep.subr.mxu0 0.0
        %2025 = vmatpush1.xpose.msra.mxu0 0.0
        %2026 = vmatprep.subr.mxu0 0.0
        %2027 = vmatpush1.xpose.msra.mxu0 0.0
        %2028 = vmatprep.subr.mxu0 0.0
        %2029 = vmatpush1.xpose.msra.mxu0 0.0
        %2030 = vmatprep.subr.mxu0 0.0
        %2031 = vmatpush1.xpose.msra.mxu0 0.0
        %2032 = vmatprep.subr.mxu0 0.0
        %2033 = vmatpush1.xpose.msra.mxu0 0.0
        %2034 = vmatprep.subr.mxu0 0.0
        %2035 = vmatpush1.xpose.msra.mxu0 0.0
        %2036 = vmatprep.subr.mxu0 0.0
        %2037 = vmatpush1.xpose.msra.mxu0 0.0
        %2038 = vmatprep.subr.mxu0 0.0
        %2039 = vmatpush1.xpose.msra.mxu0 0.0
        %2040 = vmatprep.subr.mxu0 0.0
        %2041 = vmatpush1.xpose.msra.mxu0 0.0
        %2042 = vmatprep.subr.mxu0 0.0
        %2043 = vmatpush1.xpose.msra.mxu0 0.0
        %2044 = vmatprep.subr.mxu0 0.0
        %2045 = vmatpush1.xpose.msra.mxu0 0.0
        %2046 = vmatprep.mubr.f32.mxu0 0.0
        %2047 = vmatmul.mubr.f32.gmra.mrb[0].mxu0 %v1976
        %v2048 = vpop.f32.mrb[0].mxu0
        %v2049 = vadd.f32 0.0, %v2048
        %v2050 = vpop.f32.mrb[0].mxu0
        %2051 = vdwg.mxu0
        %v2052 = vsel %vm996, %v1957, 0
        %v2054 = vsel %vm996, %v1965, 0
        %v2056 = vsel %vm996, %v1967, 0
        %2058 = vmatprep.subr.mxu0 0.0
        %2059 = vmatpush1.xpose.msra.mxu0 %v2054
        %2060 = vmatprep.subr.mxu0 0.0
        %2061 = vmatpush1.xpose.msra.mxu0 %v2056
        %2062 = vmatprep.subr.mxu0 0.0
        %2063 = vmatpush1.xpose.msra.mxu0 0.0
        %2064 = vmatprep.subr.mxu0 0.0
        %2065 = vmatpush1.xpose.msra.mxu0 0.0
        %2066 = vmatprep.subr.mxu0 0.0
        %2067 = vmatpush1.xpose.msra.mxu0 0.0
        %2068 = vmatprep.subr.mxu0 0.0
        %2069 = vmatpush1.xpose.msra.mxu0 0.0
        %2070 = vmatprep.subr.mxu0 0.0
        %2071 = vmatpush1.xpose.msra.mxu0 0.0
        %2072 = vmatprep.subr.mxu0 0.0
        %2073 = vmatpush1.xpose.msra.mxu0 0.0
        %2074 = vmatprep.subr.mxu0 0.0
        %2075 = vmatpush1.xpose.msra.mxu0 0.0
        %2076 = vmatprep.subr.mxu0 0.0
        %2077 = vmatpush1.xpose.msra.mxu0 0.0
        %2078 = vmatprep.subr.mxu0 0.0
        %2079 = vmatpush1.xpose.msra.mxu0 0.0
        %2080 = vmatprep.subr.mxu0 0.0
        %2081 = vmatpush1.xpose.msra.mxu0 0.0
        %2082 = vmatprep.subr.mxu0 0.0
        %2083 = vmatpush1.xpose.msra.mxu0 0.0
        %2084 = vmatprep.subr.mxu0 0.0
        %2085 = vmatpush1.xpose.msra.mxu0 0.0
        %2086 = vmatprep.subr.mxu0 0.0
        %2087 = vmatpush1.xpose.msra.mxu0 0.0
        %2088 = vmatprep.subr.mxu0 0.0
        %2089 = vmatpush1.xpose.msra.mxu0 0.0
        %2090 = vmatprep.subr.mxu0 0.0
        %2091 = vmatpush1.xpose.msra.mxu0 0.0
        %2092 = vmatprep.subr.mxu0 0.0
        %2093 = vmatpush1.xpose.msra.mxu0 0.0
        %2094 = vmatprep.subr.mxu0 0.0
        %2095 = vmatpush1.xpose.msra.mxu0 0.0
        %2096 = vmatprep.subr.mxu0 0.0
        %2097 = vmatpush1.xpose.msra.mxu0 0.0
        %2098 = vmatprep.subr.mxu0 0.0
        %2099 = vmatpush1.xpose.msra.mxu0 0.0
        %2100 = vmatprep.subr.mxu0 0.0
        %2101 = vmatpush1.xpose.msra.mxu0 0.0
        %2102 = vmatprep.subr.mxu0 0.0
        %2103 = vmatpush1.xpose.msra.mxu0 0.0
        %2104 = vmatprep.subr.mxu0 0.0
        %2105 = vmatpush1.xpose.msra.mxu0 0.0
        %2106 = vmatprep.subr.mxu0 0.0
        %2107 = vmatpush1.xpose.msra.mxu0 0.0
        %2108 = vmatprep.subr.mxu0 0.0
        %2109 = vmatpush1.xpose.msra.mxu0 0.0
        %2110 = vmatprep.subr.mxu0 0.0
        %2111 = vmatpush1.xpose.msra.mxu0 0.0
        %2112 = vmatprep.subr.mxu0 0.0
        %2113 = vmatpush1.xpose.msra.mxu0 0.0
        %2114 = vmatprep.subr.mxu0 0.0
        %2115 = vmatpush1.xpose.msra.mxu0 0.0
        %2116 = vmatprep.subr.mxu0 0.0
        %2117 = vmatpush1.xpose.msra.mxu0 0.0
        %2118 = vmatprep.subr.mxu0 0.0
        %2119 = vmatpush1.xpose.msra.mxu0 0.0
        %2120 = vmatprep.subr.mxu0 0.0
        %2121 = vmatpush1.xpose.msra.mxu0 0.0
        %2122 = vmatprep.mubr.f32.mxu0 0.0
        %2123 = vmatmul.mubr.f32.gmra.mrb[0].mxu0 %v2052
        %v2124 = vpop.f32.mrb[0].mxu0
        %v2125 = vadd.f32 0.0, %v2124
        %v2126 = vpop.f32.mrb[0].mxu0
        %2127 = vdwg.mxu0
        %v2128 = vsel %vm996, %v1959, 0
        %v2130 = vsel %vm996, %v1969, 0
        %v2132 = vsel %vm996, %v1971, 0
        %2134 = vmatprep.subr.mxu0 0.0
        %2135 = vmatpush1.xpose.msra.mxu0 %v2130
        %2136 = vmatprep.subr.mxu0 0.0
        %2137 = vmatpush1.xpose.msra.mxu0 %v2132
        %2138 = vmatprep.subr.mxu0 0.0
        %2139 = vmatpush1.xpose.msra.mxu0 0.0
        %2140 = vmatprep.subr.mxu0 0.0
        %2141 = vmatpush1.xpose.msra.mxu0 0.0
        %2142 = vmatprep.subr.mxu0 0.0
        %2143 = vmatpush1.xpose.msra.mxu0 0.0
        %2144 = vmatprep.subr.mxu0 0.0
        %2145 = vmatpush1.xpose.msra.mxu0 0.0
        %2146 = vmatprep.subr.mxu0 0.0
        %2147 = vmatpush1.xpose.msra.mxu0 0.0
        %2148 = vmatprep.subr.mxu0 0.0
        %2149 = vmatpush1.xpose.msra.mxu0 0.0
        %2150 = vmatprep.subr.mxu0 0.0
        %2151 = vmatpush1.xpose.msra.mxu0 0.0
        %2152 = vmatprep.subr.mxu0 0.0
        %2153 = vmatpush1.xpose.msra.mxu0 0.0
        %2154 = vmatprep.subr.mxu0 0.0
        %2155 = vmatpush1.xpose.msra.mxu0 0.0
        %2156 = vmatprep.subr.mxu0 0.0
        %2157 = vmatpush1.xpose.msra.mxu0 0.0
        %2158 = vmatprep.subr.mxu0 0.0
        %2159 = vmatpush1.xpose.msra.mxu0 0.0
        %2160 = vmatprep.subr.mxu0 0.0
        %2161 = vmatpush1.xpose.msra.mxu0 0.0
        %2162 = vmatprep.subr.mxu0 0.0
        %2163 = vmatpush1.xpose.msra.mxu0 0.0
        %2164 = vmatprep.subr.mxu0 0.0
        %2165 = vmatpush1.xpose.msra.mxu0 0.0
        %2166 = vmatprep.subr.mxu0 0.0
        %2167 = vmatpush1.xpose.msra.mxu0 0.0
        %2168 = vmatprep.subr.mxu0 0.0
        %2169 = vmatpush1.xpose.msra.mxu0 0.0
        %2170 = vmatprep.subr.mxu0 0.0
        %2171 = vmatpush1.xpose.msra.mxu0 0.0
        %2172 = vmatprep.subr.mxu0 0.0
        %2173 = vmatpush1.xpose.msra.mxu0 0.0
        %2174 = vmatprep.subr.mxu0 0.0
        %2175 = vmatpush1.xpose.msra.mxu0 0.0
        %2176 = vmatprep.subr.mxu0 0.0
        %2177 = vmatpush1.xpose.msra.mxu0 0.0
        %2178 = vmatprep.subr.mxu0 0.0
        %2179 = vmatpush1.xpose.msra.mxu0 0.0
        %2180 = vmatprep.subr.mxu0 0.0
        %2181 = vmatpush1.xpose.msra.mxu0 0.0
        %2182 = vmatprep.subr.mxu0 0.0
        %2183 = vmatpush1.xpose.msra.mxu0 0.0
        %2184 = vmatprep.subr.mxu0 0.0
        %2185 = vmatpush1.xpose.msra.mxu0 0.0
        %2186 = vmatprep.subr.mxu0 0.0
        %2187 = vmatpush1.xpose.msra.mxu0 0.0
        %2188 = vmatprep.subr.mxu0 0.0
        %2189 = vmatpush1.xpose.msra.mxu0 0.0
        %2190 = vmatprep.subr.mxu0 0.0
        %2191 = vmatpush1.xpose.msra.mxu0 0.0
        %2192 = vmatprep.subr.mxu0 0.0
        %2193 = vmatpush1.xpose.msra.mxu0 0.0
        %2194 = vmatprep.subr.mxu0 0.0
        %2195 = vmatpush1.xpose.msra.mxu0 0.0
        %2196 = vmatprep.subr.mxu0 0.0
        %2197 = vmatpush1.xpose.msra.mxu0 0.0
        %2198 = vmatprep.mubr.f32.mxu0 0.0
        %2199 = vmatmul.mubr.f32.gmra.mrb[0].mxu0 %v2128
        %v2200 = vpop.f32.mrb[0].mxu0
        %v2201 = vadd.f32 0.0, %v2200
        %v2202 = vpop.f32.mrb[0].mxu0
        %2203 = vdwg.mxu0
        %v2204 = vsel %vm996, %v1961, 0
        %v2206 = vsel %vm996, %v1973, 0
        %v2208 = vsel %vm996, %v1975, 0
        %2210 = vmatprep.subr.mxu0 0.0
        %2211 = vmatpush1.xpose.msra.mxu0 %v2206
        %2212 = vmatprep.subr.mxu0 0.0
        %2213 = vmatpush1.xpose.msra.mxu0 %v2208
        %2214 = vmatprep.subr.mxu0 0.0
        %2215 = vmatpush1.xpose.msra.mxu0 0.0
        %2216 = vmatprep.subr.mxu0 0.0
        %2217 = vmatpush1.xpose.msra.mxu0 0.0
        %2218 = vmatprep.subr.mxu0 0.0
        %2219 = vmatpush1.xpose.msra.mxu0 0.0
        %2220 = vmatprep.subr.mxu0 0.0
        %2221 = vmatpush1.xpose.msra.mxu0 0.0
        %2222 = vmatprep.subr.mxu0 0.0
        %2223 = vmatpush1.xpose.msra.mxu0 0.0
        %2224 = vmatprep.subr.mxu0 0.0
        %2225 = vmatpush1.xpose.msra.mxu0 0.0
        %2226 = vmatprep.subr.mxu0 0.0
        %2227 = vmatpush1.xpose.msra.mxu0 0.0
        %2228 = vmatprep.subr.mxu0 0.0
        %2229 = vmatpush1.xpose.msra.mxu0 0.0
        %2230 = vmatprep.subr.mxu0 0.0
        %2231 = vmatpush1.xpose.msra.mxu0 0.0
        %2232 = vmatprep.subr.mxu0 0.0
        %2233 = vmatpush1.xpose.msra.mxu0 0.0
        %2234 = vmatprep.subr.mxu0 0.0
        %2235 = vmatpush1.xpose.msra.mxu0 0.0
        %2236 = vmatprep.subr.mxu0 0.0
        %2237 = vmatpush1.xpose.msra.mxu0 0.0
        %2238 = vmatprep.subr.mxu0 0.0
        %2239 = vmatpush1.xpose.msra.mxu0 0.0
        %2240 = vmatprep.subr.mxu0 0.0
        %2241 = vmatpush1.xpose.msra.mxu0 0.0
        %2242 = vmatprep.subr.mxu0 0.0
        %2243 = vmatpush1.xpose.msra.mxu0 0.0
        %2244 = vmatprep.subr.mxu0 0.0
        %2245 = vmatpush1.xpose.msra.mxu0 0.0
        %2246 = vmatprep.subr.mxu0 0.0
        %2247 = vmatpush1.xpose.msra.mxu0 0.0
        %2248 = vmatprep.subr.mxu0 0.0
        %2249 = vmatpush1.xpose.msra.mxu0 0.0
        %2250 = vmatprep.subr.mxu0 0.0
        %2251 = vmatpush1.xpose.msra.mxu0 0.0
        %2252 = vmatprep.subr.mxu0 0.0
        %2253 = vmatpush1.xpose.msra.mxu0 0.0
        %2254 = vmatprep.subr.mxu0 0.0
        %2255 = vmatpush1.xpose.msra.mxu0 0.0
        %2256 = vmatprep.subr.mxu0 0.0
        %2257 = vmatpush1.xpose.msra.mxu0 0.0
        %2258 = vmatprep.subr.mxu0 0.0
        %2259 = vmatpush1.xpose.msra.mxu0 0.0
        %2260 = vmatprep.subr.mxu0 0.0
        %2261 = vmatpush1.xpose.msra.mxu0 0.0
        %2262 = vmatprep.subr.mxu0 0.0
        %2263 = vmatpush1.xpose.msra.mxu0 0.0
        %2264 = vmatprep.subr.mxu0 0.0
        %2265 = vmatpush1.xpose.msra.mxu0 0.0
        %2266 = vmatprep.subr.mxu0 0.0
        %2267 = vmatpush1.xpose.msra.mxu0 0.0
        %2268 = vmatprep.subr.mxu0 0.0
        %2269 = vmatpush1.xpose.msra.mxu0 0.0
        %2270 = vmatprep.subr.mxu0 0.0
        %2271 = vmatpush1.xpose.msra.mxu0 0.0
        %2272 = vmatprep.subr.mxu0 0.0
        %2273 = vmatpush1.xpose.msra.mxu0 0.0
        %2274 = vmatprep.mubr.f32.mxu0 0.0
        %2275 = vmatmul.mubr.f32.gmra.mrb[0].mxu0 %v2204
        %v2276 = vpop.f32.mrb[0].mxu0
        %v2277 = vadd.f32 0.0, %v2276
        %v2278 = vpop.f32.mrb[0].mxu0
        %2279 = vdwg.mxu0
        %v2280 = vsel %vm1660, %v2049, -inf
        %2281 = vmax.xlane.f32.xlu0 %v2280
        %v2282 = vpop.xlane.xlu0 %2281
        %v2283 = vsel %vm1660, %v2125, -inf
        %2284 = vmax.xlane.f32.xlu0 %v2283
        %v2285 = vpop.xlane.xlu0 %2284
        %v2286 = vsel %vm1660, %v2201, -inf
        %2287 = vmax.xlane.f32.xlu0 %v2286
        %v2288 = vpop.xlane.xlu0 %2287
        %v2289 = vsel %vm1660, %v2277, -inf
        %2290 = vmax.xlane.f32.xlu0 %v2289
        %v2291 = vpop.xlane.xlu0 %2290
        %v2292 = vsub.f32 %v2049, %v2282
        %v2293 = vsub.f32 %v2125, %v2285
        %v2294 = vsub.f32 %v2201, %v2288
        %v2295 = vsub.f32 %v2277, %v2291
        %v2296 = vmul.f32 %v2292, 1.442695
        %v2297 = vpow.pop %v2296
        %v2298 = vmul.f32 %v2293, 1.442695
        %v2299 = vpow.pop %v2298
        %v2300 = vmul.f32 %v2294, 1.442695
        %v2301 = vpow.pop %v2300
        %v2302 = vmul.f32 %v2295, 1.442695
        %v2303 = vpow.pop %v2302
        %v2304 = vsel %vm1660, %v2297, 0.0
        %2305 = vadd.xlane.f32.xlu0 %v2304
        %v2306 = vpop.xlane.xlu0 %2305
        %v2307 = vsel %vm1660, %v2299, 0.0
        %2308 = vadd.xlane.f32.xlu0 %v2307
        %v2309 = vpop.xlane.xlu0 %2308
        %v2310 = vsel %vm1660, %v2301, 0.0
        %2311 = vadd.xlane.f32.xlu0 %v2310
        %v2312 = vpop.xlane.xlu0 %2311
        %v2313 = vsel %vm1660, %v2303, 0.0
        %2314 = vadd.xlane.f32.xlu0 %v2313
        %v2315 = vpop.xlane.xlu0 %2314
        %v2316 = vrcp.pop %v2306
        %v2317 = vrcp.pop %v2309
        %v2318 = vrcp.pop %v2312
        %v2319 = vrcp.pop %v2315
        %v2320 = vmul.f32 %v2297, %v2316
        %v2321 = vmul.f32 %v2299, %v2317
        %v2322 = vmul.f32 %v2301, %v2318
        %v2323 = vmul.f32 %v2303, %v2319
        %2324 = vrot.lane.b32.xlu0 %v1942, 96
        %v2325 = vpop.permute.xlu0 %2324
        %2326 = vrot.lane.b32.xlu0 %v1947, 96
        %v2327 = vpop.permute.xlu0 %2326
        %v2331 = vsel %vm1660, %v2320, 0
        %2333 = vmatprep.subr.mxu0 0.0
        %2334 = vmatpush1.msra.mxu0 %v2325
        %2335 = vmatprep.subr.mxu0 0.0
        %2336 = vmatpush1.msra.mxu0 %v2327
        %2337 = vmatprep.subr.mxu0 0.0
        %2338 = vmatpush1.msra.mxu0 0.0
        %2339 = vmatprep.subr.mxu0 0.0
        %2340 = vmatpush1.msra.mxu0 0.0
        %2341 = vmatprep.subr.mxu0 0.0
        %2342 = vmatpush1.msra.mxu0 0.0
        %2343 = vmatprep.subr.mxu0 0.0
        %2344 = vmatpush1.msra.mxu0 0.0
        %2345 = vmatprep.subr.mxu0 0.0
        %2346 = vmatpush1.msra.mxu0 0.0
        %2347 = vmatprep.subr.mxu0 0.0
        %2348 = vmatpush1.msra.mxu0 0.0
        %2349 = vmatprep.subr.mxu0 0.0
        %2350 = vmatpush1.msra.mxu0 0.0
        %2351 = vmatprep.subr.mxu0 0.0
        %2352 = vmatpush1.msra.mxu0 0.0
        %2353 = vmatprep.subr.mxu0 0.0
        %2354 = vmatpush1.msra.mxu0 0.0
        %2355 = vmatprep.subr.mxu0 0.0
        %2356 = vmatpush1.msra.mxu0 0.0
        %2357 = vmatprep.subr.mxu0 0.0
        %2358 = vmatpush1.msra.mxu0 0.0
        %2359 = vmatprep.subr.mxu0 0.0
        %2360 = vmatpush1.msra.mxu0 0.0
        %2361 = vmatprep.subr.mxu0 0.0
        %2362 = vmatpush1.msra.mxu0 0.0
        %2363 = vmatprep.subr.mxu0 0.0
        %2364 = vmatpush1.msra.mxu0 0.0
        %2365 = vmatprep.subr.mxu0 0.0
        %2366 = vmatpush1.msra.mxu0 0.0
        %2367 = vmatprep.subr.mxu0 0.0
        %2368 = vmatpush1.msra.mxu0 0.0
        %2369 = vmatprep.subr.mxu0 0.0
        %2370 = vmatpush1.msra.mxu0 0.0
        %2371 = vmatprep.subr.mxu0 0.0
        %2372 = vmatpush1.msra.mxu0 0.0
        %2373 = vmatprep.subr.mxu0 0.0
        %2374 = vmatpush1.msra.mxu0 0.0
        %2375 = vmatprep.subr.mxu0 0.0
        %2376 = vmatpush1.msra.mxu0 0.0
        %2377 = vmatprep.subr.mxu0 0.0
        %2378 = vmatpush1.msra.mxu0 0.0
        %2379 = vmatprep.subr.mxu0 0.0
        %2380 = vmatpush1.msra.mxu0 0.0
        %2381 = vmatprep.subr.mxu0 0.0
        %2382 = vmatpush1.msra.mxu0 0.0
        %2383 = vmatprep.subr.mxu0 0.0
        %2384 = vmatpush1.msra.mxu0 0.0
        %2385 = vmatprep.subr.mxu0 0.0
        %2386 = vmatpush1.msra.mxu0 0.0
        %2387 = vmatprep.subr.mxu0 0.0
        %2388 = vmatpush1.msra.mxu0 0.0
        %2389 = vmatprep.subr.mxu0 0.0
        %2390 = vmatpush1.msra.mxu0 0.0
        %2391 = vmatprep.subr.mxu0 0.0
        %2392 = vmatpush1.msra.mxu0 0.0
        %2393 = vmatprep.subr.mxu0 0.0
        %2394 = vmatpush1.msra.mxu0 0.0
        %2395 = vmatprep.subr.mxu0 0.0
        %2396 = vmatpush1.msra.mxu0 0.0
        %2397 = vmatprep.mubr.f32.mxu0 0.0
        %2398 = vmatmul.mubr.f32.gmra.mrb[0].mxu0 %v2331
        %v2399 = vpop.f32.mrb[0].mxu0
        %v2400 = vadd.f32 0.0, %v2399
        %v2401 = vpop.f32.mrb[0].mxu0
        %2402 = vdwg.mxu0
        %2403 = vrot.lane.b32.xlu0 %v1965, 96
        %v2404 = vpop.permute.xlu0 %2403
        %2405 = vrot.lane.b32.xlu0 %v1967, 96
        %v2406 = vpop.permute.xlu0 %2405
        %v2410 = vsel %vm1660, %v2321, 0
        %2412 = vmatprep.subr.mxu0 0.0
        %2413 = vmatpush1.msra.mxu0 %v2404
        %2414 = vmatprep.subr.mxu0 0.0
        %2415 = vmatpush1.msra.mxu0 %v2406
        %2416 = vmatprep.subr.mxu0 0.0
        %2417 = vmatpush1.msra.mxu0 0.0
        %2418 = vmatprep.subr.mxu0 0.0
        %2419 = vmatpush1.msra.mxu0 0.0
        %2420 = vmatprep.subr.mxu0 0.0
        %2421 = vmatpush1.msra.mxu0 0.0
        %2422 = vmatprep.subr.mxu0 0.0
        %2423 = vmatpush1.msra.mxu0 0.0
        %2424 = vmatprep.subr.mxu0 0.0
        %2425 = vmatpush1.msra.mxu0 0.0
        %2426 = vmatprep.subr.mxu0 0.0
        %2427 = vmatpush1.msra.mxu0 0.0
        %2428 = vmatprep.subr.mxu0 0.0
        %2429 = vmatpush1.msra.mxu0 0.0
        %2430 = vmatprep.subr.mxu0 0.0
        %2431 = vmatpush1.msra.mxu0 0.0
        %2432 = vmatprep.subr.mxu0 0.0
        %2433 = vmatpush1.msra.mxu0 0.0
        %2434 = vmatprep.subr.mxu0 0.0
        %2435 = vmatpush1.msra.mxu0 0.0
        %2436 = vmatprep.subr.mxu0 0.0
        %2437 = vmatpush1.msra.mxu0 0.0
        %2438 = vmatprep.subr.mxu0 0.0
        %2439 = vmatpush1.msra.mxu0 0.0
        %2440 = vmatprep.subr.mxu0 0.0
        %2441 = vmatpush1.msra.mxu0 0.0
        %2442 = vmatprep.subr.mxu0 0.0
        %2443 = vmatpush1.msra.mxu0 0.0
        %2444 = vmatprep.subr.mxu0 0.0
        %2445 = vmatpush1.msra.mxu0 0.0
        %2446 = vmatprep.subr.mxu0 0.0
        %2447 = vmatpush1.msra.mxu0 0.0
        %2448 = vmatprep.subr.mxu0 0.0
        %2449 = vmatpush1.msra.mxu0 0.0
        %2450 = vmatprep.subr.mxu0 0.0
        %2451 = vmatpush1.msra.mxu0 0.0
        %2452 = vmatprep.subr.mxu0 0.0
        %2453 = vmatpush1.msra.mxu0 0.0
        %2454 = vmatprep.subr.mxu0 0.0
        %2455 = vmatpush1.msra.mxu0 0.0
        %2456 = vmatprep.subr.mxu0 0.0
        %2457 = vmatpush1.msra.mxu0 0.0
        %2458 = vmatprep.subr.mxu0 0.0
        %2459 = vmatpush1.msra.mxu0 0.0
        %2460 = vmatprep.subr.mxu0 0.0
        %2461 = vmatpush1.msra.mxu0 0.0
        %2462 = vmatprep.subr.mxu0 0.0
        %2463 = vmatpush1.msra.mxu0 0.0
        %2464 = vmatprep.subr.mxu0 0.0
        %2465 = vmatpush1.msra.mxu0 0.0
        %2466 = vmatprep.subr.mxu0 0.0
        %2467 = vmatpush1.msra.mxu0 0.0
        %2468 = vmatprep.subr.mxu0 0.0
        %2469 = vmatpush1.msra.mxu0 0.0
        %2470 = vmatprep.subr.mxu0 0.0
        %2471 = vmatpush1.msra.mxu0 0.0
        %2472 = vmatprep.subr.mxu0 0.0
        %2473 = vmatpush1.msra.mxu0 0.0
        %2474 = vmatprep.subr.mxu0 0.0
        %2475 = vmatpush1.msra.mxu0 0.0
        %2476 = vmatprep.mubr.f32.mxu0 0.0
        %2477 = vmatmul.mubr.f32.gmra.mrb[0].mxu0 %v2410
        %v2478 = vpop.f32.mrb[0].mxu0
        %v2479 = vadd.f32 0.0, %v2478
        %v2480 = vpop.f32.mrb[0].mxu0
        %2481 = vdwg.mxu0
        %2482 = vrot.lane.b32.xlu0 %v1969, 96
        %v2483 = vpop.permute.xlu0 %2482
        %2484 = vrot.lane.b32.xlu0 %v1971, 96
        %v2485 = vpop.permute.xlu0 %2484
        %v2489 = vsel %vm1660, %v2322, 0
        %2491 = vmatprep.subr.mxu0 0.0
        %2492 = vmatpush1.msra.mxu0 %v2483
        %2493 = vmatprep.subr.mxu0 0.0
        %2494 = vmatpush1.msra.mxu0 %v2485
        %2495 = vmatprep.subr.mxu0 0.0
        %2496 = vmatpush1.msra.mxu0 0.0
        %2497 = vmatprep.subr.mxu0 0.0
        %2498 = vmatpush1.msra.mxu0 0.0
        %2499 = vmatprep.subr.mxu0 0.0
        %2500 = vmatpush1.msra.mxu0 0.0
        %2501 = vmatprep.subr.mxu0 0.0
        %2502 = vmatpush1.msra.mxu0 0.0
        %2503 = vmatprep.subr.mxu0 0.0
        %2504 = vmatpush1.msra.mxu0 0.0
        %2505 = vmatprep.subr.mxu0 0.0
        %2506 = vmatpush1.msra.mxu0 0.0
        %2507 = vmatprep.subr.mxu0 0.0
        %2508 = vmatpush1.msra.mxu0 0.0
        %2509 = vmatprep.subr.mxu0 0.0
        %2510 = vmatpush1.msra.mxu0 0.0
        %2511 = vmatprep.subr.mxu0 0.0
        %2512 = vmatpush1.msra.mxu0 0.0
        %2513 = vmatprep.subr.mxu0 0.0
        %2514 = vmatpush1.msra.mxu0 0.0
        %2515 = vmatprep.subr.mxu0 0.0
        %2516 = vmatpush1.msra.mxu0 0.0
        %2517 = vmatprep.subr.mxu0 0.0
        %2518 = vmatpush1.msra.mxu0 0.0
        %2519 = vmatprep.subr.mxu0 0.0
        %2520 = vmatpush1.msra.mxu0 0.0
        %2521 = vmatprep.subr.mxu0 0.0
        %2522 = vmatpush1.msra.mxu0 0.0
        %2523 = vmatprep.subr.mxu0 0.0
        %2524 = vmatpush1.msra.mxu0 0.0
        %2525 = vmatprep.subr.mxu0 0.0
        %2526 = vmatpush1.msra.mxu0 0.0
        %2527 = vmatprep.subr.mxu0 0.0
        %2528 = vmatpush1.msra.mxu0 0.0
        %2529 = vmatprep.subr.mxu0 0.0
        %2530 = vmatpush1.msra.mxu0 0.0
        %2531 = vmatprep.subr.mxu0 0.0
        %2532 = vmatpush1.msra.mxu0 0.0
        %2533 = vmatprep.subr.mxu0 0.0
        %2534 = vmatpush1.msra.mxu0 0.0
        %2535 = vmatprep.subr.mxu0 0.0
        %2536 = vmatpush1.msra.mxu0 0.0
        %2537 = vmatprep.subr.mxu0 0.0
        %2538 = vmatpush1.msra.mxu0 0.0
        %2539 = vmatprep.subr.mxu0 0.0
        %2540 = vmatpush1.msra.mxu0 0.0
        %2541 = vmatprep.subr.mxu0 0.0
        %2542 = vmatpush1.msra.mxu0 0.0
        %2543 = vmatprep.subr.mxu0 0.0
        %2544 = vmatpush1.msra.mxu0 0.0
        %2545 = vmatprep.subr.mxu0 0.0
        %2546 = vmatpush1.msra.mxu0 0.0
        %2547 = vmatprep.subr.mxu0 0.0
        %2548 = vmatpush1.msra.mxu0 0.0
        %2549 = vmatprep.subr.mxu0 0.0
        %2550 = vmatpush1.msra.mxu0 0.0
        %2551 = vmatprep.subr.mxu0 0.0
        %2552 = vmatpush1.msra.mxu0 0.0
        %2553 = vmatprep.subr.mxu0 0.0
        %2554 = vmatpush1.msra.mxu0 0.0
        %2555 = vmatprep.mubr.f32.mxu0 0.0
        %2556 = vmatmul.mubr.f32.gmra.mrb[0].mxu0 %v2489
        %v2557 = vpop.f32.mrb[0].mxu0
        %v2558 = vadd.f32 0.0, %v2557
        %v2559 = vpop.f32.mrb[0].mxu0
        %2560 = vdwg.mxu0
        %2561 = vrot.lane.b32.xlu0 %v1973, 96
        %v2562 = vpop.permute.xlu0 %2561
        %2563 = vrot.lane.b32.xlu0 %v1975, 96
        %v2564 = vpop.permute.xlu0 %2563
        %v2568 = vsel %vm1660, %v2323, 0
        %2570 = vmatprep.subr.mxu0 0.0
        %2571 = vmatpush1.msra.mxu0 %v2562
        %2572 = vmatprep.subr.mxu0 0.0
        %2573 = vmatpush1.msra.mxu0 %v2564
        %2574 = vmatprep.subr.mxu0 0.0
        %2575 = vmatpush1.msra.mxu0 0.0
        %2576 = vmatprep.subr.mxu0 0.0
        %2577 = vmatpush1.msra.mxu0 0.0
        %2578 = vmatprep.subr.mxu0 0.0
        %2579 = vmatpush1.msra.mxu0 0.0
        %2580 = vmatprep.subr.mxu0 0.0
        %2581 = vmatpush1.msra.mxu0 0.0
        %2582 = vmatprep.subr.mxu0 0.0
        %2583 = vmatpush1.msra.mxu0 0.0
        %2584 = vmatprep.subr.mxu0 0.0
        %2585 = vmatpush1.msra.mxu0 0.0
        %2586 = vmatprep.subr.mxu0 0.0
        %2587 = vmatpush1.msra.mxu0 0.0
        %2588 = vmatprep.subr.mxu0 0.0
        %2589 = vmatpush1.msra.mxu0 0.0
        %2590 = vmatprep.subr.mxu0 0.0
        %2591 = vmatpush1.msra.mxu0 0.0
        %2592 = vmatprep.subr.mxu0 0.0
        %2593 = vmatpush1.msra.mxu0 0.0
        %2594 = vmatprep.subr.mxu0 0.0
        %2595 = vmatpush1.msra.mxu0 0.0
        %2596 = vmatprep.subr.mxu0 0.0
        %2597 = vmatpush1.msra.mxu0 0.0
        %2598 = vmatprep.subr.mxu0 0.0
        %2599 = vmatpush1.msra.mxu0 0.0
        %2600 = vmatprep.subr.mxu0 0.0
        %2601 = vmatpush1.msra.mxu0 0.0
        %2602 = vmatprep.subr.mxu0 0.0
        %2603 = vmatpush1.msra.mxu0 0.0
        %2604 = vmatprep.subr.mxu0 0.0
        %2605 = vmatpush1.msra.mxu0 0.0
        %2606 = vmatprep.subr.mxu0 0.0
        %2607 = vmatpush1.msra.mxu0 0.0
        %2608 = vmatprep.subr.mxu0 0.0
        %2609 = vmatpush1.msra.mxu0 0.0
        %2610 = vmatprep.subr.mxu0 0.0
        %2611 = vmatpush1.msra.mxu0 0.0
        %2612 = vmatprep.subr.mxu0 0.0
        %2613 = vmatpush1.msra.mxu0 0.0
        %2614 = vmatprep.subr.mxu0 0.0
        %2615 = vmatpush1.msra.mxu0 0.0
        %2616 = vmatprep.subr.mxu0 0.0
        %2617 = vmatpush1.msra.mxu0 0.0
        %2618 = vmatprep.subr.mxu0 0.0
        %2619 = vmatpush1.msra.mxu0 0.0
        %2620 = vmatprep.subr.mxu0 0.0
        %2621 = vmatpush1.msra.mxu0 0.0
        %2622 = vmatprep.subr.mxu0 0.0
        %2623 = vmatpush1.msra.mxu0 0.0
        %2624 = vmatprep.subr.mxu0 0.0
        %2625 = vmatpush1.msra.mxu0 0.0
        %2626 = vmatprep.subr.mxu0 0.0
        %2627 = vmatpush1.msra.mxu0 0.0
        %2628 = vmatprep.subr.mxu0 0.0
        %2629 = vmatpush1.msra.mxu0 0.0
        %2630 = vmatprep.subr.mxu0 0.0
        %2631 = vmatpush1.msra.mxu0 0.0
        %2632 = vmatprep.subr.mxu0 0.0
        %2633 = vmatpush1.msra.mxu0 0.0
        %2634 = vmatprep.mubr.f32.mxu0 0.0
        %2635 = vmatmul.mubr.f32.gmra.mrb[0].mxu0 %v2568
        %v2636 = vpop.f32.mrb[0].mxu0
        %v2637 = vadd.f32 0.0, %v2636
        %v2638 = vpop.f32.mrb[0].mxu0
        %2639 = vdwg.mxu0
        %2641 = vrot.lane.b32.xlu0 %v2479, 8
        %v2642 = vpop.permute.xlu0 %2641
        %2645 = vrot.lane.b32.xlu0 %v2558, 16
        %v2646 = vpop.permute.xlu0 %2645
        %2649 = vrot.lane.b32.xlu0 %v2637, 24
        %v2650 = vpop.permute.xlu0 %2649
        %v2652 = vsel %vm996, %v2400, %v2642
        %v2653 = vsel %vm1660, %v2652, %v2646
        %v2654 = vsel %vm1662, %v2653, %v2650
        %v2656 = vlaneseq
        %v2657 = vshrl.u32 %v2656, 7
        %v2658 = vsub.s32 0, %v2657
        %v2659 = vrot.slane %v1954, %v2658
        %v2662 = vsel %vm908, %v2654, 0
        %2664 = vmatprep.subr.mxu0 0.0
        %2665 = vmatpush1.msra.mxu0 %v1950
        %2666 = vmatprep.subr.mxu0 0.0
        %2667 = vmatpush1.msra.mxu0 %v1951
        %2668 = vmatprep.subr.mxu0 0.0
        %2669 = vmatpush1.msra.mxu0 %v1952
        %2670 = vmatprep.subr.mxu0 0.0
        %2671 = vmatpush1.msra.mxu0 %v1953
        %2672 = vmatprep.subr.mxu0 0.0
        %2673 = vmatpush1.msra.mxu0 0.0
        %2674 = vmatprep.subr.mxu0 0.0
        %2675 = vmatpush1.msra.mxu0 0.0
        %2676 = vmatprep.subr.mxu0 0.0
        %2677 = vmatpush1.msra.mxu0 0.0
        %2678 = vmatprep.subr.mxu0 0.0
        %2679 = vmatpush1.msra.mxu0 0.0
        %2680 = vmatprep.subr.mxu0 0.0
        %2681 = vmatpush1.msra.mxu0 0.0
        %2682 = vmatprep.subr.mxu0 0.0
        %2683 = vmatpush1.msra.mxu0 0.0
        %2684 = vmatprep.subr.mxu0 0.0
        %2685 = vmatpush1.msra.mxu0 0.0
        %2686 = vmatprep.subr.mxu0 0.0
        %2687 = vmatpush1.msra.mxu0 0.0
        %2688 = vmatprep.subr.mxu0 0.0
        %2689 = vmatpush1.msra.mxu0 0.0
        %2690 = vmatprep.subr.mxu0 0.0
        %2691 = vmatpush1.msra.mxu0 0.0
        %2692 = vmatprep.subr.mxu0 0.0
        %2693 = vmatpush1.msra.mxu0 0.0
        %2694 = vmatprep.subr.mxu0 0.0
        %2695 = vmatpush1.msra.mxu0 0.0
        %2696 = vmatprep.subr.mxu0 0.0
        %2697 = vmatpush1.msra.mxu0 0.0
        %2698 = vmatprep.subr.mxu0 0.0
        %2699 = vmatpush1.msra.mxu0 0.0
        %2700 = vmatprep.subr.mxu0 0.0
        %2701 = vmatpush1.msra.mxu0 0.0
        %2702 = vmatprep.subr.mxu0 0.0
        %2703 = vmatpush1.msra.mxu0 0.0
        %2704 = vmatprep.subr.mxu0 0.0
        %2705 = vmatpush1.msra.mxu0 0.0
        %2706 = vmatprep.subr.mxu0 0.0
        %2707 = vmatpush1.msra.mxu0 0.0
        %2708 = vmatprep.subr.mxu0 0.0
        %2709 = vmatpush1.msra.mxu0 0.0
        %2710 = vmatprep.subr.mxu0 0.0
        %2711 = vmatpush1.msra.mxu0 0.0
        %2712 = vmatprep.subr.mxu0 0.0
        %2713 = vmatpush1.msra.mxu0 0.0
        %2714 = vmatprep.subr.mxu0 0.0
        %2715 = vmatpush1.msra.mxu0 0.0
        %2716 = vmatprep.subr.mxu0 0.0
        %2717 = vmatpush1.msra.mxu0 0.0
        %2718 = vmatprep.subr.mxu0 0.0
        %2719 = vmatpush1.msra.mxu0 0.0
        %2720 = vmatprep.subr.mxu0 0.0
        %2721 = vmatpush1.msra.mxu0 0.0
        %2722 = vmatprep.subr.mxu0 0.0
        %2723 = vmatpush1.msra.mxu0 0.0
        %2724 = vmatprep.subr.mxu0 0.0
        %2725 = vmatpush1.msra.mxu0 0.0
        %2726 = vmatprep.subr.mxu0 0.0
        %2727 = vmatpush1.msra.mxu0 0.0
        %2728 = vmatprep.mubr.f32.mxu0 0.0
        %2729 = vmatmul.mubr.f32.gmra.mrb[0].mxu0 %v2662
        %v2730 = vpop.f32.mrb[0].mxu0
        %v2731 = vadd.f32 %v2659, %v2730
        %v2732 = vpop.f32.mrb[0].mxu0
        %2733 = vdwg.mxu0
        %v2734 = vadd.f32 %v1773, %v2731
        %v2735 = vld [vmem:[#allocation19] sm:$0x1]
        %v2736 = vld [vmem:[#allocation20] sm:$0x1]
        %v2737 = vsel %vm908, %v2734, 0.0
        %2738 = vadd.xlane.f32.xlu0 %v2737
        %v2739 = vpop.xlane.xlu0 %2738
        %v2740 = vmul.f32 %v2739, %v1749
        %v2741 = vsub.f32 %v2734, %v2740
        %v2742 = vmul.f32 %v2741, %v2741
        %v2743 = vsel %vm908, %v2742, 0.0
        %2744 = vadd.xlane.f32.xlu0 %v2743
        %v2745 = vpop.xlane.xlu0 %2744
        %v2746 = vmul.f32 %v2745, %v1749
        %v2747 = vadd.f32 %v2746, 1e-05
        %v2748 = vrsqrt.pop %v2747
        %v2749 = vmul.f32 %v2741, %v2748
        %v2751 = vlaneseq
        %v2752 = vshrl.u32 %v2751, 7
        %v2753 = vsub.s32 0, %v2752
        %v2754 = vrot.slane %v2735, %v2753
        %v2756 = vmul.f32 %v2749, %v2754
        %v2758 = vlaneseq
        %v2759 = vshrl.u32 %v2758, 7
        %v2760 = vsub.s32 0, %v2759
        %v2761 = vrot.slane %v2736, %v2760
        %v2763 = vadd.f32 %v2756, %v2761
        %v2764 = vld [vmem:[#allocation22] sm:$0xff]
        %v2765 = vld [vmem:[#allocation22 + $0x8] sm:$0xff]
        %v2766 = vld [vmem:[#allocation22 + $0x10] sm:$0xff]
        %v2767 = vld [vmem:[#allocation22 + $0x18] sm:$0xff]
        %v2768 = vld [vmem:[#allocation23] sm:$0x1]
        %v2770 = vlaneseq
        %v2771 = vshrl.u32 %v2770, 7
        %v2772 = vsub.s32 0, %v2771
        %v2773 = vrot.slane %v2768, %v2772
        %v2776 = vsel %vm908, %v2763, 0
        %2778 = vmatprep.subr.mxu0 0.0
        %2779 = vmatpush1.msra.mxu0 %v2764
        %2780 = vmatprep.subr.mxu0 0.0
        %2781 = vmatpush1.msra.mxu0 %v2765
        %2782 = vmatprep.subr.mxu0 0.0
        %2783 = vmatpush1.msra.mxu0 %v2766
        %2784 = vmatprep.subr.mxu0 0.0
        %2785 = vmatpush1.msra.mxu0 %v2767
        %2786 = vmatprep.subr.mxu0 0.0
        %2787 = vmatpush1.msra.mxu0 0.0
        %2788 = vmatprep.subr.mxu0 0.0
        %2789 = vmatpush1.msra.mxu0 0.0
        %2790 = vmatprep.subr.mxu0 0.0
        %2791 = vmatpush1.msra.mxu0 0.0
        %2792 = vmatprep.subr.mxu0 0.0
        %2793 = vmatpush1.msra.mxu0 0.0
        %2794 = vmatprep.subr.mxu0 0.0
        %2795 = vmatpush1.msra.mxu0 0.0
        %2796 = vmatprep.subr.mxu0 0.0
        %2797 = vmatpush1.msra.mxu0 0.0
        %2798 = vmatprep.subr.mxu0 0.0
        %2799 = vmatpush1.msra.mxu0 0.0
        %2800 = vmatprep.subr.mxu0 0.0
        %2801 = vmatpush1.msra.mxu0 0.0
        %2802 = vmatprep.subr.mxu0 0.0
        %2803 = vmatpush1.msra.mxu0 0.0
        %2804 = vmatprep.subr.mxu0 0.0
        %2805 = vmatpush1.msra.mxu0 0.0
        %2806 = vmatprep.subr.mxu0 0.0
        %2807 = vmatpush1.msra.mxu0 0.0
        %2808 = vmatprep.subr.mxu0 0.0
        %2809 = vmatpush1.msra.mxu0 0.0
        %2810 = vmatprep.subr.mxu0 0.0
        %2811 = vmatpush1.msra.mxu0 0.0
        %2812 = vmatprep.subr.mxu0 0.0
        %2813 = vmatpush1.msra.mxu0 0.0
        %2814 = vmatprep.subr.mxu0 0.0
        %2815 = vmatpush1.msra.mxu0 0.0
        %2816 = vmatprep.subr.mxu0 0.0
        %2817 = vmatpush1.msra.mxu0 0.0
        %2818 = vmatprep.subr.mxu0 0.0
        %2819 = vmatpush1.msra.mxu0 0.0
        %2820 = vmatprep.subr.mxu0 0.0
        %2821 = vmatpush1.msra.mxu0 0.0
        %2822 = vmatprep.subr.mxu0 0.0
        %2823 = vmatpush1.msra.mxu0 0.0
        %2824 = vmatprep.subr.mxu0 0.0
        %2825 = vmatpush1.msra.mxu0 0.0
        %2826 = vmatprep.subr.mxu0 0.0
        %2827 = vmatpush1.msra.mxu0 0.0
        %2828 = vmatprep.subr.mxu0 0.0
        %2829 = vmatpush1.msra.mxu0 0.0
        %2830 = vmatprep.subr.mxu0 0.0
        %2831 = vmatpush1.msra.mxu0 0.0
        %2832 = vmatprep.subr.mxu0 0.0
        %2833 = vmatpush1.msra.mxu0 0.0
        %2834 = vmatprep.subr.mxu0 0.0
        %2835 = vmatpush1.msra.mxu0 0.0
        %2836 = vmatprep.subr.mxu0 0.0
        %2837 = vmatpush1.msra.mxu0 0.0
        %2838 = vmatprep.subr.mxu0 0.0
        %2839 = vmatpush1.msra.mxu0 0.0
        %2840 = vmatprep.subr.mxu0 0.0
        %2841 = vmatpush1.msra.mxu0 0.0
        %2842 = vmatprep.mubr.f32.mxu0 0.0
        %2843 = vmatmul.mubr.f32.gmra.mrb[0].mxu0 %v2776
        %v2844 = vpop.f32.mrb[0].mxu0
        %v2845 = vadd.f32 %v2773, %v2844
        %v2846 = vpop.f32.mrb[0].mxu0
        %2847 = vdwg.mxu0
        %v2848 = vmax.f32 %v2845, 0.0
        %v2849 = vld [vmem:[%s18] sm:$0xff]
        %v2850 = vld [vmem:[%s18 + $0x8] sm:$0xff]
        %v2851 = vld [vmem:[%s18 + $0x10] sm:$0xff]
        %v2852 = vld [vmem:[%s18 + $0x18] sm:$0xff]
        %v2853 = vld [vmem:[%s18 + $0x20] sm:$0xff]
        %v2854 = vld [vmem:[%s18 + $0x28] sm:$0xff]
        %v2855 = vld [vmem:[%s18 + $0x30] sm:$0xff]
        %v2856 = vld [vmem:[%s18 + $0x38] sm:$0xff]
        %v2857 = vld [vmem:[%s19] sm:$0x1]
        %v2859 = vlaneseq
        %v2860 = vshrl.u32 %v2859, 7
        %v2861 = vsub.s32 0, %v2860
        %v2862 = vrot.slane %v2857, %v2861
        %vm2864 = vcmask 523264
        %v2866 = vsel %vm2864, %v2848, 0
        %2868 = vmatprep.subr.mxu0 0.0
        %2869 = vmatpush1.msra.mxu0 %v2849
        %2870 = vmatprep.subr.mxu0 0.0
        %2871 = vmatpush1.msra.mxu0 %v2850
        %2872 = vmatprep.subr.mxu0 0.0
        %2873 = vmatpush1.msra.mxu0 %v2851
        %2874 = vmatprep.subr.mxu0 0.0
        %2875 = vmatpush1.msra.mxu0 %v2852
        %2876 = vmatprep.subr.mxu0 0.0
        %2877 = vmatpush1.msra.mxu0 %v2853
        %2878 = vmatprep.subr.mxu0 0.0
        %2879 = vmatpush1.msra.mxu0 %v2854
        %2880 = vmatprep.subr.mxu0 0.0
        %2881 = vmatpush1.msra.mxu0 %v2855
        %2882 = vmatprep.subr.mxu0 0.0
        %2883 = vmatpush1.msra.mxu0 %v2856
        %2884 = vmatprep.subr.mxu0 0.0
        %2885 = vmatpush1.msra.mxu0 0.0
        %2886 = vmatprep.subr.mxu0 0.0
        %2887 = vmatpush1.msra.mxu0 0.0
        %2888 = vmatprep.subr.mxu0 0.0
        %2889 = vmatpush1.msra.mxu0 0.0
        %2890 = vmatprep.subr.mxu0 0.0
        %2891 = vmatpush1.msra.mxu0 0.0
        %2892 = vmatprep.subr.mxu0 0.0
        %2893 = vmatpush1.msra.mxu0 0.0
        %2894 = vmatprep.subr.mxu0 0.0
        %2895 = vmatpush1.msra.mxu0 0.0
        %2896 = vmatprep.subr.mxu0 0.0
        %2897 = vmatpush1.msra.mxu0 0.0
        %2898 = vmatprep.subr.mxu0 0.0
        %2899 = vmatpush1.msra.mxu0 0.0
        %2900 = vmatprep.subr.mxu0 0.0
        %2901 = vmatpush1.msra.mxu0 0.0
        %2902 = vmatprep.subr.mxu0 0.0
        %2903 = vmatpush1.msra.mxu0 0.0
        %2904 = vmatprep.subr.mxu0 0.0
        %2905 = vmatpush1.msra.mxu0 0.0
        %2906 = vmatprep.subr.mxu0 0.0
        %2907 = vmatpush1.msra.mxu0 0.0
        %2908 = vmatprep.subr.mxu0 0.0
        %2909 = vmatpush1.msra.mxu0 0.0
        %2910 = vmatprep.subr.mxu0 0.0
        %2911 = vmatpush1.msra.mxu0 0.0
        %2912 = vmatprep.subr.mxu0 0.0
        %2913 = vmatpush1.msra.mxu0 0.0
        %2914 = vmatprep.subr.mxu0 0.0
        %2915 = vmatpush1.msra.mxu0 0.0
        %2916 = vmatprep.subr.mxu0 0.0
        %2917 = vmatpush1.msra.mxu0 0.0
        %2918 = vmatprep.subr.mxu0 0.0
        %2919 = vmatpush1.msra.mxu0 0.0
        %2920 = vmatprep.subr.mxu0 0.0
        %2921 = vmatpush1.msra.mxu0 0.0
        %2922 = vmatprep.subr.mxu0 0.0
        %2923 = vmatpush1.msra.mxu0 0.0
        %2924 = vmatprep.subr.mxu0 0.0
        %2925 = vmatpush1.msra.mxu0 0.0
        %2926 = vmatprep.subr.mxu0 0.0
        %2927 = vmatpush1.msra.mxu0 0.0
        %2928 = vmatprep.subr.mxu0 0.0
        %2929 = vmatpush1.msra.mxu0 0.0
        %2930 = vmatprep.subr.mxu0 0.0
        %2931 = vmatpush1.msra.mxu0 0.0
        %2932 = vmatprep.mubr.f32.mxu0 0.0
        %2933 = vmatmul.mubr.f32.gmra.mrb[0].mxu0 %v2866
        %v2934 = vpop.f32.mrb[0].mxu0
        %v2935 = vadd.f32 %v2862, %v2934
        %v2936 = vpop.f32.mrb[0].mxu0
        %2937 = vdwg.mxu0
        %v2938 = vadd.f32 %v2763, %v2935
        %v2939 = vld [vmem:[%s20] sm:$0x1]
        %v2940 = vld [vmem:[%s21] sm:$0x1]
        %v2941 = vsel %vm908, %v2938, 0.0
        %2942 = vadd.xlane.f32.xlu0 %v2941
        %v2943 = vpop.xlane.xlu0 %2942
        %v2944 = vmul.f32 %v2943, %v1749
        %v2945 = vsub.f32 %v2938, %v2944
        %v2946 = vmul.f32 %v2945, %v2945
        %v2947 = vsel %vm908, %v2946, 0.0
        %2948 = vadd.xlane.f32.xlu0 %v2947
        %v2949 = vpop.xlane.xlu0 %2948
        %v2950 = vmul.f32 %v2949, %v1749
        %v2951 = vadd.f32 %v2950, 1e-05
        %v2952 = vrsqrt.pop %v2951
        %v2953 = vmul.f32 %v2945, %v2952
        %v2955 = vlaneseq
        %v2956 = vshrl.u32 %v2955, 7
        %v2957 = vsub.s32 0, %v2956
        %v2958 = vrot.slane %v2939, %v2957
        %v2960 = vmul.f32 %v2953, %v2958
        %v2962 = vlaneseq
        %v2963 = vshrl.u32 %v2962, 7
        %v2964 = vsub.s32 0, %v2963
        %v2965 = vrot.slane %v2940, %v2964
        %v2967 = vadd.f32 %v2960, %v2965
        %2968 = vst.msk [vmem:[%s882] sm:$0xff] %vm908, %v2967
        %s2969 = sand.u32 %s526, 1
        %s2970 = scalar_lea.sflag [#allocation4], %s2969
        %s2971 = sand.u32 %s526, 1
        %s2972 = smul.addr %s2971, 8
        %s2973 = scalar_lea.vmem [#allocation25], %s2972
        // Predicated region
        $region165: #{tpu_custom_call.1} parent=107 // pred_check
          %p2974 = pneg %p536
        $region166: #{tpu_custom_call.1} parent=107 // pred_check_branch
          %2976 = sbr.rel (%p2974) target = $region168
        $region167: #{tpu_custom_call.1} parent=107 // pred_region
          %s2978 = ssub.s32 128, 128
          %2979 = vsyncadd %s2970, %s2978
          %s2980 = smul.addr %s46, 128
          %s2981 = scalar_lea.hbm %s22, %s2980
          %s2983 = sshll.u32 %s2973, 4
          %s2984 = int_to_ptr.vmem [resolvable:$true] %s2983
          %2986 = dma.vmem_to_hbm [thread:$0]  %s2984, 128, %s2981, %s2970
        $region168: #{tpu_custom_call.1} parent=107 // pred_fallthru
          _
      $region108: #{tpu_custom_call.1} parent=5 // pred_fallthru
        _
      %p2987 = scmp.le.s32.totalorder 2, %s41
      // Predicated region
      $region169: #{tpu_custom_call.1} parent=5 // pred_check
        %p2988 = pneg %p2987
      $region170: #{tpu_custom_call.1} parent=5 // pred_check_branch
        %2990 = sbr.rel (%p2988) target = $region172
      $region171: #{tpu_custom_call.1} parent=5 // pred_region
        %s2991 = ssub.s32 %s41, 2
        // Predicated region
        $region173: #{tpu_custom_call.1} parent=171 // pred_check
          %p2992 = pneg %p542
        $region174: #{tpu_custom_call.1} parent=171 // pred_check_branch
          %2994 = sbr.rel (%p2992) target = $region176
        $region175: #{tpu_custom_call.1} parent=171 // pred_region
          %s2995 = sand.u32 %s527, 1
          %s2996 = scalar_lea.sflag [#allocation4], %s2995
          %s2997 = sand.u32 %s527, 1
          %s2998 = smul.addr %s2997, 8
          %s2999 = scalar_lea.vmem [#allocation25], %s2998
          %3000 = dma.done %s2996, 128
        $region176: #{tpu_custom_call.1} parent=171 // pred_fallthru
          _
      $region172: #{tpu_custom_call.1} parent=5 // pred_fallthru
        _
    $region6: #{tpu_custom_call.1} parent=1 // loop_footer
      %s45 = sadd.s32 1, %s41
    $region7: #{tpu_custom_call.1} parent=1 // loop_footer_branch
      %40 = sbr.rel target = $region3
    $region8: #{tpu_custom_call.1} parent=1 // loop_exit
      _
    %3001 = vsyncpa [#allocation3], 1
    %s3002 = scalar_lea.sflag [#allocation3], 1
    %3003 = vsyncpa %s3002, 1
    %3004 = vsyncpa [#allocation6], 1
    %3005 = vsyncpa [#allocation9], 1
    %3006 = vsyncpa [#allocation12], 1
    %3007 = vsyncpa [#allocation15], 1
    %3008 = vsyncpa [#allocation18], 1
    %3009 = vsyncpa [#allocation21], 1
    %3010 = vsyncpa [#allocation24], 1
    %3011 = vsyncpa [#allocation4], 1
    %s3012 = scalar_lea.sflag [#allocation4], 1
    %3013 = vsyncpa %s3012, 1

</llo_original>
